<compile_context>
chip_gen: v5e
topology: v5e:2x2
jax: 0.10.0
libtpu: 0.0.40
codegen_flags: <defaults>
</compile_context>

<pallas_src>
import math

import jax
import jax.numpy as jnp
from jax.experimental import pallas as pl
from jax.experimental.pallas import tpu as pltpu


# ----------------------------------------------------------------------------
# In-kernel helpers (traced inline; loops are fully unrolled, indices static)
# ----------------------------------------------------------------------------
def _lstm_cell(g, c_prev, H):
    # PyTorch gate order: i, f, g, o
    i = jax.nn.sigmoid(g[:, 0:H])
    f = jax.nn.sigmoid(g[:, H:2 * H])
    gg = jnp.tanh(g[:, 2 * H:3 * H])
    o = jax.nn.sigmoid(g[:, 3 * H:4 * H])
    c_new = f * c_prev + i * gg
    h_new = o * jnp.tanh(c_new)
    return h_new, c_new


def _bilstm_layer(gx_list, whh, valid, is_last, T, B, H, collect_output):
    """One bidirectional LSTM layer; both directions in a single unrolled loop.

    gx_list : list (length T) of [B, 8H] f32 values, precomputed
              x_p @ W_ih_(f|r) + bias (hoisted input projection, per position)
    whh     : bf16 value [2H, 8H], block-diagonal recurrent weights (fwd | rev)
    valid   : list of [B,H] bool, valid[p] == (p < length)
    is_last : list of [B,H] bool, is_last[p] == (p == length-1)
    Returns (y_f, y_r, h_fwd_last, h_rev_last):
      y_f[p], y_r[p] : padded per-position outputs (only if collect_output)
      h_fwd_last     : forward hidden at position length-1   [B, H]
      h_rev_last     : reverse hidden at position length-1   [B, H]
    """
    zeros = jnp.zeros((B, H), jnp.float32)
    h_f = c_f = h_r = c_r = last_r = zeros
    y_f = [None] * T
    y_r = [None] * T

    for t in range(T):
        s = T - 1 - t                                # position seen by reverse dir
        # Single fused recurrent matmul, N = 8H (both directions at once).
        h_cat = jnp.concatenate([h_f, h_r], axis=-1).astype(jnp.bfloat16)
        gh = jnp.dot(h_cat, whh, preferred_element_type=jnp.float32)     # [B, 8H]

        g_f = gx_list[t][:, 0:4 * H] + gh[:, 0:4 * H]
        g_r = gx_list[s][:, 4 * H:8 * H] + gh[:, 4 * H:8 * H]

        hf_new, cf_new = _lstm_cell(g_f, c_f, H)
        hr_new, cr_new = _lstm_cell(g_r, c_r, H)

        # Packed-sequence semantics: state only advances on valid positions.
        h_f = jnp.where(valid[t], hf_new, h_f)
        c_f = jnp.where(valid[t], cf_new, c_f)
        h_r = jnp.where(valid[s], hr_new, h_r)
        c_r = jnp.where(valid[s], cr_new, c_r)
        # Reverse hidden at position length-1 (== out_pad[:, len-1, H:2H]).
        last_r = jnp.where(is_last[s], hr_new, last_r)

        if collect_output:
            # Padded positions stay zero (pad_packed_sequence default).
            y_f[t] = jnp.where(valid[t], hf_new, 0.0)
            y_r[s] = jnp.where(valid[s], hr_new, 0.0)

    # Forward state is frozen past length-1, so h_f already equals
    # out_pad[:, len-1, 0:H] at loop end.
    return y_f, y_r, h_f, last_r


# ----------------------------------------------------------------------------
# Fused kernel: layer1 -> layer2 -> last-valid-step -> linear_last head
# ----------------------------------------------------------------------------
def fused_net_kernel(x_ref, len_ref, wih1_ref, whh1_ref, b1_ref,
                     wih2_ref, whh2_ref, b2_ref,
                     wm1_ref, bm1_ref, wm2_ref, bm2_ref,
                     last_ref, head_ref):
    TB = x_ref.shape[0]
    B = len_ref.shape[0]
    T = TB // B
    H = whh1_ref.shape[0] // 2

    # Per-position masks, built once from the lengths vector (no mask tensor,
    # no per-step DMA, hoisted out of both layer loops).
    len_bh = jnp.broadcast_to(len_ref[...], (B, H))          # [B, H] int32
    valid = [len_bh > p for p in range(T)]                   # p is a real step
    is_last = [len_bh == (p + 1) for p in range(T)]          # p is the last step

    # ---- Layer 1: hoisted input projection (one GEMM over all T*B rows),
    # result sliced per position and kept entirely in registers. ----
    gx1 = (jnp.dot(x_ref[...], wih1_ref[...],
                   preferred_element_type=jnp.float32) + b1_ref[...])
    gx1_list = [gx1[p * B:(p + 1) * B, :] for p in range(T)]
    y_f, y_r, _, _ = _bilstm_layer(gx1_list, whh1_ref[...], valid, is_last,
                                   T, B, H, collect_output=True)

    # ---- Layer 2: input projections from layer-1 output (per-position GEMMs,
    # all off the serial critical path; no VMEM scratch round-trip). ----
    wih2 = wih2_ref[...]
    b2 = b2_ref[...]
    gx2_list = [
        jnp.dot(jnp.concatenate([y_f[p], y_r[p]], axis=-1).astype(jnp.bfloat16),
                wih2, preferred_element_type=jnp.float32) + b2
        for p in range(T)
    ]
    _, _, h2_f, h2_r = _bilstm_layer(gx2_list, whh2_ref[...], valid, is_last,
                                     T, B, H, collect_output=False)

    # _inputs[b] = out_pad[b][len[b]-1]  (computed in-kernel, no XLA gather)
    last = jnp.concatenate([h2_f, h2_r], axis=-1)            # [B, 2H]

    # linear_last: Linear(2H->H) -> ReLU -> Dropout(identity) -> Linear(H->out)
    # TODO(synk): nn.Dropout(p=0.2) implemented as identity (eval-mode semantics).
    mid = jnp.maximum(
        jnp.dot(last, wm1_ref[...], preferred_element_type=jnp.float32)
        + bm1_ref[...], 0.0)
    head = (jnp.dot(mid, wm2_ref[...], preferred_element_type=jnp.float32)
            + bm2_ref[...])

    last_ref[...] = last
    head_ref[...] = head.astype(head_ref.dtype)


# ----------------------------------------------------------------------------
# Wrapper: weight fusion (fwd|rev gate stacking, block-diag W_hh) + single call
# ----------------------------------------------------------------------------
def net_forward(x_btd, lengths, params):
    B, T, D = x_btd.shape
    H = params["lstm"][0]["whh_f"].shape[0]
    num_out = params["w2"].shape[1]

    # Time-major rows (t, b) flattened so x @ W_ih is one MXU-friendly GEMM.
    x2d = jnp.transpose(x_btd, (1, 0, 2)).reshape(T * B, D).astype(jnp.bfloat16)
    len_v = lengths.astype(jnp.int32).reshape(B, 1)

    def fuse_dirs(lp):
        # Gate axis = (i,f,g,o)_fwd | (i,f,g,o)_rev -> N = 8H.
        wih = jnp.concatenate([lp["wih_f"], lp["wih_r"]], axis=1)       # [Din, 8H]
        whh = jnp.zeros((2 * H, 8 * H), jnp.float32)
        whh = whh.at[0:H, 0:4 * H].set(lp["whh_f"])
        whh = whh.at[H:2 * H, 4 * H:8 * H].set(lp["whh_r"])             # block diag
        b = jnp.concatenate([lp["b_f"], lp["b_r"]], axis=1)             # [1, 8H]
        return wih.astype(jnp.bfloat16), whh.astype(jnp.bfloat16), b

    # TODO(synk): kernel is specialized to layers_num=2 (the module default).
    wih1, whh1, b1 = fuse_dirs(params["lstm"][0])
    wih2, whh2, b2 = fuse_dirs(params["lstm"][1])

    vmem = pl.BlockSpec(memory_space=pltpu.MemorySpace.VMEM)
    last, head = pl.pallas_call(
        fused_net_kernel,
        out_shape=(jax.ShapeDtypeStruct((B, 2 * H), jnp.float32),
                   jax.ShapeDtypeStruct((B, num_out), jnp.float32)),
        in_specs=[vmem] * 12,
        out_specs=(vmem, vmem),
    )(x2d, len_v, wih1, whh1, b1, wih2, whh2, b2,
      params["w1"], params["b1"], params["w2"], params["b2"])
    return last, head


# ----------------------------------------------------------------------------
# Deterministic parameter construction (shapes per nn.LSTM / nn.Linear)
# ----------------------------------------------------------------------------
def make_params(key, input_dims, hidden_dims, num_out, layers_num=2):
    H = hidden_dims
    bound = 1.0 / math.sqrt(H)

    def u(k, shape):
        return jax.random.uniform(k, shape, jnp.float32, -bound, bound)

    lstm_params = []
    d_in = input_dims
    for layer in range(layers_num):
        keys = jax.random.split(jax.random.fold_in(key, layer), 12)
        lp = {
            # stored pre-transposed: W_ih [D_in, 4H], W_hh [H, 4H]
            "wih_f": u(keys[0], (d_in, 4 * H)),
            "whh_f": u(keys[1], (H, 4 * H)),
            "b_f": (u(keys[2], (1, 4 * H)) + u(keys[3], (1, 4 * H))),
            "wih_r": u(keys[4], (d_in, 4 * H)),
            "whh_r": u(keys[5], (H, 4 * H)),
            "b_r": (u(keys[6], (1, 4 * H)) + u(keys[7], (1, 4 * H))),
        }
        lstm_params.append(lp)
        d_in = 2 * H

    kk = jax.random.split(jax.random.fold_in(key, 100), 4)
    b1m = 1.0 / math.sqrt(2 * H)
    b2m = 1.0 / math.sqrt(H)
    params = {
        "lstm": lstm_params,
        "w1": jax.random.uniform(kk[0], (2 * H, H), jnp.float32, -b1m, b1m),
        "b1": jax.random.uniform(kk[1], (1, H), jnp.float32, -b1m, b1m),
        "w2": jax.random.uniform(kk[2], (H, num_out), jnp.float32, -b2m, b2m),
        "b2": jax.random.uniform(kk[3], (1, num_out), jnp.float32, -b2m, b2m),
    }
    return params


if __name__ == "__main__":
    B, T = 2, 8
    input_dims, hidden_dims, num_out = 16, 32, 4

    key = jax.random.PRNGKey(0)
    k_x, k_p = jax.random.split(key)

    x = jax.random.normal(k_x, (B, T, input_dims), dtype=jnp.float32)
    lengths = jnp.array([8, 5], dtype=jnp.int32)   # variable-length sequences
    params = make_params(k_p, input_dims, hidden_dims, num_out)

    fwd = jax.jit(net_forward)
    last_hidden, head_out = fwd(x, lengths, params)
    jax.block_until_ready((last_hidden, head_out))

    assert last_hidden.shape == (B, 2 * hidden_dims)
    assert head_out.shape == (B, num_out)
    print("KERNEL_OK")
</pallas_src>

<mosaic_0001>
module attributes {stable_mosaic.version = 11 : i64} {
  func.func @fused_net_kernel(%arg0: memref<16x16xbf16, #tpu.memory_space<vmem>>, %arg1: memref<2x1xi32, #tpu.memory_space<vmem>>, %arg2: memref<16x256xbf16, #tpu.memory_space<vmem>>, %arg3: memref<64x256xbf16, #tpu.memory_space<vmem>>, %arg4: memref<1x256xf32, #tpu.memory_space<vmem>>, %arg5: memref<64x256xbf16, #tpu.memory_space<vmem>>, %arg6: memref<64x256xbf16, #tpu.memory_space<vmem>>, %arg7: memref<1x256xf32, #tpu.memory_space<vmem>>, %arg8: memref<64x32xf32, #tpu.memory_space<vmem>>, %arg9: memref<1x32xf32, #tpu.memory_space<vmem>>, %arg10: memref<32x4xf32, #tpu.memory_space<vmem>>, %arg11: memref<1x4xf32, #tpu.memory_space<vmem>>, %arg12: memref<2x64xf32, #tpu.memory_space<vmem>>, %arg13: memref<2x4xf32, #tpu.memory_space<vmem>>) attributes {dimension_semantics = [], scalar_prefetch = 0 : i64, scratch_operands = 0 : i64, tpu.core_type = #tpu.core_type<tc>} {
    %c0 = arith.constant 0 : index
    %c0_0 = arith.constant 0 : index
    %0 = vector.load %arg1[%c0, %c0_0] : memref<2x1xi32, #tpu.memory_space<vmem>>, vector<2x1xi32>
    %1 = vector.shape_cast %0 : vector<2x1xi32> to vector<2x1xi32>
    %2 = vector.broadcast %1 : vector<2x1xi32> to vector<2x32xi32>
    %c0_i32 = arith.constant 0 : i32
    %3 = vector.broadcast %c0_i32 : i32 to vector<2x32xi32>
    %4 = arith.cmpi sgt, %2, %3 : vector<2x32xi32>
    %c1_i32 = arith.constant 1 : i32
    %5 = vector.broadcast %c1_i32 : i32 to vector<2x32xi32>
    %6 = arith.cmpi sgt, %2, %5 : vector<2x32xi32>
    %c2_i32 = arith.constant 2 : i32
    %7 = vector.broadcast %c2_i32 : i32 to vector<2x32xi32>
    %8 = arith.cmpi sgt, %2, %7 : vector<2x32xi32>
    %c3_i32 = arith.constant 3 : i32
    %9 = vector.broadcast %c3_i32 : i32 to vector<2x32xi32>
    %10 = arith.cmpi sgt, %2, %9 : vector<2x32xi32>
    %c4_i32 = arith.constant 4 : i32
    %11 = vector.broadcast %c4_i32 : i32 to vector<2x32xi32>
    %12 = arith.cmpi sgt, %2, %11 : vector<2x32xi32>
    %c5_i32 = arith.constant 5 : i32
    %13 = vector.broadcast %c5_i32 : i32 to vector<2x32xi32>
    %14 = arith.cmpi sgt, %2, %13 : vector<2x32xi32>
    %c6_i32 = arith.constant 6 : i32
    %15 = vector.broadcast %c6_i32 : i32 to vector<2x32xi32>
    %16 = arith.cmpi sgt, %2, %15 : vector<2x32xi32>
    %c7_i32 = arith.constant 7 : i32
    %17 = vector.broadcast %c7_i32 : i32 to vector<2x32xi32>
    %18 = arith.cmpi sgt, %2, %17 : vector<2x32xi32>
    %c1_i32_1 = arith.constant 1 : i32
    %19 = vector.broadcast %c1_i32_1 : i32 to vector<2x32xi32>
    %20 = arith.cmpi eq, %2, %19 : vector<2x32xi32>
    %c2_i32_2 = arith.constant 2 : i32
    %21 = vector.broadcast %c2_i32_2 : i32 to vector<2x32xi32>
    %22 = arith.cmpi eq, %2, %21 : vector<2x32xi32>
    %c3_i32_3 = arith.constant 3 : i32
    %23 = vector.broadcast %c3_i32_3 : i32 to vector<2x32xi32>
    %24 = arith.cmpi eq, %2, %23 : vector<2x32xi32>
    %c4_i32_4 = arith.constant 4 : i32
    %25 = vector.broadcast %c4_i32_4 : i32 to vector<2x32xi32>
    %26 = arith.cmpi eq, %2, %25 : vector<2x32xi32>
    %c5_i32_5 = arith.constant 5 : i32
    %27 = vector.broadcast %c5_i32_5 : i32 to vector<2x32xi32>
    %28 = arith.cmpi eq, %2, %27 : vector<2x32xi32>
    %c6_i32_6 = arith.constant 6 : i32
    %29 = vector.broadcast %c6_i32_6 : i32 to vector<2x32xi32>
    %30 = arith.cmpi eq, %2, %29 : vector<2x32xi32>
    %c7_i32_7 = arith.constant 7 : i32
    %31 = vector.broadcast %c7_i32_7 : i32 to vector<2x32xi32>
    %32 = arith.cmpi eq, %2, %31 : vector<2x32xi32>
    %c8_i32 = arith.constant 8 : i32
    %33 = vector.broadcast %c8_i32 : i32 to vector<2x32xi32>
    %34 = arith.cmpi eq, %2, %33 : vector<2x32xi32>
    %c0_8 = arith.constant 0 : index
    %c0_9 = arith.constant 0 : index
    %35 = vector.load %arg0[%c0_8, %c0_9] : memref<16x16xbf16, #tpu.memory_space<vmem>>, vector<16x16xbf16>
    %c0_10 = arith.constant 0 : index
    %c0_11 = arith.constant 0 : index
    %36 = vector.load %arg2[%c0_10, %c0_11] : memref<16x256xbf16, #tpu.memory_space<vmem>>, vector<16x256xbf16>
    %cst = arith.constant dense<0.000000e+00> : vector<16x256xf32>
    %37 = tpu.matmul %35, %36, %cst {dimension_numbers = #tpu.dot_dimension_numbers<[1], [0], [0], [1], [0, 0, 1, 1], [], []>} : vector<16x16xbf16>, vector<16x256xbf16>, vector<16x256xf32> -> vector<16x256xf32>
    %c0_12 = arith.constant 0 : index
    %c0_13 = arith.constant 0 : index
    %38 = vector.load %arg4[%c0_12, %c0_13] : memref<1x256xf32, #tpu.memory_space<vmem>>, vector<1x256xf32>
    %39 = vector.broadcast %38 : vector<1x256xf32> to vector<16x256xf32>
    %40 = arith.addf %37, %39 : vector<16x256xf32>
    %41 = vector.extract_strided_slice %40 {offsets = [0, 0], sizes = [2, 256], strides = [1, 1]} : vector<16x256xf32> to vector<2x256xf32>
    %42 = vector.extract_strided_slice %40 {offsets = [2, 0], sizes = [2, 256], strides = [1, 1]} : vector<16x256xf32> to vector<2x256xf32>
    %43 = vector.extract_strided_slice %40 {offsets = [4, 0], sizes = [2, 256], strides = [1, 1]} : vector<16x256xf32> to vector<2x256xf32>
    %44 = vector.extract_strided_slice %40 {offsets = [6, 0], sizes = [2, 256], strides = [1, 1]} : vector<16x256xf32> to vector<2x256xf32>
    %45 = vector.extract_strided_slice %40 {offsets = [8, 0], sizes = [2, 256], strides = [1, 1]} : vector<16x256xf32> to vector<2x256xf32>
    %46 = vector.extract_strided_slice %40 {offsets = [10, 0], sizes = [2, 256], strides = [1, 1]} : vector<16x256xf32> to vector<2x256xf32>
    %47 = vector.extract_strided_slice %40 {offsets = [12, 0], sizes = [2, 256], strides = [1, 1]} : vector<16x256xf32> to vector<2x256xf32>
    %48 = vector.extract_strided_slice %40 {offsets = [14, 0], sizes = [2, 256], strides = [1, 1]} : vector<16x256xf32> to vector<2x256xf32>
    %c0_14 = arith.constant 0 : index
    %c0_15 = arith.constant 0 : index
    %49 = vector.load %arg3[%c0_14, %c0_15] : memref<64x256xbf16, #tpu.memory_space<vmem>>, vector<64x256xbf16>
    %cst_16 = arith.constant 0.000000e+00 : f32
    %50 = vector.broadcast %cst_16 : f32 to vector<2x32xf32>
    %51 = tpu.concatenate %50, %50 in 1 : vector<2x32xf32>, vector<2x32xf32> -> vector<2x64xf32>
    %52 = arith.truncf %51 : vector<2x64xf32> to vector<2x64xbf16>
    %cst_17 = arith.constant dense<0.000000e+00> : vector<2x256xf32>
    %53 = tpu.matmul %52, %49, %cst_17 {dimension_numbers = #tpu.dot_dimension_numbers<[1], [0], [0], [1], [0, 0, 1, 1], [], []>} : vector<2x64xbf16>, vector<64x256xbf16>, vector<2x256xf32> -> vector<2x256xf32>
    %54 = vector.extract_strided_slice %41 {offsets = [0, 0], sizes = [2, 128], strides = [1, 1]} : vector<2x256xf32> to vector<2x128xf32>
    %55 = vector.extract_strided_slice %53 {offsets = [0, 0], sizes = [2, 128], strides = [1, 1]} : vector<2x256xf32> to vector<2x128xf32>
    %56 = arith.addf %54, %55 : vector<2x128xf32>
    %57 = vector.extract_strided_slice %48 {offsets = [0, 128], sizes = [2, 128], strides = [1, 1]} : vector<2x256xf32> to vector<2x128xf32>
    %58 = vector.extract_strided_slice %53 {offsets = [0, 128], sizes = [2, 128], strides = [1, 1]} : vector<2x256xf32> to vector<2x128xf32>
    %59 = arith.addf %57, %58 : vector<2x128xf32>
    %60 = vector.extract_strided_slice %56 {offsets = [0, 0], sizes = [2, 32], strides = [1, 1]} : vector<2x128xf32> to vector<2x32xf32>
    %61 = arith.negf %60 : vector<2x32xf32>
    %62 = math.exp %61 : vector<2x32xf32>
    %cst_18 = arith.constant 1.000000e+00 : f32
    %63 = vector.broadcast %cst_18 : f32 to vector<2x32xf32>
    %64 = arith.addf %63, %62 : vector<2x32xf32>
    %65 = arith.divf %63, %64 : vector<2x32xf32>
    %66 = vector.extract_strided_slice %56 {offsets = [0, 32], sizes = [2, 32], strides = [1, 1]} : vector<2x128xf32> to vector<2x32xf32>
    %67 = arith.negf %66 : vector<2x32xf32>
    %68 = math.exp %67 : vector<2x32xf32>
    %cst_19 = arith.constant 1.000000e+00 : f32
    %69 = vector.broadcast %cst_19 : f32 to vector<2x32xf32>
    %70 = arith.addf %69, %68 : vector<2x32xf32>
    %71 = arith.divf %69, %70 : vector<2x32xf32>
    %72 = vector.extract_strided_slice %56 {offsets = [0, 64], sizes = [2, 32], strides = [1, 1]} : vector<2x128xf32> to vector<2x32xf32>
    %73 = math.tanh %72 : vector<2x32xf32>
    %74 = vector.extract_strided_slice %56 {offsets = [0, 96], sizes = [2, 32], strides = [1, 1]} : vector<2x128xf32> to vector<2x32xf32>
    %75 = arith.negf %74 : vector<2x32xf32>
    %76 = math.exp %75 : vector<2x32xf32>
    %cst_20 = arith.constant 1.000000e+00 : f32
    %77 = vector.broadcast %cst_20 : f32 to vector<2x32xf32>
    %78 = arith.addf %77, %76 : vector<2x32xf32>
    %79 = arith.divf %77, %78 : vector<2x32xf32>
    %80 = arith.mulf %71, %50 : vector<2x32xf32>
    %81 = arith.mulf %65, %73 : vector<2x32xf32>
    %82 = arith.addf %80, %81 : vector<2x32xf32>
    %83 = math.tanh %82 : vector<2x32xf32>
    %84 = arith.mulf %79, %83 : vector<2x32xf32>
    %85 = vector.extract_strided_slice %59 {offsets = [0, 0], sizes = [2, 32], strides = [1, 1]} : vector<2x128xf32> to vector<2x32xf32>
    %86 = arith.negf %85 : vector<2x32xf32>
    %87 = math.exp %86 : vector<2x32xf32>
    %cst_21 = arith.constant 1.000000e+00 : f32
    %88 = vector.broadcast %cst_21 : f32 to vector<2x32xf32>
    %89 = arith.addf %88, %87 : vector<2x32xf32>
    %90 = arith.divf %88, %89 : vector<2x32xf32>
    %91 = vector.extract_strided_slice %59 {offsets = [0, 32], sizes = [2, 32], strides = [1, 1]} : vector<2x128xf32> to vector<2x32xf32>
    %92 = arith.negf %91 : vector<2x32xf32>
    %93 = math.exp %92 : vector<2x32xf32>
    %cst_22 = arith.constant 1.000000e+00 : f32
    %94 = vector.broadcast %cst_22 : f32 to vector<2x32xf32>
    %95 = arith.addf %94, %93 : vector<2x32xf32>
    %96 = arith.divf %94, %95 : vector<2x32xf32>
    %97 = vector.extract_strided_slice %59 {offsets = [0, 64], sizes = [2, 32], strides = [1, 1]} : vector<2x128xf32> to vector<2x32xf32>
    %98 = math.tanh %97 : vector<2x32xf32>
    %99 = vector.extract_strided_slice %59 {offsets = [0, 96], sizes = [2, 32], strides = [1, 1]} : vector<2x128xf32> to vector<2x32xf32>
    %100 = arith.negf %99 : vector<2x32xf32>
    %101 = math.exp %100 : vector<2x32xf32>
    %cst_23 = arith.constant 1.000000e+00 : f32
    %102 = vector.broadcast %cst_23 : f32 to vector<2x32xf32>
    %103 = arith.addf %102, %101 : vector<2x32xf32>
    %104 = arith.divf %102, %103 : vector<2x32xf32>
    %105 = arith.mulf %96, %50 : vector<2x32xf32>
    %106 = arith.mulf %90, %98 : vector<2x32xf32>
    %107 = arith.addf %105, %106 : vector<2x32xf32>
    %108 = math.tanh %107 : vector<2x32xf32>
    %109 = arith.mulf %104, %108 : vector<2x32xf32>
    %110 = arith.select %4, %84, %50 : vector<2x32xi1>, vector<2x32xf32>
    %111 = arith.select %4, %82, %50 : vector<2x32xi1>, vector<2x32xf32>
    %112 = arith.select %18, %109, %50 : vector<2x32xi1>, vector<2x32xf32>
    %113 = arith.select %18, %107, %50 : vector<2x32xi1>, vector<2x32xf32>
    %cst_24 = arith.constant 0.000000e+00 : f32
    %114 = vector.broadcast %cst_24 : f32 to vector<2x32xf32>
    %115 = arith.select %4, %84, %114 : vector<2x32xi1>, vector<2x32xf32>
    %cst_25 = arith.constant 0.000000e+00 : f32
    %116 = vector.broadcast %cst_25 : f32 to vector<2x32xf32>
    %117 = arith.select %18, %109, %116 : vector<2x32xi1>, vector<2x32xf32>
    %118 = tpu.concatenate %110, %112 in 1 : vector<2x32xf32>, vector<2x32xf32> -> vector<2x64xf32>
    %119 = arith.truncf %118 : vector<2x64xf32> to vector<2x64xbf16>
    %cst_26 = arith.constant dense<0.000000e+00> : vector<2x256xf32>
    %120 = tpu.matmul %119, %49, %cst_26 {dimension_numbers = #tpu.dot_dimension_numbers<[1], [0], [0], [1], [0, 0, 1, 1], [], []>} : vector<2x64xbf16>, vector<64x256xbf16>, vector<2x256xf32> -> vector<2x256xf32>
    %121 = vector.extract_strided_slice %42 {offsets = [0, 0], sizes = [2, 128], strides = [1, 1]} : vector<2x256xf32> to vector<2x128xf32>
    %122 = vector.extract_strided_slice %120 {offsets = [0, 0], sizes = [2, 128], strides = [1, 1]} : vector<2x256xf32> to vector<2x128xf32>
    %123 = arith.addf %121, %122 : vector<2x128xf32>
    %124 = vector.extract_strided_slice %47 {offsets = [0, 128], sizes = [2, 128], strides = [1, 1]} : vector<2x256xf32> to vector<2x128xf32>
    %125 = vector.extract_strided_slice %120 {offsets = [0, 128], sizes = [2, 128], strides = [1, 1]} : vector<2x256xf32> to vector<2x128xf32>
    %126 = arith.addf %124, %125 : vector<2x128xf32>
    %127 = vector.extract_strided_slice %123 {offsets = [0, 0], sizes = [2, 32], strides = [1, 1]} : vector<2x128xf32> to vector<2x32xf32>
    %128 = arith.negf %127 : vector<2x32xf32>
    %129 = math.exp %128 : vector<2x32xf32>
    %cst_27 = arith.constant 1.000000e+00 : f32
    %130 = vector.broadcast %cst_27 : f32 to vector<2x32xf32>
    %131 = arith.addf %130, %129 : vector<2x32xf32>
    %132 = arith.divf %130, %131 : vector<2x32xf32>
    %133 = vector.extract_strided_slice %123 {offsets = [0, 32], sizes = [2, 32], strides = [1, 1]} : vector<2x128xf32> to vector<2x32xf32>
    %134 = arith.negf %133 : vector<2x32xf32>
    %135 = math.exp %134 : vector<2x32xf32>
    %cst_28 = arith.constant 1.000000e+00 : f32
    %136 = vector.broadcast %cst_28 : f32 to vector<2x32xf32>
    %137 = arith.addf %136, %135 : vector<2x32xf32>
    %138 = arith.divf %136, %137 : vector<2x32xf32>
    %139 = vector.extract_strided_slice %123 {offsets = [0, 64], sizes = [2, 32], strides = [1, 1]} : vector<2x128xf32> to vector<2x32xf32>
    %140 = math.tanh %139 : vector<2x32xf32>
    %141 = vector.extract_strided_slice %123 {offsets = [0, 96], sizes = [2, 32], strides = [1, 1]} : vector<2x128xf32> to vector<2x32xf32>
    %142 = arith.negf %141 : vector<2x32xf32>
    %143 = math.exp %142 : vector<2x32xf32>
    %cst_29 = arith.constant 1.000000e+00 : f32
    %144 = vector.broadcast %cst_29 : f32 to vector<2x32xf32>
    %145 = arith.addf %144, %143 : vector<2x32xf32>
    %146 = arith.divf %144, %145 : vector<2x32xf32>
    %147 = arith.mulf %138, %111 : vector<2x32xf32>
    %148 = arith.mulf %132, %140 : vector<2x32xf32>
    %149 = arith.addf %147, %148 : vector<2x32xf32>
    %150 = math.tanh %149 : vector<2x32xf32>
    %151 = arith.mulf %146, %150 : vector<2x32xf32>
    %152 = vector.extract_strided_slice %126 {offsets = [0, 0], sizes = [2, 32], strides = [1, 1]} : vector<2x128xf32> to vector<2x32xf32>
    %153 = arith.negf %152 : vector<2x32xf32>
    %154 = math.exp %153 : vector<2x32xf32>
    %cst_30 = arith.constant 1.000000e+00 : f32
    %155 = vector.broadcast %cst_30 : f32 to vector<2x32xf32>
    %156 = arith.addf %155, %154 : vector<2x32xf32>
    %157 = arith.divf %155, %156 : vector<2x32xf32>
    %158 = vector.extract_strided_slice %126 {offsets = [0, 32], sizes = [2, 32], strides = [1, 1]} : vector<2x128xf32> to vector<2x32xf32>
    %159 = arith.negf %158 : vector<2x32xf32>
    %160 = math.exp %159 : vector<2x32xf32>
    %cst_31 = arith.constant 1.000000e+00 : f32
    %161 = vector.broadcast %cst_31 : f32 to vector<2x32xf32>
    %162 = arith.addf %161, %160 : vector<2x32xf32>
    %163 = arith.divf %161, %162 : vector<2x32xf32>
    %164 = vector.extract_strided_slice %126 {offsets = [0, 64], sizes = [2, 32], strides = [1, 1]} : vector<2x128xf32> to vector<2x32xf32>
    %165 = math.tanh %164 : vector<2x32xf32>
    %166 = vector.extract_strided_slice %126 {offsets = [0, 96], sizes = [2, 32], strides = [1, 1]} : vector<2x128xf32> to vector<2x32xf32>
    %167 = arith.negf %166 : vector<2x32xf32>
    %168 = math.exp %167 : vector<2x32xf32>
    %cst_32 = arith.constant 1.000000e+00 : f32
    %169 = vector.broadcast %cst_32 : f32 to vector<2x32xf32>
    %170 = arith.addf %169, %168 : vector<2x32xf32>
    %171 = arith.divf %169, %170 : vector<2x32xf32>
    %172 = arith.mulf %163, %113 : vector<2x32xf32>
    %173 = arith.mulf %157, %165 : vector<2x32xf32>
    %174 = arith.addf %172, %173 : vector<2x32xf32>
    %175 = math.tanh %174 : vector<2x32xf32>
    %176 = arith.mulf %171, %175 : vector<2x32xf32>
    %177 = arith.select %6, %151, %110 : vector<2x32xi1>, vector<2x32xf32>
    %178 = arith.select %6, %149, %111 : vector<2x32xi1>, vector<2x32xf32>
    %179 = arith.select %16, %176, %112 : vector<2x32xi1>, vector<2x32xf32>
    %180 = arith.select %16, %174, %113 : vector<2x32xi1>, vector<2x32xf32>
    %cst_33 = arith.constant 0.000000e+00 : f32
    %181 = vector.broadcast %cst_33 : f32 to vector<2x32xf32>
    %182 = arith.select %6, %151, %181 : vector<2x32xi1>, vector<2x32xf32>
    %cst_34 = arith.constant 0.000000e+00 : f32
    %183 = vector.broadcast %cst_34 : f32 to vector<2x32xf32>
    %184 = arith.select %16, %176, %183 : vector<2x32xi1>, vector<2x32xf32>
    %185 = tpu.concatenate %177, %179 in 1 : vector<2x32xf32>, vector<2x32xf32> -> vector<2x64xf32>
    %186 = arith.truncf %185 : vector<2x64xf32> to vector<2x64xbf16>
    %cst_35 = arith.constant dense<0.000000e+00> : vector<2x256xf32>
    %187 = tpu.matmul %186, %49, %cst_35 {dimension_numbers = #tpu.dot_dimension_numbers<[1], [0], [0], [1], [0, 0, 1, 1], [], []>} : vector<2x64xbf16>, vector<64x256xbf16>, vector<2x256xf32> -> vector<2x256xf32>
    %188 = vector.extract_strided_slice %43 {offsets = [0, 0], sizes = [2, 128], strides = [1, 1]} : vector<2x256xf32> to vector<2x128xf32>
    %189 = vector.extract_strided_slice %187 {offsets = [0, 0], sizes = [2, 128], strides = [1, 1]} : vector<2x256xf32> to vector<2x128xf32>
    %190 = arith.addf %188, %189 : vector<2x128xf32>
    %191 = vector.extract_strided_slice %46 {offsets = [0, 128], sizes = [2, 128], strides = [1, 1]} : vector<2x256xf32> to vector<2x128xf32>
    %192 = vector.extract_strided_slice %187 {offsets = [0, 128], sizes = [2, 128], strides = [1, 1]} : vector<2x256xf32> to vector<2x128xf32>
    %193 = arith.addf %191, %192 : vector<2x128xf32>
    %194 = vector.extract_strided_slice %190 {offsets = [0, 0], sizes = [2, 32], strides = [1, 1]} : vector<2x128xf32> to vector<2x32xf32>
    %195 = arith.negf %194 : vector<2x32xf32>
    %196 = math.exp %195 : vector<2x32xf32>
    %cst_36 = arith.constant 1.000000e+00 : f32
    %197 = vector.broadcast %cst_36 : f32 to vector<2x32xf32>
    %198 = arith.addf %197, %196 : vector<2x32xf32>
    %199 = arith.divf %197, %198 : vector<2x32xf32>
    %200 = vector.extract_strided_slice %190 {offsets = [0, 32], sizes = [2, 32], strides = [1, 1]} : vector<2x128xf32> to vector<2x32xf32>
    %201 = arith.negf %200 : vector<2x32xf32>
    %202 = math.exp %201 : vector<2x32xf32>
    %cst_37 = arith.constant 1.000000e+00 : f32
    %203 = vector.broadcast %cst_37 : f32 to vector<2x32xf32>
    %204 = arith.addf %203, %202 : vector<2x32xf32>
    %205 = arith.divf %203, %204 : vector<2x32xf32>
    %206 = vector.extract_strided_slice %190 {offsets = [0, 64], sizes = [2, 32], strides = [1, 1]} : vector<2x128xf32> to vector<2x32xf32>
    %207 = math.tanh %206 : vector<2x32xf32>
    %208 = vector.extract_strided_slice %190 {offsets = [0, 96], sizes = [2, 32], strides = [1, 1]} : vector<2x128xf32> to vector<2x32xf32>
    %209 = arith.negf %208 : vector<2x32xf32>
    %210 = math.exp %209 : vector<2x32xf32>
    %cst_38 = arith.constant 1.000000e+00 : f32
    %211 = vector.broadcast %cst_38 : f32 to vector<2x32xf32>
    %212 = arith.addf %211, %210 : vector<2x32xf32>
    %213 = arith.divf %211, %212 : vector<2x32xf32>
    %214 = arith.mulf %205, %178 : vector<2x32xf32>
    %215 = arith.mulf %199, %207 : vector<2x32xf32>
    %216 = arith.addf %214, %215 : vector<2x32xf32>
    %217 = math.tanh %216 : vector<2x32xf32>
    %218 = arith.mulf %213, %217 : vector<2x32xf32>
    %219 = vector.extract_strided_slice %193 {offsets = [0, 0], sizes = [2, 32], strides = [1, 1]} : vector<2x128xf32> to vector<2x32xf32>
    %220 = arith.negf %219 : vector<2x32xf32>
    %221 = math.exp %220 : vector<2x32xf32>
    %cst_39 = arith.constant 1.000000e+00 : f32
    %222 = vector.broadcast %cst_39 : f32 to vector<2x32xf32>
    %223 = arith.addf %222, %221 : vector<2x32xf32>
    %224 = arith.divf %222, %223 : vector<2x32xf32>
    %225 = vector.extract_strided_slice %193 {offsets = [0, 32], sizes = [2, 32], strides = [1, 1]} : vector<2x128xf32> to vector<2x32xf32>
    %226 = arith.negf %225 : vector<2x32xf32>
    %227 = math.exp %226 : vector<2x32xf32>
    %cst_40 = arith.constant 1.000000e+00 : f32
    %228 = vector.broadcast %cst_40 : f32 to vector<2x32xf32>
    %229 = arith.addf %228, %227 : vector<2x32xf32>
    %230 = arith.divf %228, %229 : vector<2x32xf32>
    %231 = vector.extract_strided_slice %193 {offsets = [0, 64], sizes = [2, 32], strides = [1, 1]} : vector<2x128xf32> to vector<2x32xf32>
    %232 = math.tanh %231 : vector<2x32xf32>
    %233 = vector.extract_strided_slice %193 {offsets = [0, 96], sizes = [2, 32], strides = [1, 1]} : vector<2x128xf32> to vector<2x32xf32>
    %234 = arith.negf %233 : vector<2x32xf32>
    %235 = math.exp %234 : vector<2x32xf32>
    %cst_41 = arith.constant 1.000000e+00 : f32
    %236 = vector.broadcast %cst_41 : f32 to vector<2x32xf32>
    %237 = arith.addf %236, %235 : vector<2x32xf32>
    %238 = arith.divf %236, %237 : vector<2x32xf32>
    %239 = arith.mulf %230, %180 : vector<2x32xf32>
    %240 = arith.mulf %224, %232 : vector<2x32xf32>
    %241 = arith.addf %239, %240 : vector<2x32xf32>
    %242 = math.tanh %241 : vector<2x32xf32>
    %243 = arith.mulf %238, %242 : vector<2x32xf32>
    %244 = arith.select %8, %218, %177 : vector<2x32xi1>, vector<2x32xf32>
    %245 = arith.select %8, %216, %178 : vector<2x32xi1>, vector<2x32xf32>
    %246 = arith.select %14, %243, %179 : vector<2x32xi1>, vector<2x32xf32>
    %247 = arith.select %14, %241, %180 : vector<2x32xi1>, vector<2x32xf32>
    %cst_42 = arith.constant 0.000000e+00 : f32
    %248 = vector.broadcast %cst_42 : f32 to vector<2x32xf32>
    %249 = arith.select %8, %218, %248 : vector<2x32xi1>, vector<2x32xf32>
    %cst_43 = arith.constant 0.000000e+00 : f32
    %250 = vector.broadcast %cst_43 : f32 to vector<2x32xf32>
    %251 = arith.select %14, %243, %250 : vector<2x32xi1>, vector<2x32xf32>
    %252 = tpu.concatenate %244, %246 in 1 : vector<2x32xf32>, vector<2x32xf32> -> vector<2x64xf32>
    %253 = arith.truncf %252 : vector<2x64xf32> to vector<2x64xbf16>
    %cst_44 = arith.constant dense<0.000000e+00> : vector<2x256xf32>
    %254 = tpu.matmul %253, %49, %cst_44 {dimension_numbers = #tpu.dot_dimension_numbers<[1], [0], [0], [1], [0, 0, 1, 1], [], []>} : vector<2x64xbf16>, vector<64x256xbf16>, vector<2x256xf32> -> vector<2x256xf32>
    %255 = vector.extract_strided_slice %44 {offsets = [0, 0], sizes = [2, 128], strides = [1, 1]} : vector<2x256xf32> to vector<2x128xf32>
    %256 = vector.extract_strided_slice %254 {offsets = [0, 0], sizes = [2, 128], strides = [1, 1]} : vector<2x256xf32> to vector<2x128xf32>
    %257 = arith.addf %255, %256 : vector<2x128xf32>
    %258 = vector.extract_strided_slice %45 {offsets = [0, 128], sizes = [2, 128], strides = [1, 1]} : vector<2x256xf32> to vector<2x128xf32>
    %259 = vector.extract_strided_slice %254 {offsets = [0, 128], sizes = [2, 128], strides = [1, 1]} : vector<2x256xf32> to vector<2x128xf32>
    %260 = arith.addf %258, %259 : vector<2x128xf32>
    %261 = vector.extract_strided_slice %257 {offsets = [0, 0], sizes = [2, 32], strides = [1, 1]} : vector<2x128xf32> to vector<2x32xf32>
    %262 = arith.negf %261 : vector<2x32xf32>
    %263 = math.exp %262 : vector<2x32xf32>
    %cst_45 = arith.constant 1.000000e+00 : f32
    %264 = vector.broadcast %cst_45 : f32 to vector<2x32xf32>
    %265 = arith.addf %264, %263 : vector<2x32xf32>
    %266 = arith.divf %264, %265 : vector<2x32xf32>
    %267 = vector.extract_strided_slice %257 {offsets = [0, 32], sizes = [2, 32], strides = [1, 1]} : vector<2x128xf32> to vector<2x32xf32>
    %268 = arith.negf %267 : vector<2x32xf32>
    %269 = math.exp %268 : vector<2x32xf32>
    %cst_46 = arith.constant 1.000000e+00 : f32
    %270 = vector.broadcast %cst_46 : f32 to vector<2x32xf32>
    %271 = arith.addf %270, %269 : vector<2x32xf32>
    %272 = arith.divf %270, %271 : vector<2x32xf32>
    %273 = vector.extract_strided_slice %257 {offsets = [0, 64], sizes = [2, 32], strides = [1, 1]} : vector<2x128xf32> to vector<2x32xf32>
    %274 = math.tanh %273 : vector<2x32xf32>
    %275 = vector.extract_strided_slice %257 {offsets = [0, 96], sizes = [2, 32], strides = [1, 1]} : vector<2x128xf32> to vector<2x32xf32>
    %276 = arith.negf %275 : vector<2x32xf32>
    %277 = math.exp %276 : vector<2x32xf32>
    %cst_47 = arith.constant 1.000000e+00 : f32
    %278 = vector.broadcast %cst_47 : f32 to vector<2x32xf32>
    %279 = arith.addf %278, %277 : vector<2x32xf32>
    %280 = arith.divf %278, %279 : vector<2x32xf32>
    %281 = arith.mulf %272, %245 : vector<2x32xf32>
    %282 = arith.mulf %266, %274 : vector<2x32xf32>
    %283 = arith.addf %281, %282 : vector<2x32xf32>
    %284 = math.tanh %283 : vector<2x32xf32>
    %285 = arith.mulf %280, %284 : vector<2x32xf32>
    %286 = vector.extract_strided_slice %260 {offsets = [0, 0], sizes = [2, 32], strides = [1, 1]} : vector<2x128xf32> to vector<2x32xf32>
    %287 = arith.negf %286 : vector<2x32xf32>
    %288 = math.exp %287 : vector<2x32xf32>
    %cst_48 = arith.constant 1.000000e+00 : f32
    %289 = vector.broadcast %cst_48 : f32 to vector<2x32xf32>
    %290 = arith.addf %289, %288 : vector<2x32xf32>
    %291 = arith.divf %289, %290 : vector<2x32xf32>
    %292 = vector.extract_strided_slice %260 {offsets = [0, 32], sizes = [2, 32], strides = [1, 1]} : vector<2x128xf32> to vector<2x32xf32>
    %293 = arith.negf %292 : vector<2x32xf32>
    %294 = math.exp %293 : vector<2x32xf32>
    %cst_49 = arith.constant 1.000000e+00 : f32
    %295 = vector.broadcast %cst_49 : f32 to vector<2x32xf32>
    %296 = arith.addf %295, %294 : vector<2x32xf32>
    %297 = arith.divf %295, %296 : vector<2x32xf32>
    %298 = vector.extract_strided_slice %260 {offsets = [0, 64], sizes = [2, 32], strides = [1, 1]} : vector<2x128xf32> to vector<2x32xf32>
    %299 = math.tanh %298 : vector<2x32xf32>
    %300 = vector.extract_strided_slice %260 {offsets = [0, 96], sizes = [2, 32], strides = [1, 1]} : vector<2x128xf32> to vector<2x32xf32>
    %301 = arith.negf %300 : vector<2x32xf32>
    %302 = math.exp %301 : vector<2x32xf32>
    %cst_50 = arith.constant 1.000000e+00 : f32
    %303 = vector.broadcast %cst_50 : f32 to vector<2x32xf32>
    %304 = arith.addf %303, %302 : vector<2x32xf32>
    %305 = arith.divf %303, %304 : vector<2x32xf32>
    %306 = arith.mulf %297, %247 : vector<2x32xf32>
    %307 = arith.mulf %291, %299 : vector<2x32xf32>
    %308 = arith.addf %306, %307 : vector<2x32xf32>
    %309 = math.tanh %308 : vector<2x32xf32>
    %310 = arith.mulf %305, %309 : vector<2x32xf32>
    %311 = arith.select %10, %285, %244 : vector<2x32xi1>, vector<2x32xf32>
    %312 = arith.select %10, %283, %245 : vector<2x32xi1>, vector<2x32xf32>
    %313 = arith.select %12, %310, %246 : vector<2x32xi1>, vector<2x32xf32>
    %314 = arith.select %12, %308, %247 : vector<2x32xi1>, vector<2x32xf32>
    %cst_51 = arith.constant 0.000000e+00 : f32
    %315 = vector.broadcast %cst_51 : f32 to vector<2x32xf32>
    %316 = arith.select %10, %285, %315 : vector<2x32xi1>, vector<2x32xf32>
    %cst_52 = arith.constant 0.000000e+00 : f32
    %317 = vector.broadcast %cst_52 : f32 to vector<2x32xf32>
    %318 = arith.select %12, %310, %317 : vector<2x32xi1>, vector<2x32xf32>
    %319 = tpu.concatenate %311, %313 in 1 : vector<2x32xf32>, vector<2x32xf32> -> vector<2x64xf32>
    %320 = arith.truncf %319 : vector<2x64xf32> to vector<2x64xbf16>
    %cst_53 = arith.constant dense<0.000000e+00> : vector<2x256xf32>
    %321 = tpu.matmul %320, %49, %cst_53 {dimension_numbers = #tpu.dot_dimension_numbers<[1], [0], [0], [1], [0, 0, 1, 1], [], []>} : vector<2x64xbf16>, vector<64x256xbf16>, vector<2x256xf32> -> vector<2x256xf32>
    %322 = vector.extract_strided_slice %45 {offsets = [0, 0], sizes = [2, 128], strides = [1, 1]} : vector<2x256xf32> to vector<2x128xf32>
    %323 = vector.extract_strided_slice %321 {offsets = [0, 0], sizes = [2, 128], strides = [1, 1]} : vector<2x256xf32> to vector<2x128xf32>
    %324 = arith.addf %322, %323 : vector<2x128xf32>
    %325 = vector.extract_strided_slice %44 {offsets = [0, 128], sizes = [2, 128], strides = [1, 1]} : vector<2x256xf32> to vector<2x128xf32>
    %326 = vector.extract_strided_slice %321 {offsets = [0, 128], sizes = [2, 128], strides = [1, 1]} : vector<2x256xf32> to vector<2x128xf32>
    %327 = arith.addf %325, %326 : vector<2x128xf32>
    %328 = vector.extract_strided_slice %324 {offsets = [0, 0], sizes = [2, 32], strides = [1, 1]} : vector<2x128xf32> to vector<2x32xf32>
    %329 = arith.negf %328 : vector<2x32xf32>
    %330 = math.exp %329 : vector<2x32xf32>
    %cst_54 = arith.constant 1.000000e+00 : f32
    %331 = vector.broadcast %cst_54 : f32 to vector<2x32xf32>
    %332 = arith.addf %331, %330 : vector<2x32xf32>
    %333 = arith.divf %331, %332 : vector<2x32xf32>
    %334 = vector.extract_strided_slice %324 {offsets = [0, 32], sizes = [2, 32], strides = [1, 1]} : vector<2x128xf32> to vector<2x32xf32>
    %335 = arith.negf %334 : vector<2x32xf32>
    %336 = math.exp %335 : vector<2x32xf32>
    %cst_55 = arith.constant 1.000000e+00 : f32
    %337 = vector.broadcast %cst_55 : f32 to vector<2x32xf32>
    %338 = arith.addf %337, %336 : vector<2x32xf32>
    %339 = arith.divf %337, %338 : vector<2x32xf32>
    %340 = vector.extract_strided_slice %324 {offsets = [0, 64], sizes = [2, 32], strides = [1, 1]} : vector<2x128xf32> to vector<2x32xf32>
    %341 = math.tanh %340 : vector<2x32xf32>
    %342 = vector.extract_strided_slice %324 {offsets = [0, 96], sizes = [2, 32], strides = [1, 1]} : vector<2x128xf32> to vector<2x32xf32>
    %343 = arith.negf %342 : vector<2x32xf32>
    %344 = math.exp %343 : vector<2x32xf32>
    %cst_56 = arith.constant 1.000000e+00 : f32
    %345 = vector.broadcast %cst_56 : f32 to vector<2x32xf32>
    %346 = arith.addf %345, %344 : vector<2x32xf32>
    %347 = arith.divf %345, %346 : vector<2x32xf32>
    %348 = arith.mulf %339, %312 : vector<2x32xf32>
    %349 = arith.mulf %333, %341 : vector<2x32xf32>
    %350 = arith.addf %348, %349 : vector<2x32xf32>
    %351 = math.tanh %350 : vector<2x32xf32>
    %352 = arith.mulf %347, %351 : vector<2x32xf32>
    %353 = vector.extract_strided_slice %327 {offsets = [0, 0], sizes = [2, 32], strides = [1, 1]} : vector<2x128xf32> to vector<2x32xf32>
    %354 = arith.negf %353 : vector<2x32xf32>
    %355 = math.exp %354 : vector<2x32xf32>
    %cst_57 = arith.constant 1.000000e+00 : f32
    %356 = vector.broadcast %cst_57 : f32 to vector<2x32xf32>
    %357 = arith.addf %356, %355 : vector<2x32xf32>
    %358 = arith.divf %356, %357 : vector<2x32xf32>
    %359 = vector.extract_strided_slice %327 {offsets = [0, 32], sizes = [2, 32], strides = [1, 1]} : vector<2x128xf32> to vector<2x32xf32>
    %360 = arith.negf %359 : vector<2x32xf32>
    %361 = math.exp %360 : vector<2x32xf32>
    %cst_58 = arith.constant 1.000000e+00 : f32
    %362 = vector.broadcast %cst_58 : f32 to vector<2x32xf32>
    %363 = arith.addf %362, %361 : vector<2x32xf32>
    %364 = arith.divf %362, %363 : vector<2x32xf32>
    %365 = vector.extract_strided_slice %327 {offsets = [0, 64], sizes = [2, 32], strides = [1, 1]} : vector<2x128xf32> to vector<2x32xf32>
    %366 = math.tanh %365 : vector<2x32xf32>
    %367 = vector.extract_strided_slice %327 {offsets = [0, 96], sizes = [2, 32], strides = [1, 1]} : vector<2x128xf32> to vector<2x32xf32>
    %368 = arith.negf %367 : vector<2x32xf32>
    %369 = math.exp %368 : vector<2x32xf32>
    %cst_59 = arith.constant 1.000000e+00 : f32
    %370 = vector.broadcast %cst_59 : f32 to vector<2x32xf32>
    %371 = arith.addf %370, %369 : vector<2x32xf32>
    %372 = arith.divf %370, %371 : vector<2x32xf32>
    %373 = arith.mulf %364, %314 : vector<2x32xf32>
    %374 = arith.mulf %358, %366 : vector<2x32xf32>
    %375 = arith.addf %373, %374 : vector<2x32xf32>
    %376 = math.tanh %375 : vector<2x32xf32>
    %377 = arith.mulf %372, %376 : vector<2x32xf32>
    %378 = arith.select %12, %352, %311 : vector<2x32xi1>, vector<2x32xf32>
    %379 = arith.select %12, %350, %312 : vector<2x32xi1>, vector<2x32xf32>
    %380 = arith.select %10, %377, %313 : vector<2x32xi1>, vector<2x32xf32>
    %381 = arith.select %10, %375, %314 : vector<2x32xi1>, vector<2x32xf32>
    %cst_60 = arith.constant 0.000000e+00 : f32
    %382 = vector.broadcast %cst_60 : f32 to vector<2x32xf32>
    %383 = arith.select %12, %352, %382 : vector<2x32xi1>, vector<2x32xf32>
    %cst_61 = arith.constant 0.000000e+00 : f32
    %384 = vector.broadcast %cst_61 : f32 to vector<2x32xf32>
    %385 = arith.select %10, %377, %384 : vector<2x32xi1>, vector<2x32xf32>
    %386 = tpu.concatenate %378, %380 in 1 : vector<2x32xf32>, vector<2x32xf32> -> vector<2x64xf32>
    %387 = arith.truncf %386 : vector<2x64xf32> to vector<2x64xbf16>
    %cst_62 = arith.constant dense<0.000000e+00> : vector<2x256xf32>
    %388 = tpu.matmul %387, %49, %cst_62 {dimension_numbers = #tpu.dot_dimension_numbers<[1], [0], [0], [1], [0, 0, 1, 1], [], []>} : vector<2x64xbf16>, vector<64x256xbf16>, vector<2x256xf32> -> vector<2x256xf32>
    %389 = vector.extract_strided_slice %46 {offsets = [0, 0], sizes = [2, 128], strides = [1, 1]} : vector<2x256xf32> to vector<2x128xf32>
    %390 = vector.extract_strided_slice %388 {offsets = [0, 0], sizes = [2, 128], strides = [1, 1]} : vector<2x256xf32> to vector<2x128xf32>
    %391 = arith.addf %389, %390 : vector<2x128xf32>
    %392 = vector.extract_strided_slice %43 {offsets = [0, 128], sizes = [2, 128], strides = [1, 1]} : vector<2x256xf32> to vector<2x128xf32>
    %393 = vector.extract_strided_slice %388 {offsets = [0, 128], sizes = [2, 128], strides = [1, 1]} : vector<2x256xf32> to vector<2x128xf32>
    %394 = arith.addf %392, %393 : vector<2x128xf32>
    %395 = vector.extract_strided_slice %391 {offsets = [0, 0], sizes = [2, 32], strides = [1, 1]} : vector<2x128xf32> to vector<2x32xf32>
    %396 = arith.negf %395 : vector<2x32xf32>
    %397 = math.exp %396 : vector<2x32xf32>
    %cst_63 = arith.constant 1.000000e+00 : f32
    %398 = vector.broadcast %cst_63 : f32 to vector<2x32xf32>
    %399 = arith.addf %398, %397 : vector<2x32xf32>
    %400 = arith.divf %398, %399 : vector<2x32xf32>
    %401 = vector.extract_strided_slice %391 {offsets = [0, 32], sizes = [2, 32], strides = [1, 1]} : vector<2x128xf32> to vector<2x32xf32>
    %402 = arith.negf %401 : vector<2x32xf32>
    %403 = math.exp %402 : vector<2x32xf32>
    %cst_64 = arith.constant 1.000000e+00 : f32
    %404 = vector.broadcast %cst_64 : f32 to vector<2x32xf32>
    %405 = arith.addf %404, %403 : vector<2x32xf32>
    %406 = arith.divf %404, %405 : vector<2x32xf32>
    %407 = vector.extract_strided_slice %391 {offsets = [0, 64], sizes = [2, 32], strides = [1, 1]} : vector<2x128xf32> to vector<2x32xf32>
    %408 = math.tanh %407 : vector<2x32xf32>
    %409 = vector.extract_strided_slice %391 {offsets = [0, 96], sizes = [2, 32], strides = [1, 1]} : vector<2x128xf32> to vector<2x32xf32>
    %410 = arith.negf %409 : vector<2x32xf32>
    %411 = math.exp %410 : vector<2x32xf32>
    %cst_65 = arith.constant 1.000000e+00 : f32
    %412 = vector.broadcast %cst_65 : f32 to vector<2x32xf32>
    %413 = arith.addf %412, %411 : vector<2x32xf32>
    %414 = arith.divf %412, %413 : vector<2x32xf32>
    %415 = arith.mulf %406, %379 : vector<2x32xf32>
    %416 = arith.mulf %400, %408 : vector<2x32xf32>
    %417 = arith.addf %415, %416 : vector<2x32xf32>
    %418 = math.tanh %417 : vector<2x32xf32>
    %419 = arith.mulf %414, %418 : vector<2x32xf32>
    %420 = vector.extract_strided_slice %394 {offsets = [0, 0], sizes = [2, 32], strides = [1, 1]} : vector<2x128xf32> to vector<2x32xf32>
    %421 = arith.negf %420 : vector<2x32xf32>
    %422 = math.exp %421 : vector<2x32xf32>
    %cst_66 = arith.constant 1.000000e+00 : f32
    %423 = vector.broadcast %cst_66 : f32 to vector<2x32xf32>
    %424 = arith.addf %423, %422 : vector<2x32xf32>
    %425 = arith.divf %423, %424 : vector<2x32xf32>
    %426 = vector.extract_strided_slice %394 {offsets = [0, 32], sizes = [2, 32], strides = [1, 1]} : vector<2x128xf32> to vector<2x32xf32>
    %427 = arith.negf %426 : vector<2x32xf32>
    %428 = math.exp %427 : vector<2x32xf32>
    %cst_67 = arith.constant 1.000000e+00 : f32
    %429 = vector.broadcast %cst_67 : f32 to vector<2x32xf32>
    %430 = arith.addf %429, %428 : vector<2x32xf32>
    %431 = arith.divf %429, %430 : vector<2x32xf32>
    %432 = vector.extract_strided_slice %394 {offsets = [0, 64], sizes = [2, 32], strides = [1, 1]} : vector<2x128xf32> to vector<2x32xf32>
    %433 = math.tanh %432 : vector<2x32xf32>
    %434 = vector.extract_strided_slice %394 {offsets = [0, 96], sizes = [2, 32], strides = [1, 1]} : vector<2x128xf32> to vector<2x32xf32>
    %435 = arith.negf %434 : vector<2x32xf32>
    %436 = math.exp %435 : vector<2x32xf32>
    %cst_68 = arith.constant 1.000000e+00 : f32
    %437 = vector.broadcast %cst_68 : f32 to vector<2x32xf32>
    %438 = arith.addf %437, %436 : vector<2x32xf32>
    %439 = arith.divf %437, %438 : vector<2x32xf32>
    %440 = arith.mulf %431, %381 : vector<2x32xf32>
    %441 = arith.mulf %425, %433 : vector<2x32xf32>
    %442 = arith.addf %440, %441 : vector<2x32xf32>
    %443 = math.tanh %442 : vector<2x32xf32>
    %444 = arith.mulf %439, %443 : vector<2x32xf32>
    %445 = arith.select %14, %419, %378 : vector<2x32xi1>, vector<2x32xf32>
    %446 = arith.select %14, %417, %379 : vector<2x32xi1>, vector<2x32xf32>
    %447 = arith.select %8, %444, %380 : vector<2x32xi1>, vector<2x32xf32>
    %448 = arith.select %8, %442, %381 : vector<2x32xi1>, vector<2x32xf32>
    %cst_69 = arith.constant 0.000000e+00 : f32
    %449 = vector.broadcast %cst_69 : f32 to vector<2x32xf32>
    %450 = arith.select %14, %419, %449 : vector<2x32xi1>, vector<2x32xf32>
    %cst_70 = arith.constant 0.000000e+00 : f32
    %451 = vector.broadcast %cst_70 : f32 to vector<2x32xf32>
    %452 = arith.select %8, %444, %451 : vector<2x32xi1>, vector<2x32xf32>
    %453 = tpu.concatenate %445, %447 in 1 : vector<2x32xf32>, vector<2x32xf32> -> vector<2x64xf32>
    %454 = arith.truncf %453 : vector<2x64xf32> to vector<2x64xbf16>
    %cst_71 = arith.constant dense<0.000000e+00> : vector<2x256xf32>
    %455 = tpu.matmul %454, %49, %cst_71 {dimension_numbers = #tpu.dot_dimension_numbers<[1], [0], [0], [1], [0, 0, 1, 1], [], []>} : vector<2x64xbf16>, vector<64x256xbf16>, vector<2x256xf32> -> vector<2x256xf32>
    %456 = vector.extract_strided_slice %47 {offsets = [0, 0], sizes = [2, 128], strides = [1, 1]} : vector<2x256xf32> to vector<2x128xf32>
    %457 = vector.extract_strided_slice %455 {offsets = [0, 0], sizes = [2, 128], strides = [1, 1]} : vector<2x256xf32> to vector<2x128xf32>
    %458 = arith.addf %456, %457 : vector<2x128xf32>
    %459 = vector.extract_strided_slice %42 {offsets = [0, 128], sizes = [2, 128], strides = [1, 1]} : vector<2x256xf32> to vector<2x128xf32>
    %460 = vector.extract_strided_slice %455 {offsets = [0, 128], sizes = [2, 128], strides = [1, 1]} : vector<2x256xf32> to vector<2x128xf32>
    %461 = arith.addf %459, %460 : vector<2x128xf32>
    %462 = vector.extract_strided_slice %458 {offsets = [0, 0], sizes = [2, 32], strides = [1, 1]} : vector<2x128xf32> to vector<2x32xf32>
    %463 = arith.negf %462 : vector<2x32xf32>
    %464 = math.exp %463 : vector<2x32xf32>
    %cst_72 = arith.constant 1.000000e+00 : f32
    %465 = vector.broadcast %cst_72 : f32 to vector<2x32xf32>
    %466 = arith.addf %465, %464 : vector<2x32xf32>
    %467 = arith.divf %465, %466 : vector<2x32xf32>
    %468 = vector.extract_strided_slice %458 {offsets = [0, 32], sizes = [2, 32], strides = [1, 1]} : vector<2x128xf32> to vector<2x32xf32>
    %469 = arith.negf %468 : vector<2x32xf32>
    %470 = math.exp %469 : vector<2x32xf32>
    %cst_73 = arith.constant 1.000000e+00 : f32
    %471 = vector.broadcast %cst_73 : f32 to vector<2x32xf32>
    %472 = arith.addf %471, %470 : vector<2x32xf32>
    %473 = arith.divf %471, %472 : vector<2x32xf32>
    %474 = vector.extract_strided_slice %458 {offsets = [0, 64], sizes = [2, 32], strides = [1, 1]} : vector<2x128xf32> to vector<2x32xf32>
    %475 = math.tanh %474 : vector<2x32xf32>
    %476 = vector.extract_strided_slice %458 {offsets = [0, 96], sizes = [2, 32], strides = [1, 1]} : vector<2x128xf32> to vector<2x32xf32>
    %477 = arith.negf %476 : vector<2x32xf32>
    %478 = math.exp %477 : vector<2x32xf32>
    %cst_74 = arith.constant 1.000000e+00 : f32
    %479 = vector.broadcast %cst_74 : f32 to vector<2x32xf32>
    %480 = arith.addf %479, %478 : vector<2x32xf32>
    %481 = arith.divf %479, %480 : vector<2x32xf32>
    %482 = arith.mulf %473, %446 : vector<2x32xf32>
    %483 = arith.mulf %467, %475 : vector<2x32xf32>
    %484 = arith.addf %482, %483 : vector<2x32xf32>
    %485 = math.tanh %484 : vector<2x32xf32>
    %486 = arith.mulf %481, %485 : vector<2x32xf32>
    %487 = vector.extract_strided_slice %461 {offsets = [0, 0], sizes = [2, 32], strides = [1, 1]} : vector<2x128xf32> to vector<2x32xf32>
    %488 = arith.negf %487 : vector<2x32xf32>
    %489 = math.exp %488 : vector<2x32xf32>
    %cst_75 = arith.constant 1.000000e+00 : f32
    %490 = vector.broadcast %cst_75 : f32 to vector<2x32xf32>
    %491 = arith.addf %490, %489 : vector<2x32xf32>
    %492 = arith.divf %490, %491 : vector<2x32xf32>
    %493 = vector.extract_strided_slice %461 {offsets = [0, 32], sizes = [2, 32], strides = [1, 1]} : vector<2x128xf32> to vector<2x32xf32>
    %494 = arith.negf %493 : vector<2x32xf32>
    %495 = math.exp %494 : vector<2x32xf32>
    %cst_76 = arith.constant 1.000000e+00 : f32
    %496 = vector.broadcast %cst_76 : f32 to vector<2x32xf32>
    %497 = arith.addf %496, %495 : vector<2x32xf32>
    %498 = arith.divf %496, %497 : vector<2x32xf32>
    %499 = vector.extract_strided_slice %461 {offsets = [0, 64], sizes = [2, 32], strides = [1, 1]} : vector<2x128xf32> to vector<2x32xf32>
    %500 = math.tanh %499 : vector<2x32xf32>
    %501 = vector.extract_strided_slice %461 {offsets = [0, 96], sizes = [2, 32], strides = [1, 1]} : vector<2x128xf32> to vector<2x32xf32>
    %502 = arith.negf %501 : vector<2x32xf32>
    %503 = math.exp %502 : vector<2x32xf32>
    %cst_77 = arith.constant 1.000000e+00 : f32
    %504 = vector.broadcast %cst_77 : f32 to vector<2x32xf32>
    %505 = arith.addf %504, %503 : vector<2x32xf32>
    %506 = arith.divf %504, %505 : vector<2x32xf32>
    %507 = arith.mulf %498, %448 : vector<2x32xf32>
    %508 = arith.mulf %492, %500 : vector<2x32xf32>
    %509 = arith.addf %507, %508 : vector<2x32xf32>
    %510 = math.tanh %509 : vector<2x32xf32>
    %511 = arith.mulf %506, %510 : vector<2x32xf32>
    %512 = arith.select %16, %486, %445 : vector<2x32xi1>, vector<2x32xf32>
    %513 = arith.select %16, %484, %446 : vector<2x32xi1>, vector<2x32xf32>
    %514 = arith.select %6, %511, %447 : vector<2x32xi1>, vector<2x32xf32>
    %515 = arith.select %6, %509, %448 : vector<2x32xi1>, vector<2x32xf32>
    %cst_78 = arith.constant 0.000000e+00 : f32
    %516 = vector.broadcast %cst_78 : f32 to vector<2x32xf32>
    %517 = arith.select %16, %486, %516 : vector<2x32xi1>, vector<2x32xf32>
    %cst_79 = arith.constant 0.000000e+00 : f32
    %518 = vector.broadcast %cst_79 : f32 to vector<2x32xf32>
    %519 = arith.select %6, %511, %518 : vector<2x32xi1>, vector<2x32xf32>
    %520 = tpu.concatenate %512, %514 in 1 : vector<2x32xf32>, vector<2x32xf32> -> vector<2x64xf32>
    %521 = arith.truncf %520 : vector<2x64xf32> to vector<2x64xbf16>
    %cst_80 = arith.constant dense<0.000000e+00> : vector<2x256xf32>
    %522 = tpu.matmul %521, %49, %cst_80 {dimension_numbers = #tpu.dot_dimension_numbers<[1], [0], [0], [1], [0, 0, 1, 1], [], []>} : vector<2x64xbf16>, vector<64x256xbf16>, vector<2x256xf32> -> vector<2x256xf32>
    %523 = vector.extract_strided_slice %48 {offsets = [0, 0], sizes = [2, 128], strides = [1, 1]} : vector<2x256xf32> to vector<2x128xf32>
    %524 = vector.extract_strided_slice %522 {offsets = [0, 0], sizes = [2, 128], strides = [1, 1]} : vector<2x256xf32> to vector<2x128xf32>
    %525 = arith.addf %523, %524 : vector<2x128xf32>
    %526 = vector.extract_strided_slice %41 {offsets = [0, 128], sizes = [2, 128], strides = [1, 1]} : vector<2x256xf32> to vector<2x128xf32>
    %527 = vector.extract_strided_slice %522 {offsets = [0, 128], sizes = [2, 128], strides = [1, 1]} : vector<2x256xf32> to vector<2x128xf32>
    %528 = arith.addf %526, %527 : vector<2x128xf32>
    %529 = vector.extract_strided_slice %525 {offsets = [0, 0], sizes = [2, 32], strides = [1, 1]} : vector<2x128xf32> to vector<2x32xf32>
    %530 = arith.negf %529 : vector<2x32xf32>
    %531 = math.exp %530 : vector<2x32xf32>
    %cst_81 = arith.constant 1.000000e+00 : f32
    %532 = vector.broadcast %cst_81 : f32 to vector<2x32xf32>
    %533 = arith.addf %532, %531 : vector<2x32xf32>
    %534 = arith.divf %532, %533 : vector<2x32xf32>
    %535 = vector.extract_strided_slice %525 {offsets = [0, 32], sizes = [2, 32], strides = [1, 1]} : vector<2x128xf32> to vector<2x32xf32>
    %536 = arith.negf %535 : vector<2x32xf32>
    %537 = math.exp %536 : vector<2x32xf32>
    %cst_82 = arith.constant 1.000000e+00 : f32
    %538 = vector.broadcast %cst_82 : f32 to vector<2x32xf32>
    %539 = arith.addf %538, %537 : vector<2x32xf32>
    %540 = arith.divf %538, %539 : vector<2x32xf32>
    %541 = vector.extract_strided_slice %525 {offsets = [0, 64], sizes = [2, 32], strides = [1, 1]} : vector<2x128xf32> to vector<2x32xf32>
    %542 = math.tanh %541 : vector<2x32xf32>
    %543 = vector.extract_strided_slice %525 {offsets = [0, 96], sizes = [2, 32], strides = [1, 1]} : vector<2x128xf32> to vector<2x32xf32>
    %544 = arith.negf %543 : vector<2x32xf32>
    %545 = math.exp %544 : vector<2x32xf32>
    %cst_83 = arith.constant 1.000000e+00 : f32
    %546 = vector.broadcast %cst_83 : f32 to vector<2x32xf32>
    %547 = arith.addf %546, %545 : vector<2x32xf32>
    %548 = arith.divf %546, %547 : vector<2x32xf32>
    %549 = arith.mulf %540, %513 : vector<2x32xf32>
    %550 = arith.mulf %534, %542 : vector<2x32xf32>
    %551 = arith.addf %549, %550 : vector<2x32xf32>
    %552 = math.tanh %551 : vector<2x32xf32>
    %553 = arith.mulf %548, %552 : vector<2x32xf32>
    %554 = vector.extract_strided_slice %528 {offsets = [0, 0], sizes = [2, 32], strides = [1, 1]} : vector<2x128xf32> to vector<2x32xf32>
    %555 = arith.negf %554 : vector<2x32xf32>
    %556 = math.exp %555 : vector<2x32xf32>
    %cst_84 = arith.constant 1.000000e+00 : f32
    %557 = vector.broadcast %cst_84 : f32 to vector<2x32xf32>
    %558 = arith.addf %557, %556 : vector<2x32xf32>
    %559 = arith.divf %557, %558 : vector<2x32xf32>
    %560 = vector.extract_strided_slice %528 {offsets = [0, 32], sizes = [2, 32], strides = [1, 1]} : vector<2x128xf32> to vector<2x32xf32>
    %561 = arith.negf %560 : vector<2x32xf32>
    %562 = math.exp %561 : vector<2x32xf32>
    %cst_85 = arith.constant 1.000000e+00 : f32
    %563 = vector.broadcast %cst_85 : f32 to vector<2x32xf32>
    %564 = arith.addf %563, %562 : vector<2x32xf32>
    %565 = arith.divf %563, %564 : vector<2x32xf32>
    %566 = vector.extract_strided_slice %528 {offsets = [0, 64], sizes = [2, 32], strides = [1, 1]} : vector<2x128xf32> to vector<2x32xf32>
    %567 = math.tanh %566 : vector<2x32xf32>
    %568 = vector.extract_strided_slice %528 {offsets = [0, 96], sizes = [2, 32], strides = [1, 1]} : vector<2x128xf32> to vector<2x32xf32>
    %569 = arith.negf %568 : vector<2x32xf32>
    %570 = math.exp %569 : vector<2x32xf32>
    %cst_86 = arith.constant 1.000000e+00 : f32
    %571 = vector.broadcast %cst_86 : f32 to vector<2x32xf32>
    %572 = arith.addf %571, %570 : vector<2x32xf32>
    %573 = arith.divf %571, %572 : vector<2x32xf32>
    %574 = arith.mulf %565, %515 : vector<2x32xf32>
    %575 = arith.mulf %559, %567 : vector<2x32xf32>
    %576 = arith.addf %574, %575 : vector<2x32xf32>
    %577 = math.tanh %576 : vector<2x32xf32>
    %578 = arith.mulf %573, %577 : vector<2x32xf32>
    %cst_87 = arith.constant 0.000000e+00 : f32
    %579 = vector.broadcast %cst_87 : f32 to vector<2x32xf32>
    %580 = arith.select %18, %553, %579 : vector<2x32xi1>, vector<2x32xf32>
    %cst_88 = arith.constant 0.000000e+00 : f32
    %581 = vector.broadcast %cst_88 : f32 to vector<2x32xf32>
    %582 = arith.select %4, %578, %581 : vector<2x32xi1>, vector<2x32xf32>
    %c0_89 = arith.constant 0 : index
    %c0_90 = arith.constant 0 : index
    %583 = vector.load %arg5[%c0_89, %c0_90] : memref<64x256xbf16, #tpu.memory_space<vmem>>, vector<64x256xbf16>
    %c0_91 = arith.constant 0 : index
    %c0_92 = arith.constant 0 : index
    %584 = vector.load %arg7[%c0_91, %c0_92] : memref<1x256xf32, #tpu.memory_space<vmem>>, vector<1x256xf32>
    %585 = tpu.concatenate %115, %582 in 1 : vector<2x32xf32>, vector<2x32xf32> -> vector<2x64xf32>
    %586 = arith.truncf %585 : vector<2x64xf32> to vector<2x64xbf16>
    %cst_93 = arith.constant dense<0.000000e+00> : vector<2x256xf32>
    %587 = tpu.matmul %586, %583, %cst_93 {dimension_numbers = #tpu.dot_dimension_numbers<[1], [0], [0], [1], [0, 0, 1, 1], [], []>} : vector<2x64xbf16>, vector<64x256xbf16>, vector<2x256xf32> -> vector<2x256xf32>
    %588 = vector.broadcast %584 : vector<1x256xf32> to vector<2x256xf32>
    %589 = arith.addf %587, %588 : vector<2x256xf32>
    %590 = tpu.concatenate %182, %519 in 1 : vector<2x32xf32>, vector<2x32xf32> -> vector<2x64xf32>
    %591 = arith.truncf %590 : vector<2x64xf32> to vector<2x64xbf16>
    %cst_94 = arith.constant dense<0.000000e+00> : vector<2x256xf32>
    %592 = tpu.matmul %591, %583, %cst_94 {dimension_numbers = #tpu.dot_dimension_numbers<[1], [0], [0], [1], [0, 0, 1, 1], [], []>} : vector<2x64xbf16>, vector<64x256xbf16>, vector<2x256xf32> -> vector<2x256xf32>
    %593 = vector.broadcast %584 : vector<1x256xf32> to vector<2x256xf32>
    %594 = arith.addf %592, %593 : vector<2x256xf32>
    %595 = tpu.concatenate %249, %452 in 1 : vector<2x32xf32>, vector<2x32xf32> -> vector<2x64xf32>
    %596 = arith.truncf %595 : vector<2x64xf32> to vector<2x64xbf16>
    %cst_95 = arith.constant dense<0.000000e+00> : vector<2x256xf32>
    %597 = tpu.matmul %596, %583, %cst_95 {dimension_numbers = #tpu.dot_dimension_numbers<[1], [0], [0], [1], [0, 0, 1, 1], [], []>} : vector<2x64xbf16>, vector<64x256xbf16>, vector<2x256xf32> -> vector<2x256xf32>
    %598 = vector.broadcast %584 : vector<1x256xf32> to vector<2x256xf32>
    %599 = arith.addf %597, %598 : vector<2x256xf32>
    %600 = tpu.concatenate %316, %385 in 1 : vector<2x32xf32>, vector<2x32xf32> -> vector<2x64xf32>
    %601 = arith.truncf %600 : vector<2x64xf32> to vector<2x64xbf16>
    %cst_96 = arith.constant dense<0.000000e+00> : vector<2x256xf32>
    %602 = tpu.matmul %601, %583, %cst_96 {dimension_numbers = #tpu.dot_dimension_numbers<[1], [0], [0], [1], [0, 0, 1, 1], [], []>} : vector<2x64xbf16>, vector<64x256xbf16>, vector<2x256xf32> -> vector<2x256xf32>
    %603 = vector.broadcast %584 : vector<1x256xf32> to vector<2x256xf32>
    %604 = arith.addf %602, %603 : vector<2x256xf32>
    %605 = tpu.concatenate %383, %318 in 1 : vector<2x32xf32>, vector<2x32xf32> -> vector<2x64xf32>
    %606 = arith.truncf %605 : vector<2x64xf32> to vector<2x64xbf16>
    %cst_97 = arith.constant dense<0.000000e+00> : vector<2x256xf32>
    %607 = tpu.matmul %606, %583, %cst_97 {dimension_numbers = #tpu.dot_dimension_numbers<[1], [0], [0], [1], [0, 0, 1, 1], [], []>} : vector<2x64xbf16>, vector<64x256xbf16>, vector<2x256xf32> -> vector<2x256xf32>
    %608 = vector.broadcast %584 : vector<1x256xf32> to vector<2x256xf32>
    %609 = arith.addf %607, %608 : vector<2x256xf32>
    %610 = tpu.concatenate %450, %251 in 1 : vector<2x32xf32>, vector<2x32xf32> -> vector<2x64xf32>
    %611 = arith.truncf %610 : vector<2x64xf32> to vector<2x64xbf16>
    %cst_98 = arith.constant dense<0.000000e+00> : vector<2x256xf32>
    %612 = tpu.matmul %611, %583, %cst_98 {dimension_numbers = #tpu.dot_dimension_numbers<[1], [0], [0], [1], [0, 0, 1, 1], [], []>} : vector<2x64xbf16>, vector<64x256xbf16>, vector<2x256xf32> -> vector<2x256xf32>
    %613 = vector.broadcast %584 : vector<1x256xf32> to vector<2x256xf32>
    %614 = arith.addf %612, %613 : vector<2x256xf32>
    %615 = tpu.concatenate %517, %184 in 1 : vector<2x32xf32>, vector<2x32xf32> -> vector<2x64xf32>
    %616 = arith.truncf %615 : vector<2x64xf32> to vector<2x64xbf16>
    %cst_99 = arith.constant dense<0.000000e+00> : vector<2x256xf32>
    %617 = tpu.matmul %616, %583, %cst_99 {dimension_numbers = #tpu.dot_dimension_numbers<[1], [0], [0], [1], [0, 0, 1, 1], [], []>} : vector<2x64xbf16>, vector<64x256xbf16>, vector<2x256xf32> -> vector<2x256xf32>
    %618 = vector.broadcast %584 : vector<1x256xf32> to vector<2x256xf32>
    %619 = arith.addf %617, %618 : vector<2x256xf32>
    %620 = tpu.concatenate %580, %117 in 1 : vector<2x32xf32>, vector<2x32xf32> -> vector<2x64xf32>
    %621 = arith.truncf %620 : vector<2x64xf32> to vector<2x64xbf16>
    %cst_100 = arith.constant dense<0.000000e+00> : vector<2x256xf32>
    %622 = tpu.matmul %621, %583, %cst_100 {dimension_numbers = #tpu.dot_dimension_numbers<[1], [0], [0], [1], [0, 0, 1, 1], [], []>} : vector<2x64xbf16>, vector<64x256xbf16>, vector<2x256xf32> -> vector<2x256xf32>
    %623 = vector.broadcast %584 : vector<1x256xf32> to vector<2x256xf32>
    %624 = arith.addf %622, %623 : vector<2x256xf32>
    %c0_101 = arith.constant 0 : index
    %c0_102 = arith.constant 0 : index
    %625 = vector.load %arg6[%c0_101, %c0_102] : memref<64x256xbf16, #tpu.memory_space<vmem>>, vector<64x256xbf16>
    %cst_103 = arith.constant 0.000000e+00 : f32
    %626 = vector.broadcast %cst_103 : f32 to vector<2x32xf32>
    %627 = tpu.concatenate %626, %626 in 1 : vector<2x32xf32>, vector<2x32xf32> -> vector<2x64xf32>
    %628 = arith.truncf %627 : vector<2x64xf32> to vector<2x64xbf16>
    %cst_104 = arith.constant dense<0.000000e+00> : vector<2x256xf32>
    %629 = tpu.matmul %628, %625, %cst_104 {dimension_numbers = #tpu.dot_dimension_numbers<[1], [0], [0], [1], [0, 0, 1, 1], [], []>} : vector<2x64xbf16>, vector<64x256xbf16>, vector<2x256xf32> -> vector<2x256xf32>
    %630 = vector.extract_strided_slice %589 {offsets = [0, 0], sizes = [2, 128], strides = [1, 1]} : vector<2x256xf32> to vector<2x128xf32>
    %631 = vector.extract_strided_slice %629 {offsets = [0, 0], sizes = [2, 128], strides = [1, 1]} : vector<2x256xf32> to vector<2x128xf32>
    %632 = arith.addf %630, %631 : vector<2x128xf32>
    %633 = vector.extract_strided_slice %624 {offsets = [0, 128], sizes = [2, 128], strides = [1, 1]} : vector<2x256xf32> to vector<2x128xf32>
    %634 = vector.extract_strided_slice %629 {offsets = [0, 128], sizes = [2, 128], strides = [1, 1]} : vector<2x256xf32> to vector<2x128xf32>
    %635 = arith.addf %633, %634 : vector<2x128xf32>
    %636 = vector.extract_strided_slice %632 {offsets = [0, 0], sizes = [2, 32], strides = [1, 1]} : vector<2x128xf32> to vector<2x32xf32>
    %637 = arith.negf %636 : vector<2x32xf32>
    %638 = math.exp %637 : vector<2x32xf32>
    %cst_105 = arith.constant 1.000000e+00 : f32
    %639 = vector.broadcast %cst_105 : f32 to vector<2x32xf32>
    %640 = arith.addf %639, %638 : vector<2x32xf32>
    %641 = arith.divf %639, %640 : vector<2x32xf32>
    %642 = vector.extract_strided_slice %632 {offsets = [0, 32], sizes = [2, 32], strides = [1, 1]} : vector<2x128xf32> to vector<2x32xf32>
    %643 = arith.negf %642 : vector<2x32xf32>
    %644 = math.exp %643 : vector<2x32xf32>
    %cst_106 = arith.constant 1.000000e+00 : f32
    %645 = vector.broadcast %cst_106 : f32 to vector<2x32xf32>
    %646 = arith.addf %645, %644 : vector<2x32xf32>
    %647 = arith.divf %645, %646 : vector<2x32xf32>
    %648 = vector.extract_strided_slice %632 {offsets = [0, 64], sizes = [2, 32], strides = [1, 1]} : vector<2x128xf32> to vector<2x32xf32>
    %649 = math.tanh %648 : vector<2x32xf32>
    %650 = vector.extract_strided_slice %632 {offsets = [0, 96], sizes = [2, 32], strides = [1, 1]} : vector<2x128xf32> to vector<2x32xf32>
    %651 = arith.negf %650 : vector<2x32xf32>
    %652 = math.exp %651 : vector<2x32xf32>
    %cst_107 = arith.constant 1.000000e+00 : f32
    %653 = vector.broadcast %cst_107 : f32 to vector<2x32xf32>
    %654 = arith.addf %653, %652 : vector<2x32xf32>
    %655 = arith.divf %653, %654 : vector<2x32xf32>
    %656 = arith.mulf %647, %626 : vector<2x32xf32>
    %657 = arith.mulf %641, %649 : vector<2x32xf32>
    %658 = arith.addf %656, %657 : vector<2x32xf32>
    %659 = math.tanh %658 : vector<2x32xf32>
    %660 = arith.mulf %655, %659 : vector<2x32xf32>
    %661 = vector.extract_strided_slice %635 {offsets = [0, 0], sizes = [2, 32], strides = [1, 1]} : vector<2x128xf32> to vector<2x32xf32>
    %662 = arith.negf %661 : vector<2x32xf32>
    %663 = math.exp %662 : vector<2x32xf32>
    %cst_108 = arith.constant 1.000000e+00 : f32
    %664 = vector.broadcast %cst_108 : f32 to vector<2x32xf32>
    %665 = arith.addf %664, %663 : vector<2x32xf32>
    %666 = arith.divf %664, %665 : vector<2x32xf32>
    %667 = vector.extract_strided_slice %635 {offsets = [0, 32], sizes = [2, 32], strides = [1, 1]} : vector<2x128xf32> to vector<2x32xf32>
    %668 = arith.negf %667 : vector<2x32xf32>
    %669 = math.exp %668 : vector<2x32xf32>
    %cst_109 = arith.constant 1.000000e+00 : f32
    %670 = vector.broadcast %cst_109 : f32 to vector<2x32xf32>
    %671 = arith.addf %670, %669 : vector<2x32xf32>
    %672 = arith.divf %670, %671 : vector<2x32xf32>
    %673 = vector.extract_strided_slice %635 {offsets = [0, 64], sizes = [2, 32], strides = [1, 1]} : vector<2x128xf32> to vector<2x32xf32>
    %674 = math.tanh %673 : vector<2x32xf32>
    %675 = vector.extract_strided_slice %635 {offsets = [0, 96], sizes = [2, 32], strides = [1, 1]} : vector<2x128xf32> to vector<2x32xf32>
    %676 = arith.negf %675 : vector<2x32xf32>
    %677 = math.exp %676 : vector<2x32xf32>
    %cst_110 = arith.constant 1.000000e+00 : f32
    %678 = vector.broadcast %cst_110 : f32 to vector<2x32xf32>
    %679 = arith.addf %678, %677 : vector<2x32xf32>
    %680 = arith.divf %678, %679 : vector<2x32xf32>
    %681 = arith.mulf %672, %626 : vector<2x32xf32>
    %682 = arith.mulf %666, %674 : vector<2x32xf32>
    %683 = arith.addf %681, %682 : vector<2x32xf32>
    %684 = math.tanh %683 : vector<2x32xf32>
    %685 = arith.mulf %680, %684 : vector<2x32xf32>
    %686 = arith.select %4, %660, %626 : vector<2x32xi1>, vector<2x32xf32>
    %687 = arith.select %4, %658, %626 : vector<2x32xi1>, vector<2x32xf32>
    %688 = arith.select %18, %685, %626 : vector<2x32xi1>, vector<2x32xf32>
    %689 = arith.select %18, %683, %626 : vector<2x32xi1>, vector<2x32xf32>
    %690 = arith.select %34, %685, %626 : vector<2x32xi1>, vector<2x32xf32>
    %691 = tpu.concatenate %686, %688 in 1 : vector<2x32xf32>, vector<2x32xf32> -> vector<2x64xf32>
    %692 = arith.truncf %691 : vector<2x64xf32> to vector<2x64xbf16>
    %cst_111 = arith.constant dense<0.000000e+00> : vector<2x256xf32>
    %693 = tpu.matmul %692, %625, %cst_111 {dimension_numbers = #tpu.dot_dimension_numbers<[1], [0], [0], [1], [0, 0, 1, 1], [], []>} : vector<2x64xbf16>, vector<64x256xbf16>, vector<2x256xf32> -> vector<2x256xf32>
    %694 = vector.extract_strided_slice %594 {offsets = [0, 0], sizes = [2, 128], strides = [1, 1]} : vector<2x256xf32> to vector<2x128xf32>
    %695 = vector.extract_strided_slice %693 {offsets = [0, 0], sizes = [2, 128], strides = [1, 1]} : vector<2x256xf32> to vector<2x128xf32>
    %696 = arith.addf %694, %695 : vector<2x128xf32>
    %697 = vector.extract_strided_slice %619 {offsets = [0, 128], sizes = [2, 128], strides = [1, 1]} : vector<2x256xf32> to vector<2x128xf32>
    %698 = vector.extract_strided_slice %693 {offsets = [0, 128], sizes = [2, 128], strides = [1, 1]} : vector<2x256xf32> to vector<2x128xf32>
    %699 = arith.addf %697, %698 : vector<2x128xf32>
    %700 = vector.extract_strided_slice %696 {offsets = [0, 0], sizes = [2, 32], strides = [1, 1]} : vector<2x128xf32> to vector<2x32xf32>
    %701 = arith.negf %700 : vector<2x32xf32>
    %702 = math.exp %701 : vector<2x32xf32>
    %cst_112 = arith.constant 1.000000e+00 : f32
    %703 = vector.broadcast %cst_112 : f32 to vector<2x32xf32>
    %704 = arith.addf %703, %702 : vector<2x32xf32>
    %705 = arith.divf %703, %704 : vector<2x32xf32>
    %706 = vector.extract_strided_slice %696 {offsets = [0, 32], sizes = [2, 32], strides = [1, 1]} : vector<2x128xf32> to vector<2x32xf32>
    %707 = arith.negf %706 : vector<2x32xf32>
    %708 = math.exp %707 : vector<2x32xf32>
    %cst_113 = arith.constant 1.000000e+00 : f32
    %709 = vector.broadcast %cst_113 : f32 to vector<2x32xf32>
    %710 = arith.addf %709, %708 : vector<2x32xf32>
    %711 = arith.divf %709, %710 : vector<2x32xf32>
    %712 = vector.extract_strided_slice %696 {offsets = [0, 64], sizes = [2, 32], strides = [1, 1]} : vector<2x128xf32> to vector<2x32xf32>
    %713 = math.tanh %712 : vector<2x32xf32>
    %714 = vector.extract_strided_slice %696 {offsets = [0, 96], sizes = [2, 32], strides = [1, 1]} : vector<2x128xf32> to vector<2x32xf32>
    %715 = arith.negf %714 : vector<2x32xf32>
    %716 = math.exp %715 : vector<2x32xf32>
    %cst_114 = arith.constant 1.000000e+00 : f32
    %717 = vector.broadcast %cst_114 : f32 to vector<2x32xf32>
    %718 = arith.addf %717, %716 : vector<2x32xf32>
    %719 = arith.divf %717, %718 : vector<2x32xf32>
    %720 = arith.mulf %711, %687 : vector<2x32xf32>
    %721 = arith.mulf %705, %713 : vector<2x32xf32>
    %722 = arith.addf %720, %721 : vector<2x32xf32>
    %723 = math.tanh %722 : vector<2x32xf32>
    %724 = arith.mulf %719, %723 : vector<2x32xf32>
    %725 = vector.extract_strided_slice %699 {offsets = [0, 0], sizes = [2, 32], strides = [1, 1]} : vector<2x128xf32> to vector<2x32xf32>
    %726 = arith.negf %725 : vector<2x32xf32>
    %727 = math.exp %726 : vector<2x32xf32>
    %cst_115 = arith.constant 1.000000e+00 : f32
    %728 = vector.broadcast %cst_115 : f32 to vector<2x32xf32>
    %729 = arith.addf %728, %727 : vector<2x32xf32>
    %730 = arith.divf %728, %729 : vector<2x32xf32>
    %731 = vector.extract_strided_slice %699 {offsets = [0, 32], sizes = [2, 32], strides = [1, 1]} : vector<2x128xf32> to vector<2x32xf32>
    %732 = arith.negf %731 : vector<2x32xf32>
    %733 = math.exp %732 : vector<2x32xf32>
    %cst_116 = arith.constant 1.000000e+00 : f32
    %734 = vector.broadcast %cst_116 : f32 to vector<2x32xf32>
    %735 = arith.addf %734, %733 : vector<2x32xf32>
    %736 = arith.divf %734, %735 : vector<2x32xf32>
    %737 = vector.extract_strided_slice %699 {offsets = [0, 64], sizes = [2, 32], strides = [1, 1]} : vector<2x128xf32> to vector<2x32xf32>
    %738 = math.tanh %737 : vector<2x32xf32>
    %739 = vector.extract_strided_slice %699 {offsets = [0, 96], sizes = [2, 32], strides = [1, 1]} : vector<2x128xf32> to vector<2x32xf32>
    %740 = arith.negf %739 : vector<2x32xf32>
    %741 = math.exp %740 : vector<2x32xf32>
    %cst_117 = arith.constant 1.000000e+00 : f32
    %742 = vector.broadcast %cst_117 : f32 to vector<2x32xf32>
    %743 = arith.addf %742, %741 : vector<2x32xf32>
    %744 = arith.divf %742, %743 : vector<2x32xf32>
    %745 = arith.mulf %736, %689 : vector<2x32xf32>
    %746 = arith.mulf %730, %738 : vector<2x32xf32>
    %747 = arith.addf %745, %746 : vector<2x32xf32>
    %748 = math.tanh %747 : vector<2x32xf32>
    %749 = arith.mulf %744, %748 : vector<2x32xf32>
    %750 = arith.select %6, %724, %686 : vector<2x32xi1>, vector<2x32xf32>
    %751 = arith.select %6, %722, %687 : vector<2x32xi1>, vector<2x32xf32>
    %752 = arith.select %16, %749, %688 : vector<2x32xi1>, vector<2x32xf32>
    %753 = arith.select %16, %747, %689 : vector<2x32xi1>, vector<2x32xf32>
    %754 = arith.select %32, %749, %690 : vector<2x32xi1>, vector<2x32xf32>
    %755 = tpu.concatenate %750, %752 in 1 : vector<2x32xf32>, vector<2x32xf32> -> vector<2x64xf32>
    %756 = arith.truncf %755 : vector<2x64xf32> to vector<2x64xbf16>
    %cst_118 = arith.constant dense<0.000000e+00> : vector<2x256xf32>
    %757 = tpu.matmul %756, %625, %cst_118 {dimension_numbers = #tpu.dot_dimension_numbers<[1], [0], [0], [1], [0, 0, 1, 1], [], []>} : vector<2x64xbf16>, vector<64x256xbf16>, vector<2x256xf32> -> vector<2x256xf32>
    %758 = vector.extract_strided_slice %599 {offsets = [0, 0], sizes = [2, 128], strides = [1, 1]} : vector<2x256xf32> to vector<2x128xf32>
    %759 = vector.extract_strided_slice %757 {offsets = [0, 0], sizes = [2, 128], strides = [1, 1]} : vector<2x256xf32> to vector<2x128xf32>
    %760 = arith.addf %758, %759 : vector<2x128xf32>
    %761 = vector.extract_strided_slice %614 {offsets = [0, 128], sizes = [2, 128], strides = [1, 1]} : vector<2x256xf32> to vector<2x128xf32>
    %762 = vector.extract_strided_slice %757 {offsets = [0, 128], sizes = [2, 128], strides = [1, 1]} : vector<2x256xf32> to vector<2x128xf32>
    %763 = arith.addf %761, %762 : vector<2x128xf32>
    %764 = vector.extract_strided_slice %760 {offsets = [0, 0], sizes = [2, 32], strides = [1, 1]} : vector<2x128xf32> to vector<2x32xf32>
    %765 = arith.negf %764 : vector<2x32xf32>
    %766 = math.exp %765 : vector<2x32xf32>
    %cst_119 = arith.constant 1.000000e+00 : f32
    %767 = vector.broadcast %cst_119 : f32 to vector<2x32xf32>
    %768 = arith.addf %767, %766 : vector<2x32xf32>
    %769 = arith.divf %767, %768 : vector<2x32xf32>
    %770 = vector.extract_strided_slice %760 {offsets = [0, 32], sizes = [2, 32], strides = [1, 1]} : vector<2x128xf32> to vector<2x32xf32>
    %771 = arith.negf %770 : vector<2x32xf32>
    %772 = math.exp %771 : vector<2x32xf32>
    %cst_120 = arith.constant 1.000000e+00 : f32
    %773 = vector.broadcast %cst_120 : f32 to vector<2x32xf32>
    %774 = arith.addf %773, %772 : vector<2x32xf32>
    %775 = arith.divf %773, %774 : vector<2x32xf32>
    %776 = vector.extract_strided_slice %760 {offsets = [0, 64], sizes = [2, 32], strides = [1, 1]} : vector<2x128xf32> to vector<2x32xf32>
    %777 = math.tanh %776 : vector<2x32xf32>
    %778 = vector.extract_strided_slice %760 {offsets = [0, 96], sizes = [2, 32], strides = [1, 1]} : vector<2x128xf32> to vector<2x32xf32>
    %779 = arith.negf %778 : vector<2x32xf32>
    %780 = math.exp %779 : vector<2x32xf32>
    %cst_121 = arith.constant 1.000000e+00 : f32
    %781 = vector.broadcast %cst_121 : f32 to vector<2x32xf32>
    %782 = arith.addf %781, %780 : vector<2x32xf32>
    %783 = arith.divf %781, %782 : vector<2x32xf32>
    %784 = arith.mulf %775, %751 : vector<2x32xf32>
    %785 = arith.mulf %769, %777 : vector<2x32xf32>
    %786 = arith.addf %784, %785 : vector<2x32xf32>
    %787 = math.tanh %786 : vector<2x32xf32>
    %788 = arith.mulf %783, %787 : vector<2x32xf32>
    %789 = vector.extract_strided_slice %763 {offsets = [0, 0], sizes = [2, 32], strides = [1, 1]} : vector<2x128xf32> to vector<2x32xf32>
    %790 = arith.negf %789 : vector<2x32xf32>
    %791 = math.exp %790 : vector<2x32xf32>
    %cst_122 = arith.constant 1.000000e+00 : f32
    %792 = vector.broadcast %cst_122 : f32 to vector<2x32xf32>
    %793 = arith.addf %792, %791 : vector<2x32xf32>
    %794 = arith.divf %792, %793 : vector<2x32xf32>
    %795 = vector.extract_strided_slice %763 {offsets = [0, 32], sizes = [2, 32], strides = [1, 1]} : vector<2x128xf32> to vector<2x32xf32>
    %796 = arith.negf %795 : vector<2x32xf32>
    %797 = math.exp %796 : vector<2x32xf32>
    %cst_123 = arith.constant 1.000000e+00 : f32
    %798 = vector.broadcast %cst_123 : f32 to vector<2x32xf32>
    %799 = arith.addf %798, %797 : vector<2x32xf32>
    %800 = arith.divf %798, %799 : vector<2x32xf32>
    %801 = vector.extract_strided_slice %763 {offsets = [0, 64], sizes = [2, 32], strides = [1, 1]} : vector<2x128xf32> to vector<2x32xf32>
    %802 = math.tanh %801 : vector<2x32xf32>
    %803 = vector.extract_strided_slice %763 {offsets = [0, 96], sizes = [2, 32], strides = [1, 1]} : vector<2x128xf32> to vector<2x32xf32>
    %804 = arith.negf %803 : vector<2x32xf32>
    %805 = math.exp %804 : vector<2x32xf32>
    %cst_124 = arith.constant 1.000000e+00 : f32
    %806 = vector.broadcast %cst_124 : f32 to vector<2x32xf32>
    %807 = arith.addf %806, %805 : vector<2x32xf32>
    %808 = arith.divf %806, %807 : vector<2x32xf32>
    %809 = arith.mulf %800, %753 : vector<2x32xf32>
    %810 = arith.mulf %794, %802 : vector<2x32xf32>
    %811 = arith.addf %809, %810 : vector<2x32xf32>
    %812 = math.tanh %811 : vector<2x32xf32>
    %813 = arith.mulf %808, %812 : vector<2x32xf32>
    %814 = arith.select %8, %788, %750 : vector<2x32xi1>, vector<2x32xf32>
    %815 = arith.select %8, %786, %751 : vector<2x32xi1>, vector<2x32xf32>
    %816 = arith.select %14, %813, %752 : vector<2x32xi1>, vector<2x32xf32>
    %817 = arith.select %14, %811, %753 : vector<2x32xi1>, vector<2x32xf32>
    %818 = arith.select %30, %813, %754 : vector<2x32xi1>, vector<2x32xf32>
    %819 = tpu.concatenate %814, %816 in 1 : vector<2x32xf32>, vector<2x32xf32> -> vector<2x64xf32>
    %820 = arith.truncf %819 : vector<2x64xf32> to vector<2x64xbf16>
    %cst_125 = arith.constant dense<0.000000e+00> : vector<2x256xf32>
    %821 = tpu.matmul %820, %625, %cst_125 {dimension_numbers = #tpu.dot_dimension_numbers<[1], [0], [0], [1], [0, 0, 1, 1], [], []>} : vector<2x64xbf16>, vector<64x256xbf16>, vector<2x256xf32> -> vector<2x256xf32>
    %822 = vector.extract_strided_slice %604 {offsets = [0, 0], sizes = [2, 128], strides = [1, 1]} : vector<2x256xf32> to vector<2x128xf32>
    %823 = vector.extract_strided_slice %821 {offsets = [0, 0], sizes = [2, 128], strides = [1, 1]} : vector<2x256xf32> to vector<2x128xf32>
    %824 = arith.addf %822, %823 : vector<2x128xf32>
    %825 = vector.extract_strided_slice %609 {offsets = [0, 128], sizes = [2, 128], strides = [1, 1]} : vector<2x256xf32> to vector<2x128xf32>
    %826 = vector.extract_strided_slice %821 {offsets = [0, 128], sizes = [2, 128], strides = [1, 1]} : vector<2x256xf32> to vector<2x128xf32>
    %827 = arith.addf %825, %826 : vector<2x128xf32>
    %828 = vector.extract_strided_slice %824 {offsets = [0, 0], sizes = [2, 32], strides = [1, 1]} : vector<2x128xf32> to vector<2x32xf32>
    %829 = arith.negf %828 : vector<2x32xf32>
    %830 = math.exp %829 : vector<2x32xf32>
    %cst_126 = arith.constant 1.000000e+00 : f32
    %831 = vector.broadcast %cst_126 : f32 to vector<2x32xf32>
    %832 = arith.addf %831, %830 : vector<2x32xf32>
    %833 = arith.divf %831, %832 : vector<2x32xf32>
    %834 = vector.extract_strided_slice %824 {offsets = [0, 32], sizes = [2, 32], strides = [1, 1]} : vector<2x128xf32> to vector<2x32xf32>
    %835 = arith.negf %834 : vector<2x32xf32>
    %836 = math.exp %835 : vector<2x32xf32>
    %cst_127 = arith.constant 1.000000e+00 : f32
    %837 = vector.broadcast %cst_127 : f32 to vector<2x32xf32>
    %838 = arith.addf %837, %836 : vector<2x32xf32>
    %839 = arith.divf %837, %838 : vector<2x32xf32>
    %840 = vector.extract_strided_slice %824 {offsets = [0, 64], sizes = [2, 32], strides = [1, 1]} : vector<2x128xf32> to vector<2x32xf32>
    %841 = math.tanh %840 : vector<2x32xf32>
    %842 = vector.extract_strided_slice %824 {offsets = [0, 96], sizes = [2, 32], strides = [1, 1]} : vector<2x128xf32> to vector<2x32xf32>
    %843 = arith.negf %842 : vector<2x32xf32>
    %844 = math.exp %843 : vector<2x32xf32>
    %cst_128 = arith.constant 1.000000e+00 : f32
    %845 = vector.broadcast %cst_128 : f32 to vector<2x32xf32>
    %846 = arith.addf %845, %844 : vector<2x32xf32>
    %847 = arith.divf %845, %846 : vector<2x32xf32>
    %848 = arith.mulf %839, %815 : vector<2x32xf32>
    %849 = arith.mulf %833, %841 : vector<2x32xf32>
    %850 = arith.addf %848, %849 : vector<2x32xf32>
    %851 = math.tanh %850 : vector<2x32xf32>
    %852 = arith.mulf %847, %851 : vector<2x32xf32>
    %853 = vector.extract_strided_slice %827 {offsets = [0, 0], sizes = [2, 32], strides = [1, 1]} : vector<2x128xf32> to vector<2x32xf32>
    %854 = arith.negf %853 : vector<2x32xf32>
    %855 = math.exp %854 : vector<2x32xf32>
    %cst_129 = arith.constant 1.000000e+00 : f32
    %856 = vector.broadcast %cst_129 : f32 to vector<2x32xf32>
    %857 = arith.addf %856, %855 : vector<2x32xf32>
    %858 = arith.divf %856, %857 : vector<2x32xf32>
    %859 = vector.extract_strided_slice %827 {offsets = [0, 32], sizes = [2, 32], strides = [1, 1]} : vector<2x128xf32> to vector<2x32xf32>
    %860 = arith.negf %859 : vector<2x32xf32>
    %861 = math.exp %860 : vector<2x32xf32>
    %cst_130 = arith.constant 1.000000e+00 : f32
    %862 = vector.broadcast %cst_130 : f32 to vector<2x32xf32>
    %863 = arith.addf %862, %861 : vector<2x32xf32>
    %864 = arith.divf %862, %863 : vector<2x32xf32>
    %865 = vector.extract_strided_slice %827 {offsets = [0, 64], sizes = [2, 32], strides = [1, 1]} : vector<2x128xf32> to vector<2x32xf32>
    %866 = math.tanh %865 : vector<2x32xf32>
    %867 = vector.extract_strided_slice %827 {offsets = [0, 96], sizes = [2, 32], strides = [1, 1]} : vector<2x128xf32> to vector<2x32xf32>
    %868 = arith.negf %867 : vector<2x32xf32>
    %869 = math.exp %868 : vector<2x32xf32>
    %cst_131 = arith.constant 1.000000e+00 : f32
    %870 = vector.broadcast %cst_131 : f32 to vector<2x32xf32>
    %871 = arith.addf %870, %869 : vector<2x32xf32>
    %872 = arith.divf %870, %871 : vector<2x32xf32>
    %873 = arith.mulf %864, %817 : vector<2x32xf32>
    %874 = arith.mulf %858, %866 : vector<2x32xf32>
    %875 = arith.addf %873, %874 : vector<2x32xf32>
    %876 = math.tanh %875 : vector<2x32xf32>
    %877 = arith.mulf %872, %876 : vector<2x32xf32>
    %878 = arith.select %10, %852, %814 : vector<2x32xi1>, vector<2x32xf32>
    %879 = arith.select %10, %850, %815 : vector<2x32xi1>, vector<2x32xf32>
    %880 = arith.select %12, %877, %816 : vector<2x32xi1>, vector<2x32xf32>
    %881 = arith.select %12, %875, %817 : vector<2x32xi1>, vector<2x32xf32>
    %882 = arith.select %28, %877, %818 : vector<2x32xi1>, vector<2x32xf32>
    %883 = tpu.concatenate %878, %880 in 1 : vector<2x32xf32>, vector<2x32xf32> -> vector<2x64xf32>
    %884 = arith.truncf %883 : vector<2x64xf32> to vector<2x64xbf16>
    %cst_132 = arith.constant dense<0.000000e+00> : vector<2x256xf32>
    %885 = tpu.matmul %884, %625, %cst_132 {dimension_numbers = #tpu.dot_dimension_numbers<[1], [0], [0], [1], [0, 0, 1, 1], [], []>} : vector<2x64xbf16>, vector<64x256xbf16>, vector<2x256xf32> -> vector<2x256xf32>
    %886 = vector.extract_strided_slice %609 {offsets = [0, 0], sizes = [2, 128], strides = [1, 1]} : vector<2x256xf32> to vector<2x128xf32>
    %887 = vector.extract_strided_slice %885 {offsets = [0, 0], sizes = [2, 128], strides = [1, 1]} : vector<2x256xf32> to vector<2x128xf32>
    %888 = arith.addf %886, %887 : vector<2x128xf32>
    %889 = vector.extract_strided_slice %604 {offsets = [0, 128], sizes = [2, 128], strides = [1, 1]} : vector<2x256xf32> to vector<2x128xf32>
    %890 = vector.extract_strided_slice %885 {offsets = [0, 128], sizes = [2, 128], strides = [1, 1]} : vector<2x256xf32> to vector<2x128xf32>
    %891 = arith.addf %889, %890 : vector<2x128xf32>
    %892 = vector.extract_strided_slice %888 {offsets = [0, 0], sizes = [2, 32], strides = [1, 1]} : vector<2x128xf32> to vector<2x32xf32>
    %893 = arith.negf %892 : vector<2x32xf32>
    %894 = math.exp %893 : vector<2x32xf32>
    %cst_133 = arith.constant 1.000000e+00 : f32
    %895 = vector.broadcast %cst_133 : f32 to vector<2x32xf32>
    %896 = arith.addf %895, %894 : vector<2x32xf32>
    %897 = arith.divf %895, %896 : vector<2x32xf32>
    %898 = vector.extract_strided_slice %888 {offsets = [0, 32], sizes = [2, 32], strides = [1, 1]} : vector<2x128xf32> to vector<2x32xf32>
    %899 = arith.negf %898 : vector<2x32xf32>
    %900 = math.exp %899 : vector<2x32xf32>
    %cst_134 = arith.constant 1.000000e+00 : f32
    %901 = vector.broadcast %cst_134 : f32 to vector<2x32xf32>
    %902 = arith.addf %901, %900 : vector<2x32xf32>
    %903 = arith.divf %901, %902 : vector<2x32xf32>
    %904 = vector.extract_strided_slice %888 {offsets = [0, 64], sizes = [2, 32], strides = [1, 1]} : vector<2x128xf32> to vector<2x32xf32>
    %905 = math.tanh %904 : vector<2x32xf32>
    %906 = vector.extract_strided_slice %888 {offsets = [0, 96], sizes = [2, 32], strides = [1, 1]} : vector<2x128xf32> to vector<2x32xf32>
    %907 = arith.negf %906 : vector<2x32xf32>
    %908 = math.exp %907 : vector<2x32xf32>
    %cst_135 = arith.constant 1.000000e+00 : f32
    %909 = vector.broadcast %cst_135 : f32 to vector<2x32xf32>
    %910 = arith.addf %909, %908 : vector<2x32xf32>
    %911 = arith.divf %909, %910 : vector<2x32xf32>
    %912 = arith.mulf %903, %879 : vector<2x32xf32>
    %913 = arith.mulf %897, %905 : vector<2x32xf32>
    %914 = arith.addf %912, %913 : vector<2x32xf32>
    %915 = math.tanh %914 : vector<2x32xf32>
    %916 = arith.mulf %911, %915 : vector<2x32xf32>
    %917 = vector.extract_strided_slice %891 {offsets = [0, 0], sizes = [2, 32], strides = [1, 1]} : vector<2x128xf32> to vector<2x32xf32>
    %918 = arith.negf %917 : vector<2x32xf32>
    %919 = math.exp %918 : vector<2x32xf32>
    %cst_136 = arith.constant 1.000000e+00 : f32
    %920 = vector.broadcast %cst_136 : f32 to vector<2x32xf32>
    %921 = arith.addf %920, %919 : vector<2x32xf32>
    %922 = arith.divf %920, %921 : vector<2x32xf32>
    %923 = vector.extract_strided_slice %891 {offsets = [0, 32], sizes = [2, 32], strides = [1, 1]} : vector<2x128xf32> to vector<2x32xf32>
    %924 = arith.negf %923 : vector<2x32xf32>
    %925 = math.exp %924 : vector<2x32xf32>
    %cst_137 = arith.constant 1.000000e+00 : f32
    %926 = vector.broadcast %cst_137 : f32 to vector<2x32xf32>
    %927 = arith.addf %926, %925 : vector<2x32xf32>
    %928 = arith.divf %926, %927 : vector<2x32xf32>
    %929 = vector.extract_strided_slice %891 {offsets = [0, 64], sizes = [2, 32], strides = [1, 1]} : vector<2x128xf32> to vector<2x32xf32>
    %930 = math.tanh %929 : vector<2x32xf32>
    %931 = vector.extract_strided_slice %891 {offsets = [0, 96], sizes = [2, 32], strides = [1, 1]} : vector<2x128xf32> to vector<2x32xf32>
    %932 = arith.negf %931 : vector<2x32xf32>
    %933 = math.exp %932 : vector<2x32xf32>
    %cst_138 = arith.constant 1.000000e+00 : f32
    %934 = vector.broadcast %cst_138 : f32 to vector<2x32xf32>
    %935 = arith.addf %934, %933 : vector<2x32xf32>
    %936 = arith.divf %934, %935 : vector<2x32xf32>
    %937 = arith.mulf %928, %881 : vector<2x32xf32>
    %938 = arith.mulf %922, %930 : vector<2x32xf32>
    %939 = arith.addf %937, %938 : vector<2x32xf32>
    %940 = math.tanh %939 : vector<2x32xf32>
    %941 = arith.mulf %936, %940 : vector<2x32xf32>
    %942 = arith.select %12, %916, %878 : vector<2x32xi1>, vector<2x32xf32>
    %943 = arith.select %12, %914, %879 : vector<2x32xi1>, vector<2x32xf32>
    %944 = arith.select %10, %941, %880 : vector<2x32xi1>, vector<2x32xf32>
    %945 = arith.select %10, %939, %881 : vector<2x32xi1>, vector<2x32xf32>
    %946 = arith.select %26, %941, %882 : vector<2x32xi1>, vector<2x32xf32>
    %947 = tpu.concatenate %942, %944 in 1 : vector<2x32xf32>, vector<2x32xf32> -> vector<2x64xf32>
    %948 = arith.truncf %947 : vector<2x64xf32> to vector<2x64xbf16>
    %cst_139 = arith.constant dense<0.000000e+00> : vector<2x256xf32>
    %949 = tpu.matmul %948, %625, %cst_139 {dimension_numbers = #tpu.dot_dimension_numbers<[1], [0], [0], [1], [0, 0, 1, 1], [], []>} : vector<2x64xbf16>, vector<64x256xbf16>, vector<2x256xf32> -> vector<2x256xf32>
    %950 = vector.extract_strided_slice %614 {offsets = [0, 0], sizes = [2, 128], strides = [1, 1]} : vector<2x256xf32> to vector<2x128xf32>
    %951 = vector.extract_strided_slice %949 {offsets = [0, 0], sizes = [2, 128], strides = [1, 1]} : vector<2x256xf32> to vector<2x128xf32>
    %952 = arith.addf %950, %951 : vector<2x128xf32>
    %953 = vector.extract_strided_slice %599 {offsets = [0, 128], sizes = [2, 128], strides = [1, 1]} : vector<2x256xf32> to vector<2x128xf32>
    %954 = vector.extract_strided_slice %949 {offsets = [0, 128], sizes = [2, 128], strides = [1, 1]} : vector<2x256xf32> to vector<2x128xf32>
    %955 = arith.addf %953, %954 : vector<2x128xf32>
    %956 = vector.extract_strided_slice %952 {offsets = [0, 0], sizes = [2, 32], strides = [1, 1]} : vector<2x128xf32> to vector<2x32xf32>
    %957 = arith.negf %956 : vector<2x32xf32>
    %958 = math.exp %957 : vector<2x32xf32>
    %cst_140 = arith.constant 1.000000e+00 : f32
    %959 = vector.broadcast %cst_140 : f32 to vector<2x32xf32>
    %960 = arith.addf %959, %958 : vector<2x32xf32>
    %961 = arith.divf %959, %960 : vector<2x32xf32>
    %962 = vector.extract_strided_slice %952 {offsets = [0, 32], sizes = [2, 32], strides = [1, 1]} : vector<2x128xf32> to vector<2x32xf32>
    %963 = arith.negf %962 : vector<2x32xf32>
    %964 = math.exp %963 : vector<2x32xf32>
    %cst_141 = arith.constant 1.000000e+00 : f32
    %965 = vector.broadcast %cst_141 : f32 to vector<2x32xf32>
    %966 = arith.addf %965, %964 : vector<2x32xf32>
    %967 = arith.divf %965, %966 : vector<2x32xf32>
    %968 = vector.extract_strided_slice %952 {offsets = [0, 64], sizes = [2, 32], strides = [1, 1]} : vector<2x128xf32> to vector<2x32xf32>
    %969 = math.tanh %968 : vector<2x32xf32>
    %970 = vector.extract_strided_slice %952 {offsets = [0, 96], sizes = [2, 32], strides = [1, 1]} : vector<2x128xf32> to vector<2x32xf32>
    %971 = arith.negf %970 : vector<2x32xf32>
    %972 = math.exp %971 : vector<2x32xf32>
    %cst_142 = arith.constant 1.000000e+00 : f32
    %973 = vector.broadcast %cst_142 : f32 to vector<2x32xf32>
    %974 = arith.addf %973, %972 : vector<2x32xf32>
    %975 = arith.divf %973, %974 : vector<2x32xf32>
    %976 = arith.mulf %967, %943 : vector<2x32xf32>
    %977 = arith.mulf %961, %969 : vector<2x32xf32>
    %978 = arith.addf %976, %977 : vector<2x32xf32>
    %979 = math.tanh %978 : vector<2x32xf32>
    %980 = arith.mulf %975, %979 : vector<2x32xf32>
    %981 = vector.extract_strided_slice %955 {offsets = [0, 0], sizes = [2, 32], strides = [1, 1]} : vector<2x128xf32> to vector<2x32xf32>
    %982 = arith.negf %981 : vector<2x32xf32>
    %983 = math.exp %982 : vector<2x32xf32>
    %cst_143 = arith.constant 1.000000e+00 : f32
    %984 = vector.broadcast %cst_143 : f32 to vector<2x32xf32>
    %985 = arith.addf %984, %983 : vector<2x32xf32>
    %986 = arith.divf %984, %985 : vector<2x32xf32>
    %987 = vector.extract_strided_slice %955 {offsets = [0, 32], sizes = [2, 32], strides = [1, 1]} : vector<2x128xf32> to vector<2x32xf32>
    %988 = arith.negf %987 : vector<2x32xf32>
    %989 = math.exp %988 : vector<2x32xf32>
    %cst_144 = arith.constant 1.000000e+00 : f32
    %990 = vector.broadcast %cst_144 : f32 to vector<2x32xf32>
    %991 = arith.addf %990, %989 : vector<2x32xf32>
    %992 = arith.divf %990, %991 : vector<2x32xf32>
    %993 = vector.extract_strided_slice %955 {offsets = [0, 64], sizes = [2, 32], strides = [1, 1]} : vector<2x128xf32> to vector<2x32xf32>
    %994 = math.tanh %993 : vector<2x32xf32>
    %995 = vector.extract_strided_slice %955 {offsets = [0, 96], sizes = [2, 32], strides = [1, 1]} : vector<2x128xf32> to vector<2x32xf32>
    %996 = arith.negf %995 : vector<2x32xf32>
    %997 = math.exp %996 : vector<2x32xf32>
    %cst_145 = arith.constant 1.000000e+00 : f32
    %998 = vector.broadcast %cst_145 : f32 to vector<2x32xf32>
    %999 = arith.addf %998, %997 : vector<2x32xf32>
    %1000 = arith.divf %998, %999 : vector<2x32xf32>
    %1001 = arith.mulf %992, %945 : vector<2x32xf32>
    %1002 = arith.mulf %986, %994 : vector<2x32xf32>
    %1003 = arith.addf %1001, %1002 : vector<2x32xf32>
    %1004 = math.tanh %1003 : vector<2x32xf32>
    %1005 = arith.mulf %1000, %1004 : vector<2x32xf32>
    %1006 = arith.select %14, %980, %942 : vector<2x32xi1>, vector<2x32xf32>
    %1007 = arith.select %14, %978, %943 : vector<2x32xi1>, vector<2x32xf32>
    %1008 = arith.select %8, %1005, %944 : vector<2x32xi1>, vector<2x32xf32>
    %1009 = arith.select %8, %1003, %945 : vector<2x32xi1>, vector<2x32xf32>
    %1010 = arith.select %24, %1005, %946 : vector<2x32xi1>, vector<2x32xf32>
    %1011 = tpu.concatenate %1006, %1008 in 1 : vector<2x32xf32>, vector<2x32xf32> -> vector<2x64xf32>
    %1012 = arith.truncf %1011 : vector<2x64xf32> to vector<2x64xbf16>
    %cst_146 = arith.constant dense<0.000000e+00> : vector<2x256xf32>
    %1013 = tpu.matmul %1012, %625, %cst_146 {dimension_numbers = #tpu.dot_dimension_numbers<[1], [0], [0], [1], [0, 0, 1, 1], [], []>} : vector<2x64xbf16>, vector<64x256xbf16>, vector<2x256xf32> -> vector<2x256xf32>
    %1014 = vector.extract_strided_slice %619 {offsets = [0, 0], sizes = [2, 128], strides = [1, 1]} : vector<2x256xf32> to vector<2x128xf32>
    %1015 = vector.extract_strided_slice %1013 {offsets = [0, 0], sizes = [2, 128], strides = [1, 1]} : vector<2x256xf32> to vector<2x128xf32>
    %1016 = arith.addf %1014, %1015 : vector<2x128xf32>
    %1017 = vector.extract_strided_slice %594 {offsets = [0, 128], sizes = [2, 128], strides = [1, 1]} : vector<2x256xf32> to vector<2x128xf32>
    %1018 = vector.extract_strided_slice %1013 {offsets = [0, 128], sizes = [2, 128], strides = [1, 1]} : vector<2x256xf32> to vector<2x128xf32>
    %1019 = arith.addf %1017, %1018 : vector<2x128xf32>
    %1020 = vector.extract_strided_slice %1016 {offsets = [0, 0], sizes = [2, 32], strides = [1, 1]} : vector<2x128xf32> to vector<2x32xf32>
    %1021 = arith.negf %1020 : vector<2x32xf32>
    %1022 = math.exp %1021 : vector<2x32xf32>
    %cst_147 = arith.constant 1.000000e+00 : f32
    %1023 = vector.broadcast %cst_147 : f32 to vector<2x32xf32>
    %1024 = arith.addf %1023, %1022 : vector<2x32xf32>
    %1025 = arith.divf %1023, %1024 : vector<2x32xf32>
    %1026 = vector.extract_strided_slice %1016 {offsets = [0, 32], sizes = [2, 32], strides = [1, 1]} : vector<2x128xf32> to vector<2x32xf32>
    %1027 = arith.negf %1026 : vector<2x32xf32>
    %1028 = math.exp %1027 : vector<2x32xf32>
    %cst_148 = arith.constant 1.000000e+00 : f32
    %1029 = vector.broadcast %cst_148 : f32 to vector<2x32xf32>
    %1030 = arith.addf %1029, %1028 : vector<2x32xf32>
    %1031 = arith.divf %1029, %1030 : vector<2x32xf32>
    %1032 = vector.extract_strided_slice %1016 {offsets = [0, 64], sizes = [2, 32], strides = [1, 1]} : vector<2x128xf32> to vector<2x32xf32>
    %1033 = math.tanh %1032 : vector<2x32xf32>
    %1034 = vector.extract_strided_slice %1016 {offsets = [0, 96], sizes = [2, 32], strides = [1, 1]} : vector<2x128xf32> to vector<2x32xf32>
    %1035 = arith.negf %1034 : vector<2x32xf32>
    %1036 = math.exp %1035 : vector<2x32xf32>
    %cst_149 = arith.constant 1.000000e+00 : f32
    %1037 = vector.broadcast %cst_149 : f32 to vector<2x32xf32>
    %1038 = arith.addf %1037, %1036 : vector<2x32xf32>
    %1039 = arith.divf %1037, %1038 : vector<2x32xf32>
    %1040 = arith.mulf %1031, %1007 : vector<2x32xf32>
    %1041 = arith.mulf %1025, %1033 : vector<2x32xf32>
    %1042 = arith.addf %1040, %1041 : vector<2x32xf32>
    %1043 = math.tanh %1042 : vector<2x32xf32>
    %1044 = arith.mulf %1039, %1043 : vector<2x32xf32>
    %1045 = vector.extract_strided_slice %1019 {offsets = [0, 0], sizes = [2, 32], strides = [1, 1]} : vector<2x128xf32> to vector<2x32xf32>
    %1046 = arith.negf %1045 : vector<2x32xf32>
    %1047 = math.exp %1046 : vector<2x32xf32>
    %cst_150 = arith.constant 1.000000e+00 : f32
    %1048 = vector.broadcast %cst_150 : f32 to vector<2x32xf32>
    %1049 = arith.addf %1048, %1047 : vector<2x32xf32>
    %1050 = arith.divf %1048, %1049 : vector<2x32xf32>
    %1051 = vector.extract_strided_slice %1019 {offsets = [0, 32], sizes = [2, 32], strides = [1, 1]} : vector<2x128xf32> to vector<2x32xf32>
    %1052 = arith.negf %1051 : vector<2x32xf32>
    %1053 = math.exp %1052 : vector<2x32xf32>
    %cst_151 = arith.constant 1.000000e+00 : f32
    %1054 = vector.broadcast %cst_151 : f32 to vector<2x32xf32>
    %1055 = arith.addf %1054, %1053 : vector<2x32xf32>
    %1056 = arith.divf %1054, %1055 : vector<2x32xf32>
    %1057 = vector.extract_strided_slice %1019 {offsets = [0, 64], sizes = [2, 32], strides = [1, 1]} : vector<2x128xf32> to vector<2x32xf32>
    %1058 = math.tanh %1057 : vector<2x32xf32>
    %1059 = vector.extract_strided_slice %1019 {offsets = [0, 96], sizes = [2, 32], strides = [1, 1]} : vector<2x128xf32> to vector<2x32xf32>
    %1060 = arith.negf %1059 : vector<2x32xf32>
    %1061 = math.exp %1060 : vector<2x32xf32>
    %cst_152 = arith.constant 1.000000e+00 : f32
    %1062 = vector.broadcast %cst_152 : f32 to vector<2x32xf32>
    %1063 = arith.addf %1062, %1061 : vector<2x32xf32>
    %1064 = arith.divf %1062, %1063 : vector<2x32xf32>
    %1065 = arith.mulf %1056, %1009 : vector<2x32xf32>
    %1066 = arith.mulf %1050, %1058 : vector<2x32xf32>
    %1067 = arith.addf %1065, %1066 : vector<2x32xf32>
    %1068 = math.tanh %1067 : vector<2x32xf32>
    %1069 = arith.mulf %1064, %1068 : vector<2x32xf32>
    %1070 = arith.select %16, %1044, %1006 : vector<2x32xi1>, vector<2x32xf32>
    %1071 = arith.select %16, %1042, %1007 : vector<2x32xi1>, vector<2x32xf32>
    %1072 = arith.select %6, %1069, %1008 : vector<2x32xi1>, vector<2x32xf32>
    %1073 = arith.select %6, %1067, %1009 : vector<2x32xi1>, vector<2x32xf32>
    %1074 = arith.select %22, %1069, %1010 : vector<2x32xi1>, vector<2x32xf32>
    %1075 = tpu.concatenate %1070, %1072 in 1 : vector<2x32xf32>, vector<2x32xf32> -> vector<2x64xf32>
    %1076 = arith.truncf %1075 : vector<2x64xf32> to vector<2x64xbf16>
    %cst_153 = arith.constant dense<0.000000e+00> : vector<2x256xf32>
    %1077 = tpu.matmul %1076, %625, %cst_153 {dimension_numbers = #tpu.dot_dimension_numbers<[1], [0], [0], [1], [0, 0, 1, 1], [], []>} : vector<2x64xbf16>, vector<64x256xbf16>, vector<2x256xf32> -> vector<2x256xf32>
    %1078 = vector.extract_strided_slice %624 {offsets = [0, 0], sizes = [2, 128], strides = [1, 1]} : vector<2x256xf32> to vector<2x128xf32>
    %1079 = vector.extract_strided_slice %1077 {offsets = [0, 0], sizes = [2, 128], strides = [1, 1]} : vector<2x256xf32> to vector<2x128xf32>
    %1080 = arith.addf %1078, %1079 : vector<2x128xf32>
    %1081 = vector.extract_strided_slice %589 {offsets = [0, 128], sizes = [2, 128], strides = [1, 1]} : vector<2x256xf32> to vector<2x128xf32>
    %1082 = vector.extract_strided_slice %1077 {offsets = [0, 128], sizes = [2, 128], strides = [1, 1]} : vector<2x256xf32> to vector<2x128xf32>
    %1083 = arith.addf %1081, %1082 : vector<2x128xf32>
    %1084 = vector.extract_strided_slice %1080 {offsets = [0, 0], sizes = [2, 32], strides = [1, 1]} : vector<2x128xf32> to vector<2x32xf32>
    %1085 = arith.negf %1084 : vector<2x32xf32>
    %1086 = math.exp %1085 : vector<2x32xf32>
    %cst_154 = arith.constant 1.000000e+00 : f32
    %1087 = vector.broadcast %cst_154 : f32 to vector<2x32xf32>
    %1088 = arith.addf %1087, %1086 : vector<2x32xf32>
    %1089 = arith.divf %1087, %1088 : vector<2x32xf32>
    %1090 = vector.extract_strided_slice %1080 {offsets = [0, 32], sizes = [2, 32], strides = [1, 1]} : vector<2x128xf32> to vector<2x32xf32>
    %1091 = arith.negf %1090 : vector<2x32xf32>
    %1092 = math.exp %1091 : vector<2x32xf32>
    %cst_155 = arith.constant 1.000000e+00 : f32
    %1093 = vector.broadcast %cst_155 : f32 to vector<2x32xf32>
    %1094 = arith.addf %1093, %1092 : vector<2x32xf32>
    %1095 = arith.divf %1093, %1094 : vector<2x32xf32>
    %1096 = vector.extract_strided_slice %1080 {offsets = [0, 64], sizes = [2, 32], strides = [1, 1]} : vector<2x128xf32> to vector<2x32xf32>
    %1097 = math.tanh %1096 : vector<2x32xf32>
    %1098 = vector.extract_strided_slice %1080 {offsets = [0, 96], sizes = [2, 32], strides = [1, 1]} : vector<2x128xf32> to vector<2x32xf32>
    %1099 = arith.negf %1098 : vector<2x32xf32>
    %1100 = math.exp %1099 : vector<2x32xf32>
    %cst_156 = arith.constant 1.000000e+00 : f32
    %1101 = vector.broadcast %cst_156 : f32 to vector<2x32xf32>
    %1102 = arith.addf %1101, %1100 : vector<2x32xf32>
    %1103 = arith.divf %1101, %1102 : vector<2x32xf32>
    %1104 = arith.mulf %1095, %1071 : vector<2x32xf32>
    %1105 = arith.mulf %1089, %1097 : vector<2x32xf32>
    %1106 = arith.addf %1104, %1105 : vector<2x32xf32>
    %1107 = math.tanh %1106 : vector<2x32xf32>
    %1108 = arith.mulf %1103, %1107 : vector<2x32xf32>
    %1109 = vector.extract_strided_slice %1083 {offsets = [0, 0], sizes = [2, 32], strides = [1, 1]} : vector<2x128xf32> to vector<2x32xf32>
    %1110 = arith.negf %1109 : vector<2x32xf32>
    %1111 = math.exp %1110 : vector<2x32xf32>
    %cst_157 = arith.constant 1.000000e+00 : f32
    %1112 = vector.broadcast %cst_157 : f32 to vector<2x32xf32>
    %1113 = arith.addf %1112, %1111 : vector<2x32xf32>
    %1114 = arith.divf %1112, %1113 : vector<2x32xf32>
    %1115 = vector.extract_strided_slice %1083 {offsets = [0, 32], sizes = [2, 32], strides = [1, 1]} : vector<2x128xf32> to vector<2x32xf32>
    %1116 = arith.negf %1115 : vector<2x32xf32>
    %1117 = math.exp %1116 : vector<2x32xf32>
    %cst_158 = arith.constant 1.000000e+00 : f32
    %1118 = vector.broadcast %cst_158 : f32 to vector<2x32xf32>
    %1119 = arith.addf %1118, %1117 : vector<2x32xf32>
    %1120 = arith.divf %1118, %1119 : vector<2x32xf32>
    %1121 = vector.extract_strided_slice %1083 {offsets = [0, 64], sizes = [2, 32], strides = [1, 1]} : vector<2x128xf32> to vector<2x32xf32>
    %1122 = math.tanh %1121 : vector<2x32xf32>
    %1123 = vector.extract_strided_slice %1083 {offsets = [0, 96], sizes = [2, 32], strides = [1, 1]} : vector<2x128xf32> to vector<2x32xf32>
    %1124 = arith.negf %1123 : vector<2x32xf32>
    %1125 = math.exp %1124 : vector<2x32xf32>
    %cst_159 = arith.constant 1.000000e+00 : f32
    %1126 = vector.broadcast %cst_159 : f32 to vector<2x32xf32>
    %1127 = arith.addf %1126, %1125 : vector<2x32xf32>
    %1128 = arith.divf %1126, %1127 : vector<2x32xf32>
    %1129 = arith.mulf %1120, %1073 : vector<2x32xf32>
    %1130 = arith.mulf %1114, %1122 : vector<2x32xf32>
    %1131 = arith.addf %1129, %1130 : vector<2x32xf32>
    %1132 = math.tanh %1131 : vector<2x32xf32>
    %1133 = arith.mulf %1128, %1132 : vector<2x32xf32>
    %1134 = arith.select %18, %1108, %1070 : vector<2x32xi1>, vector<2x32xf32>
    %1135 = arith.select %20, %1133, %1074 : vector<2x32xi1>, vector<2x32xf32>
    %1136 = tpu.concatenate %1134, %1135 in 1 : vector<2x32xf32>, vector<2x32xf32> -> vector<2x64xf32>
    %c0_160 = arith.constant 0 : index
    %c0_161 = arith.constant 0 : index
    %1137 = vector.load %arg8[%c0_160, %c0_161] : memref<64x32xf32, #tpu.memory_space<vmem>>, vector<64x32xf32>
    %cst_162 = arith.constant dense<0.000000e+00> : vector<2x32xf32>
    %1138 = tpu.matmul %1136, %1137, %cst_162 {dimension_numbers = #tpu.dot_dimension_numbers<[1], [0], [0], [1], [0, 0, 1, 1], [], []>} : vector<2x64xf32>, vector<64x32xf32>, vector<2x32xf32> -> vector<2x32xf32>
    %c0_163 = arith.constant 0 : index
    %c0_164 = arith.constant 0 : index
    %1139 = vector.load %arg9[%c0_163, %c0_164] : memref<1x32xf32, #tpu.memory_space<vmem>>, vector<1x32xf32>
    %1140 = vector.broadcast %1139 : vector<1x32xf32> to vector<2x32xf32>
    %1141 = arith.addf %1138, %1140 : vector<2x32xf32>
    %cst_165 = arith.constant 0.000000e+00 : f32
    %1142 = vector.broadcast %cst_165 : f32 to vector<2x32xf32>
    %1143 = arith.maximumf %1141, %1142 : vector<2x32xf32>
    %c0_166 = arith.constant 0 : index
    %c0_167 = arith.constant 0 : index
    %1144 = vector.load %arg10[%c0_166, %c0_167] : memref<32x4xf32, #tpu.memory_space<vmem>>, vector<32x4xf32>
    %cst_168 = arith.constant dense<0.000000e+00> : vector<2x4xf32>
    %1145 = tpu.matmul %1143, %1144, %cst_168 {dimension_numbers = #tpu.dot_dimension_numbers<[1], [0], [0], [1], [0, 0, 1, 1], [], []>} : vector<2x32xf32>, vector<32x4xf32>, vector<2x4xf32> -> vector<2x4xf32>
    %c0_169 = arith.constant 0 : index
    %c0_170 = arith.constant 0 : index
    %1146 = vector.load %arg11[%c0_169, %c0_170] : memref<1x4xf32, #tpu.memory_space<vmem>>, vector<1x4xf32>
    %1147 = vector.broadcast %1146 : vector<1x4xf32> to vector<2x4xf32>
    %1148 = arith.addf %1145, %1147 : vector<2x4xf32>
    %c0_171 = arith.constant 0 : index
    %c0_172 = arith.constant 0 : index
    %1149 = vector.load %arg12[%c0_171, %c0_172] : memref<2x64xf32, #tpu.memory_space<vmem>>, vector<2x64xf32>
    tpu.vector_store %arg12[%c0_171, %c0_172], %1136 {strides = array<i32>} : memref<2x64xf32, #tpu.memory_space<vmem>>, vector<2x64xf32>,
    %c0_173 = arith.constant 0 : index
    %c0_174 = arith.constant 0 : index
    %1150 = vector.load %arg13[%c0_173, %c0_174] : memref<2x4xf32, #tpu.memory_space<vmem>>, vector<2x4xf32>
    tpu.vector_store %arg13[%c0_173, %c0_174], %1148 {strides = array<i32>} : memref<2x4xf32, #tpu.memory_space<vmem>>, vector<2x4xf32>,
    return
  }
}

</mosaic_0001>

<llo_original>
// kernel: net_forward.1
$region0: #{net_forward.1}
  #allocation0 [shape = 'u32[]', space=smem, size = 0x4, offset = 0x4, fixed_abs, tag = 'smem constant byte address 0x4 - core index']
  #allocation1 [shape = 'u32[72,128]{1,0:T(1,128)}', space=vmem, size = 0x9000, scoped, tag = 'internal scratch']
  %s0 = inlined_call_operand.vmem [shape: bf16[16,16], index: 0, kind: input, shape index: {}]
  %s1 = inlined_call_operand.vmem [shape: s32[2,1], index: 1, kind: input, shape index: {}]
  %s2 = inlined_call_operand.vmem [shape: bf16[16,256], index: 2, kind: input, shape index: {}]
  %s3 = inlined_call_operand.vmem [shape: bf16[64,256], index: 3, kind: input, shape index: {}]
  %s4 = inlined_call_operand.vmem [shape: f32[1,256], index: 4, kind: input, shape index: {}]
  %s5 = inlined_call_operand.vmem [shape: bf16[64,256], index: 5, kind: input, shape index: {}]
  %s6 = inlined_call_operand.vmem [shape: bf16[64,256], index: 6, kind: input, shape index: {}]
  %s7 = inlined_call_operand.vmem [shape: f32[1,256], index: 7, kind: input, shape index: {}]
  %s8 = inlined_call_operand.vmem [shape: f32[64,32], index: 8, kind: input, shape index: {}]
  %s9 = inlined_call_operand.vmem [shape: f32[1,32], index: 9, kind: input, shape index: {}]
  %s10 = inlined_call_operand.vmem [shape: f32[32,4], index: 10, kind: input, shape index: {}]
  %s11 = inlined_call_operand.vmem [shape: f32[1,4], index: 11, kind: input, shape index: {}]
  %s12 = inlined_call_operand.hbm [shape: f32[2,64], index: 12, kind: output, shape index: {0}]
  %s13 = inlined_call_operand.hbm [shape: f32[2,4], index: 13, kind: output, shape index: {1}]
  %14 = xla_tuple %s12, %s13
  %s15 = sld [smem:[#allocation0]]
  $region66: #{net_forward.1} parent=0
    _
  %s17 = ssub.s32 1, %s15
  %s18 = scalar_select 0, %s17, %s15
  $region1: #{net_forward.1} parent=0
    #allocation2 [shape = 'u8[1024]{0}', space=vmem, size = 0x400, scoped, tag = 'output window, operand 0, single buffered']
    #allocation3 [shape = 's32[1]{0}', space=sflag, size = 0x4, scoped, tag = 'scoped memory for net_forward.1']
    #allocation4 [shape = 'u8[1024]{0}', space=vmem, size = 0x400, scoped, tag = 'output window, operand 1, single buffered']
    #allocation5 [shape = 's32[1]{0}', space=sflag, size = 0x4, scoped, tag = 'scoped memory for net_forward.1']
    %19 = vsyncpa [#allocation3], 0
    %20 = vsyncpa [#allocation5], 0
    // Predicated region
    $region2: #{net_forward.1} parent=1 // pred_check
      _
    $region3: #{net_forward.1} parent=1 // pred_check_branch
      %22 = sbr.rel (0) target = $region5
    $region4: #{net_forward.1} parent=1 // pred_region
      _
    $region5: #{net_forward.1} parent=1 // pred_fallthru
      _
    // Predicated region
    $region6: #{net_forward.1} parent=1 // pred_check
      _
    $region7: #{net_forward.1} parent=1 // pred_check_branch
      %24 = sbr.rel (0) target = $region9
    $region8: #{net_forward.1} parent=1 // pred_region
      _
    $region9: #{net_forward.1} parent=1 // pred_fallthru
      _
    // Predicated region
    $region10: #{net_forward.1} parent=1 // pred_check
      _
    $region11: #{net_forward.1} parent=1 // pred_check_branch
      %26 = sbr.rel (0) target = $region13
    $region12: #{net_forward.1} parent=1 // pred_region
      _
    $region13: #{net_forward.1} parent=1 // pred_fallthru
      _
    // Predicated region
    $region14: #{net_forward.1} parent=1 // pred_check
      _
    $region15: #{net_forward.1} parent=1 // pred_check_branch
      %28 = sbr.rel (0) target = $region17
    $region16: #{net_forward.1} parent=1 // pred_region
      _
    $region17: #{net_forward.1} parent=1 // pred_fallthru
      _
    // Predicated region
    $region18: #{net_forward.1} parent=1 // pred_check
      _
    $region19: #{net_forward.1} parent=1 // pred_check_branch
      %30 = sbr.rel (0) target = $region21
    $region20: #{net_forward.1} parent=1 // pred_region
      _
    $region21: #{net_forward.1} parent=1 // pred_fallthru
      _
    // Predicated region
    $region22: #{net_forward.1} parent=1 // pred_check
      _
    $region23: #{net_forward.1} parent=1 // pred_check_branch
      %32 = sbr.rel (0) target = $region25
    $region24: #{net_forward.1} parent=1 // pred_region
      _
    $region25: #{net_forward.1} parent=1 // pred_fallthru
      _
    // Predicated region
    $region26: #{net_forward.1} parent=1 // pred_check
      _
    $region27: #{net_forward.1} parent=1 // pred_check_branch
      %34 = sbr.rel (0) target = $region29
    $region28: #{net_forward.1} parent=1 // pred_region
      _
    $region29: #{net_forward.1} parent=1 // pred_fallthru
      _
    // Predicated region
    $region30: #{net_forward.1} parent=1 // pred_check
      _
    $region31: #{net_forward.1} parent=1 // pred_check_branch
      %36 = sbr.rel (0) target = $region33
    $region32: #{net_forward.1} parent=1 // pred_region
      _
    $region33: #{net_forward.1} parent=1 // pred_fallthru
      _
    // Predicated region
    $region34: #{net_forward.1} parent=1 // pred_check
      _
    $region35: #{net_forward.1} parent=1 // pred_check_branch
      %38 = sbr.rel (0) target = $region37
    $region36: #{net_forward.1} parent=1 // pred_region
      _
    $region37: #{net_forward.1} parent=1 // pred_fallthru
      _
    // Predicated region
    $region38: #{net_forward.1} parent=1 // pred_check
      _
    $region39: #{net_forward.1} parent=1 // pred_check_branch
      %40 = sbr.rel (0) target = $region41
    $region40: #{net_forward.1} parent=1 // pred_region
      _
    $region41: #{net_forward.1} parent=1 // pred_fallthru
      _
    // Predicated region
    $region42: #{net_forward.1} parent=1 // pred_check
      _
    $region43: #{net_forward.1} parent=1 // pred_check_branch
      %42 = sbr.rel (0) target = $region45
    $region44: #{net_forward.1} parent=1 // pred_region
      _
    $region45: #{net_forward.1} parent=1 // pred_fallthru
      _
    // Predicated region
    $region46: #{net_forward.1} parent=1 // pred_check
      _
    $region47: #{net_forward.1} parent=1 // pred_check_branch
      %44 = sbr.rel (0) target = $region49
    $region48: #{net_forward.1} parent=1 // pred_region
      _
    $region49: #{net_forward.1} parent=1 // pred_fallthru
      _
    %v46 = vld [vmem:[%s1] sm:$0x3]
    %47 = vset.pattern.permute.xlu0 0
    %48 = vperm.xlu0 %47, %v46
    %v49 = vpop.permute.xlu0 %48
    %vm50 = vcmp.gt.s32.totalorder %v49, 0
    %vm51 = vcmp.gt.s32.totalorder %v49, 1
    %vm52 = vcmp.gt.s32.totalorder %v49, 2
    %vm53 = vcmp.gt.s32.totalorder %v49, 3
    %vm54 = vcmp.gt.s32.totalorder %v49, 4
    %vm55 = vcmp.gt.s32.totalorder %v49, 5
    %vm56 = vcmp.gt.s32.totalorder %v49, 6
    %vm57 = vcmp.gt.s32.totalorder %v49, 7
    %vm58 = vcmp.eq.s32.totalorder %v49, 1
    %vm59 = vcmp.eq.s32.totalorder %v49, 2
    %vm60 = vcmp.eq.s32.totalorder %v49, 3
    %vm61 = vcmp.eq.s32.totalorder %v49, 4
    %vm62 = vcmp.eq.s32.totalorder %v49, 5
    %vm63 = vcmp.eq.s32.totalorder %v49, 6
    %vm64 = vcmp.eq.s32.totalorder %v49, 7
    %vm65 = vcmp.eq.s32.totalorder %v49, 8
    %v66 = vld [vmem:[%s0] sm:$0xf]
    %v67 = vld [vmem:[%s0 + $0x4] sm:$0xf]
    %v68 = vld [vmem:[%s2] sm:$0xff]
    %v69 = vld [vmem:[%s2 + $0x8] sm:$0xff]
    %v70 = vld [vmem:[%s4] sm:$0x3]
    %v72 = vperm.slane %v70, 0
    %v73 = vperm.slane %v70, 1
    %v78 = vunpack.c.l.b16 %v66
    %v79 = vunpack.c.l.b16 %v67
    %v80 = vpack.c.b16 %v79, %v78
    %v83 = vunpack.c.l.b16 %v68
    %v84 = vunpack.c.h.b16 %v68
    %v85 = vunpack.c.l.b16 %v69
    %v86 = vunpack.c.h.b16 %v69
    %v87 = vpack.c.b16 %v85, %v83
    %v88 = vpack.c.b16 %v86, %v84
    %vm91 = vcmask 130048
    %v93 = vsel %vm91, %v80, 0
    %95 = vmatpush.bf16.msra.mxu0 0
    %96 = vmatpush.bf16.msra.mxu0 0
    %97 = vmatpush.bf16.msra.mxu0 0
    %98 = vmatpush.bf16.msra.mxu0 0
    %99 = vmatpush.bf16.msra.mxu0 0
    %100 = vmatpush.bf16.msra.mxu0 0
    %101 = vmatpush.bf16.msra.mxu0 0
    %102 = vmatpush.bf16.msra.mxu0 %v87
    %103 = vmatmul.bf16.gmra.mxu0 %v93
    %v104 = vpop.f32.mrf.mxu0
    %v105 = vadd.f32 %v72, %v104
    %v106 = vpop.f32.mrf.mxu0
    %v107 = vadd.f32 %v72, %v106
    %108 = vdwg.mxu0
    %109 = vmatpush.bf16.msra.mxu0 0
    %110 = vmatpush.bf16.msra.mxu0 0
    %111 = vmatpush.bf16.msra.mxu0 0
    %112 = vmatpush.bf16.msra.mxu0 0
    %113 = vmatpush.bf16.msra.mxu0 0
    %114 = vmatpush.bf16.msra.mxu0 0
    %115 = vmatpush.bf16.msra.mxu0 0
    %116 = vmatpush.bf16.msra.mxu0 %v88
    %117 = vmatmul.bf16.gmra.mxu0 %v93
    %v118 = vpop.f32.mrf.mxu0
    %v119 = vadd.f32 %v73, %v118
    %v120 = vpop.f32.mrf.mxu0
    %v121 = vadd.f32 %v73, %v120
    %122 = vdwg.mxu0
    %v123 = vld [vmem:[%s3] sm:$0xff]
    %v124 = vld [vmem:[%s3 + $0x8] sm:$0xff]
    %v125 = vld [vmem:[%s3 + $0x10] sm:$0xff]
    %v126 = vld [vmem:[%s3 + $0x18] sm:$0xff]
    %v127 = vld [vmem:[%s3 + $0x20] sm:$0xff]
    %v128 = vld [vmem:[%s3 + $0x28] sm:$0xff]
    %v129 = vld [vmem:[%s3 + $0x30] sm:$0xff]
    %v130 = vld [vmem:[%s3 + $0x38] sm:$0xff]
    %v131 = vpack.c.bf16 0.0, 0.0
    %v140 = vunpack.c.l.b16 %v123
    %v141 = vunpack.c.h.b16 %v123
    %v142 = vunpack.c.l.b16 %v124
    %v143 = vunpack.c.h.b16 %v124
    %v144 = vunpack.c.l.b16 %v125
    %v145 = vunpack.c.h.b16 %v125
    %v146 = vunpack.c.l.b16 %v126
    %v147 = vunpack.c.h.b16 %v126
    %v148 = vunpack.c.l.b16 %v127
    %v149 = vunpack.c.h.b16 %v127
    %v150 = vunpack.c.l.b16 %v128
    %v151 = vunpack.c.h.b16 %v128
    %v152 = vunpack.c.l.b16 %v129
    %v153 = vunpack.c.h.b16 %v129
    %v154 = vunpack.c.l.b16 %v130
    %v155 = vunpack.c.h.b16 %v130
    %v156 = vpack.c.b16 %v142, %v140
    %v157 = vpack.c.b16 %v143, %v141
    %v158 = vpack.c.b16 %v146, %v144
    %v159 = vpack.c.b16 %v147, %v145
    %v160 = vpack.c.b16 %v150, %v148
    %v161 = vpack.c.b16 %v151, %v149
    %v162 = vpack.c.b16 %v154, %v152
    %v163 = vpack.c.b16 %v155, %v153
    %vm172 = vcmask 523264
    %v174 = vsel %vm172, %v131, 0
    %176 = vmatpush.bf16.msra.mxu0 0
    %177 = vmatpush.bf16.msra.mxu0 0
    %178 = vmatpush.bf16.msra.mxu0 0
    %179 = vmatpush.bf16.msra.mxu0 0
    %180 = vmatpush.bf16.msra.mxu0 %v162
    %181 = vmatpush.bf16.msra.mxu0 %v160
    %182 = vmatpush.bf16.msra.mxu0 %v158
    %183 = vmatpush.bf16.msra.mxu0 %v156
    %184 = vmatmul.bf16.gmra.mxu0 %v174
    %v185 = vpop.f32.mrf.mxu0
    %v186 = vadd.f32 0.0, %v185
    %v187 = vpop.f32.mrf.mxu0
    %188 = vdwg.mxu0
    %189 = vmatpush.bf16.msra.mxu0 0
    %190 = vmatpush.bf16.msra.mxu0 0
    %191 = vmatpush.bf16.msra.mxu0 0
    %192 = vmatpush.bf16.msra.mxu0 0
    %193 = vmatpush.bf16.msra.mxu0 %v163
    %194 = vmatpush.bf16.msra.mxu0 %v161
    %195 = vmatpush.bf16.msra.mxu0 %v159
    %196 = vmatpush.bf16.msra.mxu0 %v157
    %197 = vmatmul.bf16.gmra.mxu0 %v174
    %v198 = vpop.f32.mrf.mxu0
    %v199 = vadd.f32 0.0, %v198
    %v200 = vpop.f32.mrf.mxu0
    %201 = vdwg.mxu0
    %v202 = vadd.f32 %v105, %v186
    %v204 = vrot.slane %v199, 2
    %v206 = vadd.f32 %v121, %v204
    %v207 = vxor.u32 %v202, 2147483648
    %v208 = vmul.f32 %v207, 1.442695
    %v209 = vpow.pop %v208
    %v210 = vadd.f32 %v209, 1.0
    %v211 = vrcp.pop %v210
    %v212 = vmul.f32 %v210, %v211
    %v213 = vsub.f32 1.0, %v212
    %v214 = vmul.f32 %v211, %v213
    %v215 = vadd.f32 %v211, %v214
    %vm216 = vweird.f32 %v210
    %vm217 = vweird.f32 %v211
    %vm218 = vmor %vm216, %vm217
    %v219 = vsel %vm218, %v211, %v215
    %v220 = vand.u32 2147483647, %v210
    %vm221 = vcmp.eq.f32.partialorder %v220, 8.507059e+37
    %v222 = vand.u32 %v210, 2147483648
    %v223 = vor.u32 1.1754944e-38, %v222
    %v224 = vsel %vm221, %v223, %v219
    %v225 = vmul.f32 1.0, %v224
    %v226 = vtanh.pop %v202
    %v227 = vmul.f32 %v225, 0.0
    %229 = vrot.lane.b32.xlu0 %v226, 64
    %v230 = vpop.permute.xlu0 %229
    %v232 = vmul.f32 %v225, %v230
    %234 = vrot.lane.b32.xlu0 %v232, 32
    %v235 = vpop.permute.xlu0 %234
    %v237 = vadd.f32 %v227, %v235
    %v238 = vtanh.pop %v237
    %240 = vrot.lane.b32.xlu0 %v238, 64
    %v241 = vpop.permute.xlu0 %240
    %v243 = vmul.f32 %v225, %v241
    %v244 = vxor.u32 %v206, 2147483648
    %v245 = vmul.f32 %v244, 1.442695
    %v246 = vpow.pop %v245
    %v247 = vadd.f32 %v246, 1.0
    %v248 = vrcp.pop %v247
    %v249 = vmul.f32 %v247, %v248
    %v250 = vsub.f32 1.0, %v249
    %v251 = vmul.f32 %v248, %v250
    %v252 = vadd.f32 %v248, %v251
    %vm253 = vweird.f32 %v247
    %vm254 = vweird.f32 %v248
    %vm255 = vmor %vm253, %vm254
    %v256 = vsel %vm255, %v248, %v252
    %v257 = vand.u32 2147483647, %v247
    %vm258 = vcmp.eq.f32.partialorder %v257, 8.507059e+37
    %v259 = vand.u32 %v247, 2147483648
    %v260 = vor.u32 1.1754944e-38, %v259
    %v261 = vsel %vm258, %v260, %v256
    %v262 = vmul.f32 1.0, %v261
    %v263 = vtanh.pop %v206
    %v264 = vmul.f32 %v262, 0.0
    %266 = vrot.lane.b32.xlu0 %v263, 64
    %v267 = vpop.permute.xlu0 %266
    %v269 = vmul.f32 %v262, %v267
    %271 = vrot.lane.b32.xlu0 %v269, 32
    %v272 = vpop.permute.xlu0 %271
    %v274 = vadd.f32 %v264, %v272
    %v275 = vtanh.pop %v274
    %277 = vrot.lane.b32.xlu0 %v275, 64
    %v278 = vpop.permute.xlu0 %277
    %v280 = vmul.f32 %v262, %v278
    %v281 = vsel %vm50, %v243, 0.0
    %v282 = vsel %vm50, %v237, 0.0
    %v284 = vrot.slane %v280, 6
    %285 = vrot.lane.b32.xlu0 %v284, 32
    %v286 = vpop.permute.xlu0 %285
    %v288 = vsel %vm57, %v286, 0.0
    %v290 = vrot.slane %v274, 6
    %291 = vrot.lane.b32.xlu0 %v290, 96
    %v292 = vpop.permute.xlu0 %291
    %v294 = vsel %vm57, %v292, 0.0
    %296 = vrot.lane.b32.xlu0 %v281, 32
    %v297 = vpop.permute.xlu0 %296
    %300 = vrot.lane.b32.xlu0 %v288, 32
    %v301 = vpop.permute.xlu0 %300
    %vm303 = vcmask 261120
    %v304 = vsel %vm303, %v297, %v301
    %v305 = vpack.c.bf16 %v304, %v304
    %v307 = vsel %vm172, %v305, 0
    %309 = vmatpush.bf16.msra.mxu0 0
    %310 = vmatpush.bf16.msra.mxu0 0
    %311 = vmatpush.bf16.msra.mxu0 0
    %312 = vmatpush.bf16.msra.mxu0 0
    %313 = vmatpush.bf16.msra.mxu0 %v162
    %314 = vmatpush.bf16.msra.mxu0 %v160
    %315 = vmatpush.bf16.msra.mxu0 %v158
    %316 = vmatpush.bf16.msra.mxu0 %v156
    %317 = vmatmul.bf16.gmra.mxu0 %v307
    %v318 = vpop.f32.mrf.mxu0
    %v319 = vadd.f32 0.0, %v318
    %v320 = vpop.f32.mrf.mxu0
    %321 = vdwg.mxu0
    %322 = vmatpush.bf16.msra.mxu0 0
    %323 = vmatpush.bf16.msra.mxu0 0
    %324 = vmatpush.bf16.msra.mxu0 0
    %325 = vmatpush.bf16.msra.mxu0 0
    %326 = vmatpush.bf16.msra.mxu0 %v163
    %327 = vmatpush.bf16.msra.mxu0 %v161
    %328 = vmatpush.bf16.msra.mxu0 %v159
    %329 = vmatpush.bf16.msra.mxu0 %v157
    %330 = vmatmul.bf16.gmra.mxu0 %v307
    %v331 = vpop.f32.mrf.mxu0
    %v332 = vadd.f32 0.0, %v331
    %v333 = vpop.f32.mrf.mxu0
    %334 = vdwg.mxu0
    %v336 = vrot.slane %v319, 6
    %v338 = vadd.f32 %v105, %v336
    %v340 = vrot.slane %v332, 4
    %v342 = vadd.f32 %v121, %v340
    %v343 = vxor.u32 %v338, 2147483648
    %v344 = vmul.f32 %v343, 1.442695
    %v345 = vpow.pop %v344
    %v346 = vadd.f32 %v345, 1.0
    %v347 = vrcp.pop %v346
    %v348 = vmul.f32 %v346, %v347
    %v349 = vsub.f32 1.0, %v348
    %v350 = vmul.f32 %v347, %v349
    %v351 = vadd.f32 %v347, %v350
    %vm352 = vweird.f32 %v346
    %vm353 = vweird.f32 %v347
    %vm354 = vmor %vm352, %vm353
    %v355 = vsel %vm354, %v347, %v351
    %v356 = vand.u32 2147483647, %v346
    %vm357 = vcmp.eq.f32.partialorder %v356, 8.507059e+37
    %v358 = vand.u32 %v346, 2147483648
    %v359 = vor.u32 1.1754944e-38, %v358
    %v360 = vsel %vm357, %v359, %v355
    %v361 = vmul.f32 1.0, %v360
    %v362 = vtanh.pop %v338
    %v364 = vrot.slane %v282, 6
    %v366 = vmul.f32 %v361, %v364
    %368 = vrot.lane.b32.xlu0 %v362, 64
    %v369 = vpop.permute.xlu0 %368
    %v371 = vmul.f32 %v361, %v369
    %373 = vrot.lane.b32.xlu0 %v371, 32
    %v374 = vpop.permute.xlu0 %373
    %v376 = vadd.f32 %v366, %v374
    %v377 = vtanh.pop %v376
    %379 = vrot.lane.b32.xlu0 %v377, 64
    %v380 = vpop.permute.xlu0 %379
    %v382 = vmul.f32 %v361, %v380
    %v383 = vxor.u32 %v342, 2147483648
    %v384 = vmul.f32 %v383, 1.442695
    %v385 = vpow.pop %v384
    %v386 = vadd.f32 %v385, 1.0
    %v387 = vrcp.pop %v386
    %v388 = vmul.f32 %v386, %v387
    %v389 = vsub.f32 1.0, %v388
    %v390 = vmul.f32 %v387, %v389
    %v391 = vadd.f32 %v387, %v390
    %vm392 = vweird.f32 %v386
    %vm393 = vweird.f32 %v387
    %vm394 = vmor %vm392, %vm393
    %v395 = vsel %vm394, %v387, %v391
    %v396 = vand.u32 2147483647, %v386
    %vm397 = vcmp.eq.f32.partialorder %v396, 8.507059e+37
    %v398 = vand.u32 %v386, 2147483648
    %v399 = vor.u32 1.1754944e-38, %v398
    %v400 = vsel %vm397, %v399, %v395
    %v401 = vmul.f32 1.0, %v400
    %v402 = vtanh.pop %v342
    %v404 = vrot.slane %v294, 4
    %405 = vrot.lane.b32.xlu0 %v404, 32
    %v406 = vpop.permute.xlu0 %405
    %v408 = vmul.f32 %v401, %v406
    %410 = vrot.lane.b32.xlu0 %v402, 64
    %v411 = vpop.permute.xlu0 %410
    %v413 = vmul.f32 %v401, %v411
    %415 = vrot.lane.b32.xlu0 %v413, 32
    %v416 = vpop.permute.xlu0 %415
    %v418 = vadd.f32 %v408, %v416
    %v419 = vtanh.pop %v418
    %421 = vrot.lane.b32.xlu0 %v419, 64
    %v422 = vpop.permute.xlu0 %421
    %v424 = vmul.f32 %v401, %v422
    %v426 = vrot.slane %v382, 2
    %427 = vrot.lane.b32.xlu0 %v426, 32
    %v428 = vpop.permute.xlu0 %427
    %v430 = vsel %vm51, %v428, %v297
    %v432 = vrot.slane %v376, 2
    %433 = vrot.lane.b32.xlu0 %v432, 96
    %v434 = vpop.permute.xlu0 %433
    %436 = vrot.lane.b32.xlu0 %v282, 96
    %v437 = vpop.permute.xlu0 %436
    %v439 = vsel %vm51, %v434, %v437
    %v441 = vrot.slane %v424, 4
    %442 = vrot.lane.b32.xlu0 %v441, 32
    %v443 = vpop.permute.xlu0 %442
    %v445 = vsel %vm56, %v443, %v288
    %v447 = vrot.slane %v418, 4
    %448 = vrot.lane.b32.xlu0 %v447, 96
    %v449 = vpop.permute.xlu0 %448
    %v451 = vsel %vm56, %v449, %v294
    %v452 = vsel %vm51, %v428, 0.0
    %v453 = vsel %vm56, %v443, 0.0
    %455 = vrot.lane.b32.xlu0 %v445, 32
    %v456 = vpop.permute.xlu0 %455
    %v458 = vsel %vm303, %v430, %v456
    %v459 = vpack.c.bf16 %v458, %v458
    %v461 = vsel %vm172, %v459, 0
    %463 = vmatpush.bf16.msra.mxu0 0
    %464 = vmatpush.bf16.msra.mxu0 0
    %465 = vmatpush.bf16.msra.mxu0 0
    %466 = vmatpush.bf16.msra.mxu0 0
    %467 = vmatpush.bf16.msra.mxu0 %v162
    %468 = vmatpush.bf16.msra.mxu0 %v160
    %469 = vmatpush.bf16.msra.mxu0 %v158
    %470 = vmatpush.bf16.msra.mxu0 %v156
    %471 = vmatmul.bf16.gmra.mxu0 %v461
    %v472 = vpop.f32.mrf.mxu0
    %v473 = vadd.f32 0.0, %v472
    %v474 = vpop.f32.mrf.mxu0
    %475 = vdwg.mxu0
    %476 = vmatpush.bf16.msra.mxu0 0
    %477 = vmatpush.bf16.msra.mxu0 0
    %478 = vmatpush.bf16.msra.mxu0 0
    %479 = vmatpush.bf16.msra.mxu0 0
    %480 = vmatpush.bf16.msra.mxu0 %v163
    %481 = vmatpush.bf16.msra.mxu0 %v161
    %482 = vmatpush.bf16.msra.mxu0 %v159
    %483 = vmatpush.bf16.msra.mxu0 %v157
    %484 = vmatmul.bf16.gmra.mxu0 %v461
    %v485 = vpop.f32.mrf.mxu0
    %v486 = vadd.f32 0.0, %v485
    %v487 = vpop.f32.mrf.mxu0
    %488 = vdwg.mxu0
    %v490 = vrot.slane %v473, 4
    %v492 = vadd.f32 %v105, %v490
    %v494 = vrot.slane %v486, 6
    %v496 = vadd.f32 %v121, %v494
    %v497 = vxor.u32 %v492, 2147483648
    %v498 = vmul.f32 %v497, 1.442695
    %v499 = vpow.pop %v498
    %v500 = vadd.f32 %v499, 1.0
    %v501 = vrcp.pop %v500
    %v502 = vmul.f32 %v500, %v501
    %v503 = vsub.f32 1.0, %v502
    %v504 = vmul.f32 %v501, %v503
    %v505 = vadd.f32 %v501, %v504
    %vm506 = vweird.f32 %v500
    %vm507 = vweird.f32 %v501
    %vm508 = vmor %vm506, %vm507
    %v509 = vsel %vm508, %v501, %v505
    %v510 = vand.u32 2147483647, %v500
    %vm511 = vcmp.eq.f32.partialorder %v510, 8.507059e+37
    %v512 = vand.u32 %v500, 2147483648
    %v513 = vor.u32 1.1754944e-38, %v512
    %v514 = vsel %vm511, %v513, %v509
    %v515 = vmul.f32 1.0, %v514
    %v516 = vtanh.pop %v492
    %v518 = vrot.slane %v439, 4
    %519 = vrot.lane.b32.xlu0 %v518, 32
    %v520 = vpop.permute.xlu0 %519
    %v522 = vmul.f32 %v515, %v520
    %524 = vrot.lane.b32.xlu0 %v516, 64
    %v525 = vpop.permute.xlu0 %524
    %v527 = vmul.f32 %v515, %v525
    %529 = vrot.lane.b32.xlu0 %v527, 32
    %v530 = vpop.permute.xlu0 %529
    %v532 = vadd.f32 %v522, %v530
    %v533 = vtanh.pop %v532
    %535 = vrot.lane.b32.xlu0 %v533, 64
    %v536 = vpop.permute.xlu0 %535
    %v538 = vmul.f32 %v515, %v536
    %v539 = vxor.u32 %v496, 2147483648
    %v540 = vmul.f32 %v539, 1.442695
    %v541 = vpow.pop %v540
    %v542 = vadd.f32 %v541, 1.0
    %v543 = vrcp.pop %v542
    %v544 = vmul.f32 %v542, %v543
    %v545 = vsub.f32 1.0, %v544
    %v546 = vmul.f32 %v543, %v545
    %v547 = vadd.f32 %v543, %v546
    %vm548 = vweird.f32 %v542
    %vm549 = vweird.f32 %v543
    %vm550 = vmor %vm548, %vm549
    %v551 = vsel %vm550, %v543, %v547
    %v552 = vand.u32 2147483647, %v542
    %vm553 = vcmp.eq.f32.partialorder %v552, 8.507059e+37
    %v554 = vand.u32 %v542, 2147483648
    %v555 = vor.u32 1.1754944e-38, %v554
    %v556 = vsel %vm553, %v555, %v551
    %v557 = vmul.f32 1.0, %v556
    %v558 = vtanh.pop %v496
    %v560 = vrot.slane %v451, 6
    %561 = vrot.lane.b32.xlu0 %v560, 32
    %v562 = vpop.permute.xlu0 %561
    %v564 = vmul.f32 %v557, %v562
    %566 = vrot.lane.b32.xlu0 %v558, 64
    %v567 = vpop.permute.xlu0 %566
    %v569 = vmul.f32 %v557, %v567
    %571 = vrot.lane.b32.xlu0 %v569, 32
    %v572 = vpop.permute.xlu0 %571
    %v574 = vadd.f32 %v564, %v572
    %v575 = vtanh.pop %v574
    %577 = vrot.lane.b32.xlu0 %v575, 64
    %v578 = vpop.permute.xlu0 %577
    %v580 = vmul.f32 %v557, %v578
    %v582 = vrot.slane %v538, 4
    %583 = vrot.lane.b32.xlu0 %v582, 32
    %v584 = vpop.permute.xlu0 %583
    %v586 = vsel %vm52, %v584, %v430
    %v588 = vrot.slane %v532, 4
    %589 = vrot.lane.b32.xlu0 %v588, 96
    %v590 = vpop.permute.xlu0 %589
    %v592 = vsel %vm52, %v590, %v439
    %v594 = vrot.slane %v580, 2
    %595 = vrot.lane.b32.xlu0 %v594, 32
    %v596 = vpop.permute.xlu0 %595
    %v598 = vsel %vm55, %v596, %v445
    %v600 = vrot.slane %v574, 2
    %601 = vrot.lane.b32.xlu0 %v600, 96
    %v602 = vpop.permute.xlu0 %601
    %v604 = vsel %vm55, %v602, %v451
    %v605 = vsel %vm52, %v584, 0.0
    %v606 = vsel %vm55, %v596, 0.0
    %608 = vrot.lane.b32.xlu0 %v598, 32
    %v609 = vpop.permute.xlu0 %608
    %v611 = vsel %vm303, %v586, %v609
    %v612 = vpack.c.bf16 %v611, %v611
    %v614 = vsel %vm172, %v612, 0
    %616 = vmatpush.bf16.msra.mxu0 0
    %617 = vmatpush.bf16.msra.mxu0 0
    %618 = vmatpush.bf16.msra.mxu0 0
    %619 = vmatpush.bf16.msra.mxu0 0
    %620 = vmatpush.bf16.msra.mxu0 %v162
    %621 = vmatpush.bf16.msra.mxu0 %v160
    %622 = vmatpush.bf16.msra.mxu0 %v158
    %623 = vmatpush.bf16.msra.mxu0 %v156
    %624 = vmatmul.bf16.gmra.mxu0 %v614
    %v625 = vpop.f32.mrf.mxu0
    %v626 = vadd.f32 0.0, %v625
    %v627 = vpop.f32.mrf.mxu0
    %628 = vdwg.mxu0
    %629 = vmatpush.bf16.msra.mxu0 0
    %630 = vmatpush.bf16.msra.mxu0 0
    %631 = vmatpush.bf16.msra.mxu0 0
    %632 = vmatpush.bf16.msra.mxu0 0
    %633 = vmatpush.bf16.msra.mxu0 %v163
    %634 = vmatpush.bf16.msra.mxu0 %v161
    %635 = vmatpush.bf16.msra.mxu0 %v159
    %636 = vmatpush.bf16.msra.mxu0 %v157
    %637 = vmatmul.bf16.gmra.mxu0 %v614
    %v638 = vpop.f32.mrf.mxu0
    %v639 = vadd.f32 0.0, %v638
    %v640 = vpop.f32.mrf.mxu0
    %641 = vdwg.mxu0
    %v643 = vrot.slane %v626, 2
    %v645 = vadd.f32 %v105, %v643
    %v646 = vadd.f32 %v121, %v639
    %v647 = vxor.u32 %v645, 2147483648
    %v648 = vmul.f32 %v647, 1.442695
    %v649 = vpow.pop %v648
    %v650 = vadd.f32 %v649, 1.0
    %v651 = vrcp.pop %v650
    %v652 = vmul.f32 %v650, %v651
    %v653 = vsub.f32 1.0, %v652
    %v654 = vmul.f32 %v651, %v653
    %v655 = vadd.f32 %v651, %v654
    %vm656 = vweird.f32 %v650
    %vm657 = vweird.f32 %v651
    %vm658 = vmor %vm656, %vm657
    %v659 = vsel %vm658, %v651, %v655
    %v660 = vand.u32 2147483647, %v650
    %vm661 = vcmp.eq.f32.partialorder %v660, 8.507059e+37
    %v662 = vand.u32 %v650, 2147483648
    %v663 = vor.u32 1.1754944e-38, %v662
    %v664 = vsel %vm661, %v663, %v659
    %v665 = vmul.f32 1.0, %v664
    %v666 = vtanh.pop %v645
    %v668 = vrot.slane %v592, 2
    %669 = vrot.lane.b32.xlu0 %v668, 32
    %v670 = vpop.permute.xlu0 %669
    %v672 = vmul.f32 %v665, %v670
    %674 = vrot.lane.b32.xlu0 %v666, 64
    %v675 = vpop.permute.xlu0 %674
    %v677 = vmul.f32 %v665, %v675
    %679 = vrot.lane.b32.xlu0 %v677, 32
    %v680 = vpop.permute.xlu0 %679
    %v682 = vadd.f32 %v672, %v680
    %v683 = vtanh.pop %v682
    %685 = vrot.lane.b32.xlu0 %v683, 64
    %v686 = vpop.permute.xlu0 %685
    %v688 = vmul.f32 %v665, %v686
    %v689 = vxor.u32 %v646, 2147483648
    %v690 = vmul.f32 %v689, 1.442695
    %v691 = vpow.pop %v690
    %v692 = vadd.f32 %v691, 1.0
    %v693 = vrcp.pop %v692
    %v694 = vmul.f32 %v692, %v693
    %v695 = vsub.f32 1.0, %v694
    %v696 = vmul.f32 %v693, %v695
    %v697 = vadd.f32 %v693, %v696
    %vm698 = vweird.f32 %v692
    %vm699 = vweird.f32 %v693
    %vm700 = vmor %vm698, %vm699
    %v701 = vsel %vm700, %v693, %v697
    %v702 = vand.u32 2147483647, %v692
    %vm703 = vcmp.eq.f32.partialorder %v702, 8.507059e+37
    %v704 = vand.u32 %v692, 2147483648
    %v705 = vor.u32 1.1754944e-38, %v704
    %v706 = vsel %vm703, %v705, %v701
    %v707 = vmul.f32 1.0, %v706
    %v708 = vtanh.pop %v646
    %710 = vrot.lane.b32.xlu0 %v604, 32
    %v711 = vpop.permute.xlu0 %710
    %v713 = vmul.f32 %v707, %v711
    %715 = vrot.lane.b32.xlu0 %v708, 64
    %v716 = vpop.permute.xlu0 %715
    %v718 = vmul.f32 %v707, %v716
    %720 = vrot.lane.b32.xlu0 %v718, 32
    %v721 = vpop.permute.xlu0 %720
    %v723 = vadd.f32 %v713, %v721
    %v724 = vtanh.pop %v723
    %726 = vrot.lane.b32.xlu0 %v724, 64
    %v727 = vpop.permute.xlu0 %726
    %v729 = vmul.f32 %v707, %v727
    %v731 = vrot.slane %v688, 6
    %732 = vrot.lane.b32.xlu0 %v731, 32
    %v733 = vpop.permute.xlu0 %732
    %v735 = vsel %vm53, %v733, %v586
    %v737 = vrot.slane %v682, 6
    %738 = vrot.lane.b32.xlu0 %v737, 96
    %v739 = vpop.permute.xlu0 %738
    %v741 = vsel %vm53, %v739, %v592
    %742 = vrot.lane.b32.xlu0 %v598, 96
    %v743 = vpop.permute.xlu0 %742
    %v745 = vsel %vm54, %v729, %v743
    %v746 = vsel %vm54, %v723, %v711
    %v747 = vsel %vm53, %v733, 0.0
    %v748 = vsel %vm54, %v729, 0.0
    %750 = vrot.lane.b32.xlu0 %v745, 64
    %v751 = vpop.permute.xlu0 %750
    %v753 = vsel %vm303, %v735, %v751
    %v754 = vpack.c.bf16 %v753, %v753
    %v756 = vsel %vm172, %v754, 0
    %758 = vmatpush.bf16.msra.mxu0 0
    %759 = vmatpush.bf16.msra.mxu0 0
    %760 = vmatpush.bf16.msra.mxu0 0
    %761 = vmatpush.bf16.msra.mxu0 0
    %762 = vmatpush.bf16.msra.mxu0 %v162
    %763 = vmatpush.bf16.msra.mxu0 %v160
    %764 = vmatpush.bf16.msra.mxu0 %v158
    %765 = vmatpush.bf16.msra.mxu0 %v156
    %766 = vmatmul.bf16.gmra.mxu0 %v756
    %v767 = vpop.f32.mrf.mxu0
    %v768 = vadd.f32 0.0, %v767
    %v769 = vpop.f32.mrf.mxu0
    %770 = vdwg.mxu0
    %771 = vmatpush.bf16.msra.mxu0 0
    %772 = vmatpush.bf16.msra.mxu0 0
    %773 = vmatpush.bf16.msra.mxu0 0
    %774 = vmatpush.bf16.msra.mxu0 0
    %775 = vmatpush.bf16.msra.mxu0 %v163
    %776 = vmatpush.bf16.msra.mxu0 %v161
    %777 = vmatpush.bf16.msra.mxu0 %v159
    %778 = vmatpush.bf16.msra.mxu0 %v157
    %779 = vmatmul.bf16.gmra.mxu0 %v756
    %v780 = vpop.f32.mrf.mxu0
    %v781 = vadd.f32 0.0, %v780
    %v782 = vpop.f32.mrf.mxu0
    %783 = vdwg.mxu0
    %v784 = vadd.f32 %v107, %v768
    %v786 = vrot.slane %v781, 2
    %v788 = vadd.f32 %v119, %v786
    %v789 = vxor.u32 %v784, 2147483648
    %v790 = vmul.f32 %v789, 1.442695
    %v791 = vpow.pop %v790
    %v792 = vadd.f32 %v791, 1.0
    %v793 = vrcp.pop %v792
    %v794 = vmul.f32 %v792, %v793
    %v795 = vsub.f32 1.0, %v794
    %v796 = vmul.f32 %v793, %v795
    %v797 = vadd.f32 %v793, %v796
    %vm798 = vweird.f32 %v792
    %vm799 = vweird.f32 %v793
    %vm800 = vmor %vm798, %vm799
    %v801 = vsel %vm800, %v793, %v797
    %v802 = vand.u32 2147483647, %v792
    %vm803 = vcmp.eq.f32.partialorder %v802, 8.507059e+37
    %v804 = vand.u32 %v792, 2147483648
    %v805 = vor.u32 1.1754944e-38, %v804
    %v806 = vsel %vm803, %v805, %v801
    %v807 = vmul.f32 1.0, %v806
    %v808 = vtanh.pop %v784
    %810 = vrot.lane.b32.xlu0 %v741, 32
    %v811 = vpop.permute.xlu0 %810
    %v813 = vmul.f32 %v807, %v811
    %815 = vrot.lane.b32.xlu0 %v808, 64
    %v816 = vpop.permute.xlu0 %815
    %v818 = vmul.f32 %v807, %v816
    %820 = vrot.lane.b32.xlu0 %v818, 32
    %v821 = vpop.permute.xlu0 %820
    %v823 = vadd.f32 %v813, %v821
    %v824 = vtanh.pop %v823
    %826 = vrot.lane.b32.xlu0 %v824, 64
    %v827 = vpop.permute.xlu0 %826
    %v829 = vmul.f32 %v807, %v827
    %v830 = vxor.u32 %v788, 2147483648
    %v831 = vmul.f32 %v830, 1.442695
    %v832 = vpow.pop %v831
    %v833 = vadd.f32 %v832, 1.0
    %v834 = vrcp.pop %v833
    %v835 = vmul.f32 %v833, %v834
    %v836 = vsub.f32 1.0, %v835
    %v837 = vmul.f32 %v834, %v836
    %v838 = vadd.f32 %v834, %v837
    %vm839 = vweird.f32 %v833
    %vm840 = vweird.f32 %v834
    %vm841 = vmor %vm839, %vm840
    %v842 = vsel %vm841, %v834, %v838
    %v843 = vand.u32 2147483647, %v833
    %vm844 = vcmp.eq.f32.partialorder %v843, 8.507059e+37
    %v845 = vand.u32 %v833, 2147483648
    %v846 = vor.u32 1.1754944e-38, %v845
    %v847 = vsel %vm844, %v846, %v842
    %v848 = vmul.f32 1.0, %v847
    %v849 = vtanh.pop %v788
    %v851 = vrot.slane %v746, 2
    %v853 = vmul.f32 %v848, %v851
    %855 = vrot.lane.b32.xlu0 %v849, 64
    %v856 = vpop.permute.xlu0 %855
    %v858 = vmul.f32 %v848, %v856
    %860 = vrot.lane.b32.xlu0 %v858, 32
    %v861 = vpop.permute.xlu0 %860
    %v863 = vadd.f32 %v853, %v861
    %v864 = vtanh.pop %v863
    %866 = vrot.lane.b32.xlu0 %v864, 64
    %v867 = vpop.permute.xlu0 %866
    %v869 = vmul.f32 %v848, %v867
    %871 = vrot.lane.b32.xlu0 %v735, 96
    %v872 = vpop.permute.xlu0 %871
    %v874 = vsel %vm54, %v829, %v872
    %v875 = vsel %vm54, %v823, %v811
    %v877 = vrot.slane %v869, 6
    %878 = vrot.lane.b32.xlu0 %v877, 32
    %v879 = vpop.permute.xlu0 %878
    %881 = vrot.lane.b32.xlu0 %v745, 32
    %v882 = vpop.permute.xlu0 %881
    %v884 = vsel %vm53, %v879, %v882
    %v886 = vrot.slane %v863, 6
    %887 = vrot.lane.b32.xlu0 %v886, 96
    %v888 = vpop.permute.xlu0 %887
    %890 = vrot.lane.b32.xlu0 %v746, 96
    %v891 = vpop.permute.xlu0 %890
    %v893 = vsel %vm53, %v888, %v891
    %v894 = vsel %vm54, %v829, 0.0
    %v895 = vsel %vm53, %v879, 0.0
    %897 = vrot.lane.b32.xlu0 %v874, 32
    %v898 = vpop.permute.xlu0 %897
    %901 = vrot.lane.b32.xlu0 %v884, 32
    %v902 = vpop.permute.xlu0 %901
    %v904 = vsel %vm303, %v898, %v902
    %v905 = vpack.c.bf16 %v904, %v904
    %v907 = vsel %vm172, %v905, 0
    %909 = vmatpush.bf16.msra.mxu0 0
    %910 = vmatpush.bf16.msra.mxu0 0
    %911 = vmatpush.bf16.msra.mxu0 0
    %912 = vmatpush.bf16.msra.mxu0 0
    %913 = vmatpush.bf16.msra.mxu0 %v162
    %914 = vmatpush.bf16.msra.mxu0 %v160
    %915 = vmatpush.bf16.msra.mxu0 %v158
    %916 = vmatpush.bf16.msra.mxu0 %v156
    %917 = vmatmul.bf16.gmra.mxu0 %v907
    %v918 = vpop.f32.mrf.mxu0
    %v919 = vadd.f32 0.0, %v918
    %v920 = vpop.f32.mrf.mxu0
    %921 = vdwg.mxu0
    %922 = vmatpush.bf16.msra.mxu0 0
    %923 = vmatpush.bf16.msra.mxu0 0
    %924 = vmatpush.bf16.msra.mxu0 0
    %925 = vmatpush.bf16.msra.mxu0 0
    %926 = vmatpush.bf16.msra.mxu0 %v163
    %927 = vmatpush.bf16.msra.mxu0 %v161
    %928 = vmatpush.bf16.msra.mxu0 %v159
    %929 = vmatpush.bf16.msra.mxu0 %v157
    %930 = vmatmul.bf16.gmra.mxu0 %v907
    %v931 = vpop.f32.mrf.mxu0
    %v932 = vadd.f32 0.0, %v931
    %v933 = vpop.f32.mrf.mxu0
    %934 = vdwg.mxu0
    %v936 = vrot.slane %v919, 6
    %v938 = vadd.f32 %v107, %v936
    %v940 = vrot.slane %v932, 4
    %v942 = vadd.f32 %v119, %v940
    %v943 = vxor.u32 %v938, 2147483648
    %v944 = vmul.f32 %v943, 1.442695
    %v945 = vpow.pop %v944
    %v946 = vadd.f32 %v945, 1.0
    %v947 = vrcp.pop %v946
    %v948 = vmul.f32 %v946, %v947
    %v949 = vsub.f32 1.0, %v948
    %v950 = vmul.f32 %v947, %v949
    %v951 = vadd.f32 %v947, %v950
    %vm952 = vweird.f32 %v946
    %vm953 = vweird.f32 %v947
    %vm954 = vmor %vm952, %vm953
    %v955 = vsel %vm954, %v947, %v951
    %v956 = vand.u32 2147483647, %v946
    %vm957 = vcmp.eq.f32.partialorder %v956, 8.507059e+37
    %v958 = vand.u32 %v946, 2147483648
    %v959 = vor.u32 1.1754944e-38, %v958
    %v960 = vsel %vm957, %v959, %v955
    %v961 = vmul.f32 1.0, %v960
    %v962 = vtanh.pop %v938
    %v964 = vrot.slane %v875, 6
    %v966 = vmul.f32 %v961, %v964
    %968 = vrot.lane.b32.xlu0 %v962, 64
    %v969 = vpop.permute.xlu0 %968
    %v971 = vmul.f32 %v961, %v969
    %973 = vrot.lane.b32.xlu0 %v971, 32
    %v974 = vpop.permute.xlu0 %973
    %v976 = vadd.f32 %v966, %v974
    %v977 = vtanh.pop %v976
    %979 = vrot.lane.b32.xlu0 %v977, 64
    %v980 = vpop.permute.xlu0 %979
    %v982 = vmul.f32 %v961, %v980
    %v983 = vxor.u32 %v942, 2147483648
    %v984 = vmul.f32 %v983, 1.442695
    %v985 = vpow.pop %v984
    %v986 = vadd.f32 %v985, 1.0
    %v987 = vrcp.pop %v986
    %v988 = vmul.f32 %v986, %v987
    %v989 = vsub.f32 1.0, %v988
    %v990 = vmul.f32 %v987, %v989
    %v991 = vadd.f32 %v987, %v990
    %vm992 = vweird.f32 %v986
    %vm993 = vweird.f32 %v987
    %vm994 = vmor %vm992, %vm993
    %v995 = vsel %vm994, %v987, %v991
    %v996 = vand.u32 2147483647, %v986
    %vm997 = vcmp.eq.f32.partialorder %v996, 8.507059e+37
    %v998 = vand.u32 %v986, 2147483648
    %v999 = vor.u32 1.1754944e-38, %v998
    %v1000 = vsel %vm997, %v999, %v995
    %v1001 = vmul.f32 1.0, %v1000
    %v1002 = vtanh.pop %v942
    %v1004 = vrot.slane %v893, 4
    %1005 = vrot.lane.b32.xlu0 %v1004, 32
    %v1006 = vpop.permute.xlu0 %1005
    %v1008 = vmul.f32 %v1001, %v1006
    %1010 = vrot.lane.b32.xlu0 %v1002, 64
    %v1011 = vpop.permute.xlu0 %1010
    %v1013 = vmul.f32 %v1001, %v1011
    %1015 = vrot.lane.b32.xlu0 %v1013, 32
    %v1016 = vpop.permute.xlu0 %1015
    %v1018 = vadd.f32 %v1008, %v1016
    %v1019 = vtanh.pop %v1018
    %1021 = vrot.lane.b32.xlu0 %v1019, 64
    %v1022 = vpop.permute.xlu0 %1021
    %v1024 = vmul.f32 %v1001, %v1022
    %v1026 = vrot.slane %v982, 2
    %1027 = vrot.lane.b32.xlu0 %v1026, 32
    %v1028 = vpop.permute.xlu0 %1027
    %v1030 = vsel %vm55, %v1028, %v898
    %v1032 = vrot.slane %v976, 2
    %1033 = vrot.lane.b32.xlu0 %v1032, 96
    %v1034 = vpop.permute.xlu0 %1033
    %1036 = vrot.lane.b32.xlu0 %v875, 96
    %v1037 = vpop.permute.xlu0 %1036
    %v1039 = vsel %vm55, %v1034, %v1037
    %v1041 = vrot.slane %v1024, 4
    %1042 = vrot.lane.b32.xlu0 %v1041, 32
    %v1043 = vpop.permute.xlu0 %1042
    %v1045 = vsel %vm52, %v1043, %v884
    %v1047 = vrot.slane %v1018, 4
    %1048 = vrot.lane.b32.xlu0 %v1047, 96
    %v1049 = vpop.permute.xlu0 %1048
    %v1051 = vsel %vm52, %v1049, %v893
    %v1052 = vsel %vm55, %v1028, 0.0
    %v1053 = vsel %vm52, %v1043, 0.0
    %1055 = vrot.lane.b32.xlu0 %v1045, 32
    %v1056 = vpop.permute.xlu0 %1055
    %v1058 = vsel %vm303, %v1030, %v1056
    %v1059 = vpack.c.bf16 %v1058, %v1058
    %v1061 = vsel %vm172, %v1059, 0
    %1063 = vmatpush.bf16.msra.mxu0 0
    %1064 = vmatpush.bf16.msra.mxu0 0
    %1065 = vmatpush.bf16.msra.mxu0 0
    %1066 = vmatpush.bf16.msra.mxu0 0
    %1067 = vmatpush.bf16.msra.mxu0 %v162
    %1068 = vmatpush.bf16.msra.mxu0 %v160
    %1069 = vmatpush.bf16.msra.mxu0 %v158
    %1070 = vmatpush.bf16.msra.mxu0 %v156
    %1071 = vmatmul.bf16.gmra.mxu0 %v1061
    %v1072 = vpop.f32.mrf.mxu0
    %v1073 = vadd.f32 0.0, %v1072
    %v1074 = vpop.f32.mrf.mxu0
    %1075 = vdwg.mxu0
    %1076 = vmatpush.bf16.msra.mxu0 0
    %1077 = vmatpush.bf16.msra.mxu0 0
    %1078 = vmatpush.bf16.msra.mxu0 0
    %1079 = vmatpush.bf16.msra.mxu0 0
    %1080 = vmatpush.bf16.msra.mxu0 %v163
    %1081 = vmatpush.bf16.msra.mxu0 %v161
    %1082 = vmatpush.bf16.msra.mxu0 %v159
    %1083 = vmatpush.bf16.msra.mxu0 %v157
    %1084 = vmatmul.bf16.gmra.mxu0 %v1061
    %v1085 = vpop.f32.mrf.mxu0
    %v1086 = vadd.f32 0.0, %v1085
    %v1087 = vpop.f32.mrf.mxu0
    %1088 = vdwg.mxu0
    %v1090 = vrot.slane %v1073, 4
    %v1092 = vadd.f32 %v107, %v1090
    %v1094 = vrot.slane %v1086, 6
    %v1096 = vadd.f32 %v119, %v1094
    %v1097 = vxor.u32 %v1092, 2147483648
    %v1098 = vmul.f32 %v1097, 1.442695
    %v1099 = vpow.pop %v1098
    %v1100 = vadd.f32 %v1099, 1.0
    %v1101 = vrcp.pop %v1100
    %v1102 = vmul.f32 %v1100, %v1101
    %v1103 = vsub.f32 1.0, %v1102
    %v1104 = vmul.f32 %v1101, %v1103
    %v1105 = vadd.f32 %v1101, %v1104
    %vm1106 = vweird.f32 %v1100
    %vm1107 = vweird.f32 %v1101
    %vm1108 = vmor %vm1106, %vm1107
    %v1109 = vsel %vm1108, %v1101, %v1105
    %v1110 = vand.u32 2147483647, %v1100
    %vm1111 = vcmp.eq.f32.partialorder %v1110, 8.507059e+37
    %v1112 = vand.u32 %v1100, 2147483648
    %v1113 = vor.u32 1.1754944e-38, %v1112
    %v1114 = vsel %vm1111, %v1113, %v1109
    %v1115 = vmul.f32 1.0, %v1114
    %v1116 = vtanh.pop %v1092
    %v1118 = vrot.slane %v1039, 4
    %1119 = vrot.lane.b32.xlu0 %v1118, 32
    %v1120 = vpop.permute.xlu0 %1119
    %v1122 = vmul.f32 %v1115, %v1120
    %1124 = vrot.lane.b32.xlu0 %v1116, 64
    %v1125 = vpop.permute.xlu0 %1124
    %v1127 = vmul.f32 %v1115, %v1125
    %1129 = vrot.lane.b32.xlu0 %v1127, 32
    %v1130 = vpop.permute.xlu0 %1129
    %v1132 = vadd.f32 %v1122, %v1130
    %v1133 = vtanh.pop %v1132
    %1135 = vrot.lane.b32.xlu0 %v1133, 64
    %v1136 = vpop.permute.xlu0 %1135
    %v1138 = vmul.f32 %v1115, %v1136
    %v1139 = vxor.u32 %v1096, 2147483648
    %v1140 = vmul.f32 %v1139, 1.442695
    %v1141 = vpow.pop %v1140
    %v1142 = vadd.f32 %v1141, 1.0
    %v1143 = vrcp.pop %v1142
    %v1144 = vmul.f32 %v1142, %v1143
    %v1145 = vsub.f32 1.0, %v1144
    %v1146 = vmul.f32 %v1143, %v1145
    %v1147 = vadd.f32 %v1143, %v1146
    %vm1148 = vweird.f32 %v1142
    %vm1149 = vweird.f32 %v1143
    %vm1150 = vmor %vm1148, %vm1149
    %v1151 = vsel %vm1150, %v1143, %v1147
    %v1152 = vand.u32 2147483647, %v1142
    %vm1153 = vcmp.eq.f32.partialorder %v1152, 8.507059e+37
    %v1154 = vand.u32 %v1142, 2147483648
    %v1155 = vor.u32 1.1754944e-38, %v1154
    %v1156 = vsel %vm1153, %v1155, %v1151
    %v1157 = vmul.f32 1.0, %v1156
    %v1158 = vtanh.pop %v1096
    %v1160 = vrot.slane %v1051, 6
    %1161 = vrot.lane.b32.xlu0 %v1160, 32
    %v1162 = vpop.permute.xlu0 %1161
    %v1164 = vmul.f32 %v1157, %v1162
    %1166 = vrot.lane.b32.xlu0 %v1158, 64
    %v1167 = vpop.permute.xlu0 %1166
    %v1169 = vmul.f32 %v1157, %v1167
    %1171 = vrot.lane.b32.xlu0 %v1169, 32
    %v1172 = vpop.permute.xlu0 %1171
    %v1174 = vadd.f32 %v1164, %v1172
    %v1175 = vtanh.pop %v1174
    %1177 = vrot.lane.b32.xlu0 %v1175, 64
    %v1178 = vpop.permute.xlu0 %1177
    %v1180 = vmul.f32 %v1157, %v1178
    %v1182 = vrot.slane %v1138, 4
    %1183 = vrot.lane.b32.xlu0 %v1182, 32
    %v1184 = vpop.permute.xlu0 %1183
    %v1186 = vsel %vm56, %v1184, %v1030
    %v1188 = vrot.slane %v1132, 4
    %1189 = vrot.lane.b32.xlu0 %v1188, 96
    %v1190 = vpop.permute.xlu0 %1189
    %v1192 = vsel %vm56, %v1190, %v1039
    %v1194 = vrot.slane %v1180, 2
    %1195 = vrot.lane.b32.xlu0 %v1194, 32
    %v1196 = vpop.permute.xlu0 %1195
    %v1198 = vsel %vm51, %v1196, %v1045
    %v1200 = vrot.slane %v1174, 2
    %1201 = vrot.lane.b32.xlu0 %v1200, 96
    %v1202 = vpop.permute.xlu0 %1201
    %v1204 = vsel %vm51, %v1202, %v1051
    %v1205 = vsel %vm56, %v1184, 0.0
    %v1206 = vsel %vm51, %v1196, 0.0
    %1208 = vrot.lane.b32.xlu0 %v1198, 32
    %v1209 = vpop.permute.xlu0 %1208
    %v1211 = vsel %vm303, %v1186, %v1209
    %v1212 = vpack.c.bf16 %v1211, %v1211
    %v1214 = vsel %vm172, %v1212, 0
    %1216 = vmatpush.bf16.msra.mxu0 0
    %1217 = vmatpush.bf16.msra.mxu0 0
    %1218 = vmatpush.bf16.msra.mxu0 0
    %1219 = vmatpush.bf16.msra.mxu0 0
    %1220 = vmatpush.bf16.msra.mxu0 %v162
    %1221 = vmatpush.bf16.msra.mxu0 %v160
    %1222 = vmatpush.bf16.msra.mxu0 %v158
    %1223 = vmatpush.bf16.msra.mxu0 %v156
    %1224 = vmatmul.bf16.gmra.mxu0 %v1214
    %v1225 = vpop.f32.mrf.mxu0
    %v1226 = vadd.f32 0.0, %v1225
    %v1227 = vpop.f32.mrf.mxu0
    %1228 = vdwg.mxu0
    %1229 = vmatpush.bf16.msra.mxu0 0
    %1230 = vmatpush.bf16.msra.mxu0 0
    %1231 = vmatpush.bf16.msra.mxu0 0
    %1232 = vmatpush.bf16.msra.mxu0 0
    %1233 = vmatpush.bf16.msra.mxu0 %v163
    %1234 = vmatpush.bf16.msra.mxu0 %v161
    %1235 = vmatpush.bf16.msra.mxu0 %v159
    %1236 = vmatpush.bf16.msra.mxu0 %v157
    %1237 = vmatmul.bf16.gmra.mxu0 %v1214
    %v1238 = vpop.f32.mrf.mxu0
    %v1239 = vadd.f32 0.0, %v1238
    %v1240 = vpop.f32.mrf.mxu0
    %1241 = vdwg.mxu0
    %v1243 = vrot.slane %v1226, 2
    %v1245 = vadd.f32 %v107, %v1243
    %v1246 = vadd.f32 %v119, %v1239
    %v1247 = vxor.u32 %v1245, 2147483648
    %v1248 = vmul.f32 %v1247, 1.442695
    %v1249 = vpow.pop %v1248
    %v1250 = vadd.f32 %v1249, 1.0
    %v1251 = vrcp.pop %v1250
    %v1252 = vmul.f32 %v1250, %v1251
    %v1253 = vsub.f32 1.0, %v1252
    %v1254 = vmul.f32 %v1251, %v1253
    %v1255 = vadd.f32 %v1251, %v1254
    %vm1256 = vweird.f32 %v1250
    %vm1257 = vweird.f32 %v1251
    %vm1258 = vmor %vm1256, %vm1257
    %v1259 = vsel %vm1258, %v1251, %v1255
    %v1260 = vand.u32 2147483647, %v1250
    %vm1261 = vcmp.eq.f32.partialorder %v1260, 8.507059e+37
    %v1262 = vand.u32 %v1250, 2147483648
    %v1263 = vor.u32 1.1754944e-38, %v1262
    %v1264 = vsel %vm1261, %v1263, %v1259
    %v1265 = vmul.f32 1.0, %v1264
    %v1266 = vtanh.pop %v1245
    %v1268 = vrot.slane %v1192, 2
    %1269 = vrot.lane.b32.xlu0 %v1268, 32
    %v1270 = vpop.permute.xlu0 %1269
    %v1272 = vmul.f32 %v1265, %v1270
    %1274 = vrot.lane.b32.xlu0 %v1266, 64
    %v1275 = vpop.permute.xlu0 %1274
    %v1277 = vmul.f32 %v1265, %v1275
    %1279 = vrot.lane.b32.xlu0 %v1277, 32
    %v1280 = vpop.permute.xlu0 %1279
    %v1282 = vadd.f32 %v1272, %v1280
    %v1283 = vtanh.pop %v1282
    %1285 = vrot.lane.b32.xlu0 %v1283, 64
    %v1286 = vpop.permute.xlu0 %1285
    %v1288 = vmul.f32 %v1265, %v1286
    %v1289 = vxor.u32 %v1246, 2147483648
    %v1290 = vmul.f32 %v1289, 1.442695
    %v1291 = vpow.pop %v1290
    %v1292 = vadd.f32 %v1291, 1.0
    %v1293 = vrcp.pop %v1292
    %v1294 = vmul.f32 %v1292, %v1293
    %v1295 = vsub.f32 1.0, %v1294
    %v1296 = vmul.f32 %v1293, %v1295
    %v1297 = vadd.f32 %v1293, %v1296
    %vm1298 = vweird.f32 %v1292
    %vm1299 = vweird.f32 %v1293
    %vm1300 = vmor %vm1298, %vm1299
    %v1301 = vsel %vm1300, %v1293, %v1297
    %v1302 = vand.u32 2147483647, %v1292
    %vm1303 = vcmp.eq.f32.partialorder %v1302, 8.507059e+37
    %v1304 = vand.u32 %v1292, 2147483648
    %v1305 = vor.u32 1.1754944e-38, %v1304
    %v1306 = vsel %vm1303, %v1305, %v1301
    %v1307 = vmul.f32 1.0, %v1306
    %v1308 = vtanh.pop %v1246
    %1310 = vrot.lane.b32.xlu0 %v1204, 32
    %v1311 = vpop.permute.xlu0 %1310
    %v1313 = vmul.f32 %v1307, %v1311
    %1315 = vrot.lane.b32.xlu0 %v1308, 64
    %v1316 = vpop.permute.xlu0 %1315
    %v1318 = vmul.f32 %v1307, %v1316
    %1320 = vrot.lane.b32.xlu0 %v1318, 32
    %v1321 = vpop.permute.xlu0 %1320
    %v1323 = vadd.f32 %v1313, %v1321
    %v1324 = vtanh.pop %v1323
    %1326 = vrot.lane.b32.xlu0 %v1324, 64
    %v1327 = vpop.permute.xlu0 %1326
    %v1329 = vmul.f32 %v1307, %v1327
    %v1331 = vrot.slane %v1288, 6
    %1332 = vrot.lane.b32.xlu0 %v1331, 32
    %v1333 = vpop.permute.xlu0 %1332
    %v1335 = vsel %vm57, %v1333, 0.0
    %v1336 = vsel %vm50, %v1329, 0.0
    %v1337 = vld [vmem:[%s5] sm:$0xff]
    %v1338 = vld [vmem:[%s5 + $0x8] sm:$0xff]
    %v1339 = vld [vmem:[%s5 + $0x10] sm:$0xff]
    %v1340 = vld [vmem:[%s5 + $0x18] sm:$0xff]
    %v1341 = vld [vmem:[%s5 + $0x20] sm:$0xff]
    %v1342 = vld [vmem:[%s5 + $0x28] sm:$0xff]
    %v1343 = vld [vmem:[%s5 + $0x30] sm:$0xff]
    %v1344 = vld [vmem:[%s5 + $0x38] sm:$0xff]
    %v1345 = vld [vmem:[%s7] sm:$0x3]
    %1347 = vrot.lane.b32.xlu0 %v1336, 64
    %v1348 = vpop.permute.xlu0 %1347
    %v1350 = vsel %vm303, %v297, %v1348
    %v1351 = vpack.c.bf16 %v1350, %v1350
    %v1353 = vperm.slane %v1345, 0
    %v1354 = vperm.slane %v1345, 1
    %v1365 = vunpack.c.l.b16 %v1337
    %v1366 = vunpack.c.h.b16 %v1337
    %v1367 = vunpack.c.l.b16 %v1338
    %v1368 = vunpack.c.h.b16 %v1338
    %v1369 = vunpack.c.l.b16 %v1339
    %v1370 = vunpack.c.h.b16 %v1339
    %v1371 = vunpack.c.l.b16 %v1340
    %v1372 = vunpack.c.h.b16 %v1340
    %v1373 = vunpack.c.l.b16 %v1341
    %v1374 = vunpack.c.h.b16 %v1341
    %v1375 = vunpack.c.l.b16 %v1342
    %v1376 = vunpack.c.h.b16 %v1342
    %v1377 = vunpack.c.l.b16 %v1343
    %v1378 = vunpack.c.h.b16 %v1343
    %v1379 = vunpack.c.l.b16 %v1344
    %v1380 = vunpack.c.h.b16 %v1344
    %v1381 = vpack.c.b16 %v1367, %v1365
    %v1382 = vpack.c.b16 %v1368, %v1366
    %v1383 = vpack.c.b16 %v1371, %v1369
    %v1384 = vpack.c.b16 %v1372, %v1370
    %v1385 = vpack.c.b16 %v1375, %v1373
    %v1386 = vpack.c.b16 %v1376, %v1374
    %v1387 = vpack.c.b16 %v1379, %v1377
    %v1388 = vpack.c.b16 %v1380, %v1378
    %v1398 = vsel %vm172, %v1351, 0
    %1400 = vmatpush.bf16.msra.mxu0 0
    %1401 = vmatpush.bf16.msra.mxu0 0
    %1402 = vmatpush.bf16.msra.mxu0 0
    %1403 = vmatpush.bf16.msra.mxu0 0
    %1404 = vmatpush.bf16.msra.mxu0 %v1387
    %1405 = vmatpush.bf16.msra.mxu0 %v1385
    %1406 = vmatpush.bf16.msra.mxu0 %v1383
    %1407 = vmatpush.bf16.msra.mxu0 %v1381
    %1408 = vmatmul.bf16.gmra.mxu0 %v1398
    %v1409 = vpop.f32.mrf.mxu0
    %v1410 = vadd.f32 %v1353, %v1409
    %v1411 = vpop.f32.mrf.mxu0
    %1412 = vdwg.mxu0
    %1413 = vmatpush.bf16.msra.mxu0 0
    %1414 = vmatpush.bf16.msra.mxu0 0
    %1415 = vmatpush.bf16.msra.mxu0 0
    %1416 = vmatpush.bf16.msra.mxu0 0
    %1417 = vmatpush.bf16.msra.mxu0 %v1388
    %1418 = vmatpush.bf16.msra.mxu0 %v1386
    %1419 = vmatpush.bf16.msra.mxu0 %v1384
    %1420 = vmatpush.bf16.msra.mxu0 %v1382
    %1421 = vmatmul.bf16.gmra.mxu0 %v1398
    %v1422 = vpop.f32.mrf.mxu0
    %v1423 = vadd.f32 %v1354, %v1422
    %v1424 = vpop.f32.mrf.mxu0
    %1425 = vdwg.mxu0
    %1427 = vrot.lane.b32.xlu0 %v1206, 32
    %v1428 = vpop.permute.xlu0 %1427
    %v1430 = vsel %vm303, %v452, %v1428
    %v1431 = vpack.c.bf16 %v1430, %v1430
    %v1433 = vsel %vm172, %v1431, 0
    %1435 = vmatpush.bf16.msra.mxu0 0
    %1436 = vmatpush.bf16.msra.mxu0 0
    %1437 = vmatpush.bf16.msra.mxu0 0
    %1438 = vmatpush.bf16.msra.mxu0 0
    %1439 = vmatpush.bf16.msra.mxu0 %v1387
    %1440 = vmatpush.bf16.msra.mxu0 %v1385
    %1441 = vmatpush.bf16.msra.mxu0 %v1383
    %1442 = vmatpush.bf16.msra.mxu0 %v1381
    %1443 = vmatmul.bf16.gmra.mxu0 %v1433
    %v1444 = vpop.f32.mrf.mxu0
    %v1445 = vadd.f32 %v1353, %v1444
    %v1446 = vpop.f32.mrf.mxu0
    %1447 = vdwg.mxu0
    %1448 = vmatpush.bf16.msra.mxu0 0
    %1449 = vmatpush.bf16.msra.mxu0 0
    %1450 = vmatpush.bf16.msra.mxu0 0
    %1451 = vmatpush.bf16.msra.mxu0 0
    %1452 = vmatpush.bf16.msra.mxu0 %v1388
    %1453 = vmatpush.bf16.msra.mxu0 %v1386
    %1454 = vmatpush.bf16.msra.mxu0 %v1384
    %1455 = vmatpush.bf16.msra.mxu0 %v1382
    %1456 = vmatmul.bf16.gmra.mxu0 %v1433
    %v1457 = vpop.f32.mrf.mxu0
    %v1458 = vadd.f32 %v1354, %v1457
    %v1459 = vpop.f32.mrf.mxu0
    %1460 = vdwg.mxu0
    %1462 = vrot.lane.b32.xlu0 %v1053, 32
    %v1463 = vpop.permute.xlu0 %1462
    %v1465 = vsel %vm303, %v605, %v1463
    %v1466 = vpack.c.bf16 %v1465, %v1465
    %v1468 = vsel %vm172, %v1466, 0
    %1470 = vmatpush.bf16.msra.mxu0 0
    %1471 = vmatpush.bf16.msra.mxu0 0
    %1472 = vmatpush.bf16.msra.mxu0 0
    %1473 = vmatpush.bf16.msra.mxu0 0
    %1474 = vmatpush.bf16.msra.mxu0 %v1387
    %1475 = vmatpush.bf16.msra.mxu0 %v1385
    %1476 = vmatpush.bf16.msra.mxu0 %v1383
    %1477 = vmatpush.bf16.msra.mxu0 %v1381
    %1478 = vmatmul.bf16.gmra.mxu0 %v1468
    %v1479 = vpop.f32.mrf.mxu0
    %v1480 = vadd.f32 %v1353, %v1479
    %v1481 = vpop.f32.mrf.mxu0
    %1482 = vdwg.mxu0
    %1483 = vmatpush.bf16.msra.mxu0 0
    %1484 = vmatpush.bf16.msra.mxu0 0
    %1485 = vmatpush.bf16.msra.mxu0 0
    %1486 = vmatpush.bf16.msra.mxu0 0
    %1487 = vmatpush.bf16.msra.mxu0 %v1388
    %1488 = vmatpush.bf16.msra.mxu0 %v1386
    %1489 = vmatpush.bf16.msra.mxu0 %v1384
    %1490 = vmatpush.bf16.msra.mxu0 %v1382
    %1491 = vmatmul.bf16.gmra.mxu0 %v1468
    %v1492 = vpop.f32.mrf.mxu0
    %v1493 = vadd.f32 %v1354, %v1492
    %v1494 = vpop.f32.mrf.mxu0
    %1495 = vdwg.mxu0
    %1497 = vrot.lane.b32.xlu0 %v895, 32
    %v1498 = vpop.permute.xlu0 %1497
    %v1500 = vsel %vm303, %v747, %v1498
    %v1501 = vpack.c.bf16 %v1500, %v1500
    %v1503 = vsel %vm172, %v1501, 0
    %1505 = vmatpush.bf16.msra.mxu0 0
    %1506 = vmatpush.bf16.msra.mxu0 0
    %1507 = vmatpush.bf16.msra.mxu0 0
    %1508 = vmatpush.bf16.msra.mxu0 0
    %1509 = vmatpush.bf16.msra.mxu0 %v1387
    %1510 = vmatpush.bf16.msra.mxu0 %v1385
    %1511 = vmatpush.bf16.msra.mxu0 %v1383
    %1512 = vmatpush.bf16.msra.mxu0 %v1381
    %1513 = vmatmul.bf16.gmra.mxu0 %v1503
    %v1514 = vpop.f32.mrf.mxu0
    %v1515 = vadd.f32 %v1353, %v1514
    %v1516 = vpop.f32.mrf.mxu0
    %1517 = vdwg.mxu0
    %1518 = vmatpush.bf16.msra.mxu0 0
    %1519 = vmatpush.bf16.msra.mxu0 0
    %1520 = vmatpush.bf16.msra.mxu0 0
    %1521 = vmatpush.bf16.msra.mxu0 0
    %1522 = vmatpush.bf16.msra.mxu0 %v1388
    %1523 = vmatpush.bf16.msra.mxu0 %v1386
    %1524 = vmatpush.bf16.msra.mxu0 %v1384
    %1525 = vmatpush.bf16.msra.mxu0 %v1382
    %1526 = vmatmul.bf16.gmra.mxu0 %v1503
    %v1527 = vpop.f32.mrf.mxu0
    %v1528 = vadd.f32 %v1354, %v1527
    %v1529 = vpop.f32.mrf.mxu0
    %1530 = vdwg.mxu0
    %1532 = vrot.lane.b32.xlu0 %v894, 32
    %v1533 = vpop.permute.xlu0 %1532
    %1536 = vrot.lane.b32.xlu0 %v748, 64
    %v1537 = vpop.permute.xlu0 %1536
    %v1539 = vsel %vm303, %v1533, %v1537
    %v1540 = vpack.c.bf16 %v1539, %v1539
    %v1542 = vsel %vm172, %v1540, 0
    %1544 = vmatpush.bf16.msra.mxu0 0
    %1545 = vmatpush.bf16.msra.mxu0 0
    %1546 = vmatpush.bf16.msra.mxu0 0
    %1547 = vmatpush.bf16.msra.mxu0 0
    %1548 = vmatpush.bf16.msra.mxu0 %v1387
    %1549 = vmatpush.bf16.msra.mxu0 %v1385
    %1550 = vmatpush.bf16.msra.mxu0 %v1383
    %1551 = vmatpush.bf16.msra.mxu0 %v1381
    %1552 = vmatmul.bf16.gmra.mxu0 %v1542
    %v1553 = vpop.f32.mrf.mxu0
    %v1554 = vadd.f32 %v1353, %v1553
    %v1555 = vpop.f32.mrf.mxu0
    %1556 = vdwg.mxu0
    %1557 = vmatpush.bf16.msra.mxu0 0
    %1558 = vmatpush.bf16.msra.mxu0 0
    %1559 = vmatpush.bf16.msra.mxu0 0
    %1560 = vmatpush.bf16.msra.mxu0 0
    %1561 = vmatpush.bf16.msra.mxu0 %v1388
    %1562 = vmatpush.bf16.msra.mxu0 %v1386
    %1563 = vmatpush.bf16.msra.mxu0 %v1384
    %1564 = vmatpush.bf16.msra.mxu0 %v1382
    %1565 = vmatmul.bf16.gmra.mxu0 %v1542
    %v1566 = vpop.f32.mrf.mxu0
    %v1567 = vadd.f32 %v1354, %v1566
    %v1568 = vpop.f32.mrf.mxu0
    %1569 = vdwg.mxu0
    %1571 = vrot.lane.b32.xlu0 %v606, 32
    %v1572 = vpop.permute.xlu0 %1571
    %v1574 = vsel %vm303, %v1052, %v1572
    %v1575 = vpack.c.bf16 %v1574, %v1574
    %v1577 = vsel %vm172, %v1575, 0
    %1579 = vmatpush.bf16.msra.mxu0 0
    %1580 = vmatpush.bf16.msra.mxu0 0
    %1581 = vmatpush.bf16.msra.mxu0 0
    %1582 = vmatpush.bf16.msra.mxu0 0
    %1583 = vmatpush.bf16.msra.mxu0 %v1387
    %1584 = vmatpush.bf16.msra.mxu0 %v1385
    %1585 = vmatpush.bf16.msra.mxu0 %v1383
    %1586 = vmatpush.bf16.msra.mxu0 %v1381
    %1587 = vmatmul.bf16.gmra.mxu0 %v1577
    %v1588 = vpop.f32.mrf.mxu0
    %v1589 = vadd.f32 %v1353, %v1588
    %v1590 = vpop.f32.mrf.mxu0
    %1591 = vdwg.mxu0
    %1592 = vmatpush.bf16.msra.mxu0 0
    %1593 = vmatpush.bf16.msra.mxu0 0
    %1594 = vmatpush.bf16.msra.mxu0 0
    %1595 = vmatpush.bf16.msra.mxu0 0
    %1596 = vmatpush.bf16.msra.mxu0 %v1388
    %1597 = vmatpush.bf16.msra.mxu0 %v1386
    %1598 = vmatpush.bf16.msra.mxu0 %v1384
    %1599 = vmatpush.bf16.msra.mxu0 %v1382
    %1600 = vmatmul.bf16.gmra.mxu0 %v1577
    %v1601 = vpop.f32.mrf.mxu0
    %v1602 = vadd.f32 %v1354, %v1601
    %v1603 = vpop.f32.mrf.mxu0
    %1604 = vdwg.mxu0
    %1606 = vrot.lane.b32.xlu0 %v453, 32
    %v1607 = vpop.permute.xlu0 %1606
    %v1609 = vsel %vm303, %v1205, %v1607
    %v1610 = vpack.c.bf16 %v1609, %v1609
    %v1612 = vsel %vm172, %v1610, 0
    %1614 = vmatpush.bf16.msra.mxu0 0
    %1615 = vmatpush.bf16.msra.mxu0 0
    %1616 = vmatpush.bf16.msra.mxu0 0
    %1617 = vmatpush.bf16.msra.mxu0 0
    %1618 = vmatpush.bf16.msra.mxu0 %v1387
    %1619 = vmatpush.bf16.msra.mxu0 %v1385
    %1620 = vmatpush.bf16.msra.mxu0 %v1383
    %1621 = vmatpush.bf16.msra.mxu0 %v1381
    %1622 = vmatmul.bf16.gmra.mxu0 %v1612
    %v1623 = vpop.f32.mrf.mxu0
    %v1624 = vadd.f32 %v1353, %v1623
    %v1625 = vpop.f32.mrf.mxu0
    %1626 = vdwg.mxu0
    %1627 = vmatpush.bf16.msra.mxu0 0
    %1628 = vmatpush.bf16.msra.mxu0 0
    %1629 = vmatpush.bf16.msra.mxu0 0
    %1630 = vmatpush.bf16.msra.mxu0 0
    %1631 = vmatpush.bf16.msra.mxu0 %v1388
    %1632 = vmatpush.bf16.msra.mxu0 %v1386
    %1633 = vmatpush.bf16.msra.mxu0 %v1384
    %1634 = vmatpush.bf16.msra.mxu0 %v1382
    %1635 = vmatmul.bf16.gmra.mxu0 %v1612
    %v1636 = vpop.f32.mrf.mxu0
    %v1637 = vadd.f32 %v1354, %v1636
    %v1638 = vpop.f32.mrf.mxu0
    %1639 = vdwg.mxu0
    %v1640 = vsel %vm303, %v1335, %v301
    %v1641 = vpack.c.bf16 %v1640, %v1640
    %v1643 = vsel %vm172, %v1641, 0
    %1645 = vmatpush.bf16.msra.mxu0 0
    %1646 = vmatpush.bf16.msra.mxu0 0
    %1647 = vmatpush.bf16.msra.mxu0 0
    %1648 = vmatpush.bf16.msra.mxu0 0
    %1649 = vmatpush.bf16.msra.mxu0 %v1387
    %1650 = vmatpush.bf16.msra.mxu0 %v1385
    %1651 = vmatpush.bf16.msra.mxu0 %v1383
    %1652 = vmatpush.bf16.msra.mxu0 %v1381
    %1653 = vmatmul.bf16.gmra.mxu0 %v1643
    %v1654 = vpop.f32.mrf.mxu0
    %v1655 = vadd.f32 %v1353, %v1654
    %v1656 = vpop.f32.mrf.mxu0
    %1657 = vdwg.mxu0
    %1658 = vmatpush.bf16.msra.mxu0 0
    %1659 = vmatpush.bf16.msra.mxu0 0
    %1660 = vmatpush.bf16.msra.mxu0 0
    %1661 = vmatpush.bf16.msra.mxu0 0
    %1662 = vmatpush.bf16.msra.mxu0 %v1388
    %1663 = vmatpush.bf16.msra.mxu0 %v1386
    %1664 = vmatpush.bf16.msra.mxu0 %v1384
    %1665 = vmatpush.bf16.msra.mxu0 %v1382
    %1666 = vmatmul.bf16.gmra.mxu0 %v1643
    %v1667 = vpop.f32.mrf.mxu0
    %v1668 = vadd.f32 %v1354, %v1667
    %v1669 = vpop.f32.mrf.mxu0
    %1670 = vdwg.mxu0
    %v1671 = vld [vmem:[%s6] sm:$0xff]
    %v1672 = vld [vmem:[%s6 + $0x8] sm:$0xff]
    %v1673 = vld [vmem:[%s6 + $0x10] sm:$0xff]
    %v1674 = vld [vmem:[%s6 + $0x18] sm:$0xff]
    %v1675 = vld [vmem:[%s6 + $0x20] sm:$0xff]
    %v1676 = vld [vmem:[%s6 + $0x28] sm:$0xff]
    %v1677 = vld [vmem:[%s6 + $0x30] sm:$0xff]
    %v1678 = vld [vmem:[%s6 + $0x38] sm:$0xff]
    %v1687 = vunpack.c.l.b16 %v1671
    %v1688 = vunpack.c.h.b16 %v1671
    %v1689 = vunpack.c.l.b16 %v1672
    %v1690 = vunpack.c.h.b16 %v1672
    %v1691 = vunpack.c.l.b16 %v1673
    %v1692 = vunpack.c.h.b16 %v1673
    %v1693 = vunpack.c.l.b16 %v1674
    %v1694 = vunpack.c.h.b16 %v1674
    %v1695 = vunpack.c.l.b16 %v1675
    %v1696 = vunpack.c.h.b16 %v1675
    %v1697 = vunpack.c.l.b16 %v1676
    %v1698 = vunpack.c.h.b16 %v1676
    %v1699 = vunpack.c.l.b16 %v1677
    %v1700 = vunpack.c.h.b16 %v1677
    %v1701 = vunpack.c.l.b16 %v1678
    %v1702 = vunpack.c.h.b16 %v1678
    %v1703 = vpack.c.b16 %v1689, %v1687
    %v1704 = vpack.c.b16 %v1690, %v1688
    %v1705 = vpack.c.b16 %v1693, %v1691
    %v1706 = vpack.c.b16 %v1694, %v1692
    %v1707 = vpack.c.b16 %v1697, %v1695
    %v1708 = vpack.c.b16 %v1698, %v1696
    %v1709 = vpack.c.b16 %v1701, %v1699
    %v1710 = vpack.c.b16 %v1702, %v1700
    %1719 = vmatpush.bf16.msra.mxu0 0
    %1720 = vmatpush.bf16.msra.mxu0 0
    %1721 = vmatpush.bf16.msra.mxu0 0
    %1722 = vmatpush.bf16.msra.mxu0 0
    %1723 = vmatpush.bf16.msra.mxu0 %v1709
    %1724 = vmatpush.bf16.msra.mxu0 %v1707
    %1725 = vmatpush.bf16.msra.mxu0 %v1705
    %1726 = vmatpush.bf16.msra.mxu0 %v1703
    %1727 = vmatmul.bf16.gmra.mxu0 %v174
    %v1728 = vpop.f32.mrf.mxu0
    %v1729 = vadd.f32 0.0, %v1728
    %v1730 = vpop.f32.mrf.mxu0
    %1731 = vdwg.mxu0
    %1732 = vmatpush.bf16.msra.mxu0 0
    %1733 = vmatpush.bf16.msra.mxu0 0
    %1734 = vmatpush.bf16.msra.mxu0 0
    %1735 = vmatpush.bf16.msra.mxu0 0
    %1736 = vmatpush.bf16.msra.mxu0 %v1710
    %1737 = vmatpush.bf16.msra.mxu0 %v1708
    %1738 = vmatpush.bf16.msra.mxu0 %v1706
    %1739 = vmatpush.bf16.msra.mxu0 %v1704
    %1740 = vmatmul.bf16.gmra.mxu0 %v174
    %v1741 = vpop.f32.mrf.mxu0
    %v1742 = vadd.f32 0.0, %v1741
    %v1743 = vpop.f32.mrf.mxu0
    %1744 = vdwg.mxu0
    %v1745 = vadd.f32 %v1410, %v1729
    %v1746 = vadd.f32 %v1668, %v1742
    %v1747 = vxor.u32 %v1745, 2147483648
    %v1748 = vmul.f32 %v1747, 1.442695
    %v1749 = vpow.pop %v1748
    %v1750 = vadd.f32 %v1749, 1.0
    %v1751 = vrcp.pop %v1750
    %v1752 = vmul.f32 %v1750, %v1751
    %v1753 = vsub.f32 1.0, %v1752
    %v1754 = vmul.f32 %v1751, %v1753
    %v1755 = vadd.f32 %v1751, %v1754
    %vm1756 = vweird.f32 %v1750
    %vm1757 = vweird.f32 %v1751
    %vm1758 = vmor %vm1756, %vm1757
    %v1759 = vsel %vm1758, %v1751, %v1755
    %v1760 = vand.u32 2147483647, %v1750
    %vm1761 = vcmp.eq.f32.partialorder %v1760, 8.507059e+37
    %v1762 = vand.u32 %v1750, 2147483648
    %v1763 = vor.u32 1.1754944e-38, %v1762
    %v1764 = vsel %vm1761, %v1763, %v1759
    %v1765 = vmul.f32 1.0, %v1764
    %v1766 = vtanh.pop %v1745
    %v1767 = vmul.f32 %v1765, 0.0
    %1769 = vrot.lane.b32.xlu0 %v1766, 64
    %v1770 = vpop.permute.xlu0 %1769
    %v1772 = vmul.f32 %v1765, %v1770
    %1774 = vrot.lane.b32.xlu0 %v1772, 32
    %v1775 = vpop.permute.xlu0 %1774
    %v1777 = vadd.f32 %v1767, %v1775
    %v1778 = vtanh.pop %v1777
    %1780 = vrot.lane.b32.xlu0 %v1778, 64
    %v1781 = vpop.permute.xlu0 %1780
    %v1783 = vmul.f32 %v1765, %v1781
    %v1784 = vxor.u32 %v1746, 2147483648
    %v1785 = vmul.f32 %v1784, 1.442695
    %v1786 = vpow.pop %v1785
    %v1787 = vadd.f32 %v1786, 1.0
    %v1788 = vrcp.pop %v1787
    %v1789 = vmul.f32 %v1787, %v1788
    %v1790 = vsub.f32 1.0, %v1789
    %v1791 = vmul.f32 %v1788, %v1790
    %v1792 = vadd.f32 %v1788, %v1791
    %vm1793 = vweird.f32 %v1787
    %vm1794 = vweird.f32 %v1788
    %vm1795 = vmor %vm1793, %vm1794
    %v1796 = vsel %vm1795, %v1788, %v1792
    %v1797 = vand.u32 2147483647, %v1787
    %vm1798 = vcmp.eq.f32.partialorder %v1797, 8.507059e+37
    %v1799 = vand.u32 %v1787, 2147483648
    %v1800 = vor.u32 1.1754944e-38, %v1799
    %v1801 = vsel %vm1798, %v1800, %v1796
    %v1802 = vmul.f32 1.0, %v1801
    %v1803 = vtanh.pop %v1746
    %v1804 = vmul.f32 %v1802, 0.0
    %1806 = vrot.lane.b32.xlu0 %v1803, 64
    %v1807 = vpop.permute.xlu0 %1806
    %v1809 = vmul.f32 %v1802, %v1807
    %1811 = vrot.lane.b32.xlu0 %v1809, 32
    %v1812 = vpop.permute.xlu0 %1811
    %v1814 = vadd.f32 %v1804, %v1812
    %v1815 = vtanh.pop %v1814
    %1817 = vrot.lane.b32.xlu0 %v1815, 64
    %v1818 = vpop.permute.xlu0 %1817
    %v1820 = vmul.f32 %v1802, %v1818
    %v1821 = vsel %vm50, %v1783, 0.0
    %v1822 = vsel %vm50, %v1777, 0.0
    %v1823 = vsel %vm57, %v1820, 0.0
    %v1824 = vsel %vm57, %v1814, 0.0
    %v1825 = vsel %vm65, %v1820, 0.0
    %1827 = vrot.lane.b32.xlu0 %v1821, 32
    %v1828 = vpop.permute.xlu0 %1827
    %1831 = vrot.lane.b32.xlu0 %v1823, 64
    %v1832 = vpop.permute.xlu0 %1831
    %v1834 = vsel %vm303, %v1828, %v1832
    %v1835 = vpack.c.bf16 %v1834, %v1834
    %v1837 = vsel %vm172, %v1835, 0
    %1839 = vmatpush.bf16.msra.mxu0 0
    %1840 = vmatpush.bf16.msra.mxu0 0
    %1841 = vmatpush.bf16.msra.mxu0 0
    %1842 = vmatpush.bf16.msra.mxu0 0
    %1843 = vmatpush.bf16.msra.mxu0 %v1709
    %1844 = vmatpush.bf16.msra.mxu0 %v1707
    %1845 = vmatpush.bf16.msra.mxu0 %v1705
    %1846 = vmatpush.bf16.msra.mxu0 %v1703
    %1847 = vmatmul.bf16.gmra.mxu0 %v1837
    %v1848 = vpop.f32.mrf.mxu0
    %v1849 = vadd.f32 0.0, %v1848
    %v1850 = vpop.f32.mrf.mxu0
    %1851 = vdwg.mxu0
    %1852 = vmatpush.bf16.msra.mxu0 0
    %1853 = vmatpush.bf16.msra.mxu0 0
    %1854 = vmatpush.bf16.msra.mxu0 0
    %1855 = vmatpush.bf16.msra.mxu0 0
    %1856 = vmatpush.bf16.msra.mxu0 %v1710
    %1857 = vmatpush.bf16.msra.mxu0 %v1708
    %1858 = vmatpush.bf16.msra.mxu0 %v1706
    %1859 = vmatpush.bf16.msra.mxu0 %v1704
    %1860 = vmatmul.bf16.gmra.mxu0 %v1837
    %v1861 = vpop.f32.mrf.mxu0
    %v1862 = vadd.f32 0.0, %v1861
    %v1863 = vpop.f32.mrf.mxu0
    %1864 = vdwg.mxu0
    %v1865 = vadd.f32 %v1445, %v1849
    %v1866 = vadd.f32 %v1637, %v1862
    %v1867 = vxor.u32 %v1865, 2147483648
    %v1868 = vmul.f32 %v1867, 1.442695
    %v1869 = vpow.pop %v1868
    %v1870 = vadd.f32 %v1869, 1.0
    %v1871 = vrcp.pop %v1870
    %v1872 = vmul.f32 %v1870, %v1871
    %v1873 = vsub.f32 1.0, %v1872
    %v1874 = vmul.f32 %v1871, %v1873
    %v1875 = vadd.f32 %v1871, %v1874
    %vm1876 = vweird.f32 %v1870
    %vm1877 = vweird.f32 %v1871
    %vm1878 = vmor %vm1876, %vm1877
    %v1879 = vsel %vm1878, %v1871, %v1875
    %v1880 = vand.u32 2147483647, %v1870
    %vm1881 = vcmp.eq.f32.partialorder %v1880, 8.507059e+37
    %v1882 = vand.u32 %v1870, 2147483648
    %v1883 = vor.u32 1.1754944e-38, %v1882
    %v1884 = vsel %vm1881, %v1883, %v1879
    %v1885 = vmul.f32 1.0, %v1884
    %v1886 = vtanh.pop %v1865
    %v1887 = vmul.f32 %v1885, %v1822
    %1889 = vrot.lane.b32.xlu0 %v1886, 64
    %v1890 = vpop.permute.xlu0 %1889
    %v1892 = vmul.f32 %v1885, %v1890
    %1894 = vrot.lane.b32.xlu0 %v1892, 32
    %v1895 = vpop.permute.xlu0 %1894
    %v1897 = vadd.f32 %v1887, %v1895
    %v1898 = vtanh.pop %v1897
    %1900 = vrot.lane.b32.xlu0 %v1898, 64
    %v1901 = vpop.permute.xlu0 %1900
    %v1903 = vmul.f32 %v1885, %v1901
    %v1904 = vxor.u32 %v1866, 2147483648
    %v1905 = vmul.f32 %v1904, 1.442695
    %v1906 = vpow.pop %v1905
    %v1907 = vadd.f32 %v1906, 1.0
    %v1908 = vrcp.pop %v1907
    %v1909 = vmul.f32 %v1907, %v1908
    %v1910 = vsub.f32 1.0, %v1909
    %v1911 = vmul.f32 %v1908, %v1910
    %v1912 = vadd.f32 %v1908, %v1911
    %vm1913 = vweird.f32 %v1907
    %vm1914 = vweird.f32 %v1908
    %vm1915 = vmor %vm1913, %vm1914
    %v1916 = vsel %vm1915, %v1908, %v1912
    %v1917 = vand.u32 2147483647, %v1907
    %vm1918 = vcmp.eq.f32.partialorder %v1917, 8.507059e+37
    %v1919 = vand.u32 %v1907, 2147483648
    %v1920 = vor.u32 1.1754944e-38, %v1919
    %v1921 = vsel %vm1918, %v1920, %v1916
    %v1922 = vmul.f32 1.0, %v1921
    %v1923 = vtanh.pop %v1866
    %v1924 = vmul.f32 %v1922, %v1824
    %1926 = vrot.lane.b32.xlu0 %v1923, 64
    %v1927 = vpop.permute.xlu0 %1926
    %v1929 = vmul.f32 %v1922, %v1927
    %1931 = vrot.lane.b32.xlu0 %v1929, 32
    %v1932 = vpop.permute.xlu0 %1931
    %v1934 = vadd.f32 %v1924, %v1932
    %v1935 = vtanh.pop %v1934
    %1937 = vrot.lane.b32.xlu0 %v1935, 64
    %v1938 = vpop.permute.xlu0 %1937
    %v1940 = vmul.f32 %v1922, %v1938
    %v1941 = vsel %vm51, %v1903, %v1821
    %v1942 = vsel %vm51, %v1897, %v1822
    %v1943 = vsel %vm56, %v1940, %v1823
    %v1944 = vsel %vm56, %v1934, %v1824
    %v1945 = vsel %vm64, %v1940, %v1825
    %1947 = vrot.lane.b32.xlu0 %v1941, 32
    %v1948 = vpop.permute.xlu0 %1947
    %1951 = vrot.lane.b32.xlu0 %v1943, 64
    %v1952 = vpop.permute.xlu0 %1951
    %v1954 = vsel %vm303, %v1948, %v1952
    %v1955 = vpack.c.bf16 %v1954, %v1954
    %v1957 = vsel %vm172, %v1955, 0
    %1959 = vmatpush.bf16.msra.mxu0 0
    %1960 = vmatpush.bf16.msra.mxu0 0
    %1961 = vmatpush.bf16.msra.mxu0 0
    %1962 = vmatpush.bf16.msra.mxu0 0
    %1963 = vmatpush.bf16.msra.mxu0 %v1709
    %1964 = vmatpush.bf16.msra.mxu0 %v1707
    %1965 = vmatpush.bf16.msra.mxu0 %v1705
    %1966 = vmatpush.bf16.msra.mxu0 %v1703
    %1967 = vmatmul.bf16.gmra.mxu0 %v1957
    %v1968 = vpop.f32.mrf.mxu0
    %v1969 = vadd.f32 0.0, %v1968
    %v1970 = vpop.f32.mrf.mxu0
    %1971 = vdwg.mxu0
    %1972 = vmatpush.bf16.msra.mxu0 0
    %1973 = vmatpush.bf16.msra.mxu0 0
    %1974 = vmatpush.bf16.msra.mxu0 0
    %1975 = vmatpush.bf16.msra.mxu0 0
    %1976 = vmatpush.bf16.msra.mxu0 %v1710
    %1977 = vmatpush.bf16.msra.mxu0 %v1708
    %1978 = vmatpush.bf16.msra.mxu0 %v1706
    %1979 = vmatpush.bf16.msra.mxu0 %v1704
    %1980 = vmatmul.bf16.gmra.mxu0 %v1957
    %v1981 = vpop.f32.mrf.mxu0
    %v1982 = vadd.f32 0.0, %v1981
    %v1983 = vpop.f32.mrf.mxu0
    %1984 = vdwg.mxu0
    %v1985 = vadd.f32 %v1480, %v1969
    %v1986 = vadd.f32 %v1602, %v1982
    %v1987 = vxor.u32 %v1985, 2147483648
    %v1988 = vmul.f32 %v1987, 1.442695
    %v1989 = vpow.pop %v1988
    %v1990 = vadd.f32 %v1989, 1.0
    %v1991 = vrcp.pop %v1990
    %v1992 = vmul.f32 %v1990, %v1991
    %v1993 = vsub.f32 1.0, %v1992
    %v1994 = vmul.f32 %v1991, %v1993
    %v1995 = vadd.f32 %v1991, %v1994
    %vm1996 = vweird.f32 %v1990
    %vm1997 = vweird.f32 %v1991
    %vm1998 = vmor %vm1996, %vm1997
    %v1999 = vsel %vm1998, %v1991, %v1995
    %v2000 = vand.u32 2147483647, %v1990
    %vm2001 = vcmp.eq.f32.partialorder %v2000, 8.507059e+37
    %v2002 = vand.u32 %v1990, 2147483648
    %v2003 = vor.u32 1.1754944e-38, %v2002
    %v2004 = vsel %vm2001, %v2003, %v1999
    %v2005 = vmul.f32 1.0, %v2004
    %v2006 = vtanh.pop %v1985
    %v2007 = vmul.f32 %v2005, %v1942
    %2009 = vrot.lane.b32.xlu0 %v2006, 64
    %v2010 = vpop.permute.xlu0 %2009
    %v2012 = vmul.f32 %v2005, %v2010
    %2014 = vrot.lane.b32.xlu0 %v2012, 32
    %v2015 = vpop.permute.xlu0 %2014
    %v2017 = vadd.f32 %v2007, %v2015
    %v2018 = vtanh.pop %v2017
    %2020 = vrot.lane.b32.xlu0 %v2018, 64
    %v2021 = vpop.permute.xlu0 %2020
    %v2023 = vmul.f32 %v2005, %v2021
    %v2024 = vxor.u32 %v1986, 2147483648
    %v2025 = vmul.f32 %v2024, 1.442695
    %v2026 = vpow.pop %v2025
    %v2027 = vadd.f32 %v2026, 1.0
    %v2028 = vrcp.pop %v2027
    %v2029 = vmul.f32 %v2027, %v2028
    %v2030 = vsub.f32 1.0, %v2029
    %v2031 = vmul.f32 %v2028, %v2030
    %v2032 = vadd.f32 %v2028, %v2031
    %vm2033 = vweird.f32 %v2027
    %vm2034 = vweird.f32 %v2028
    %vm2035 = vmor %vm2033, %vm2034
    %v2036 = vsel %vm2035, %v2028, %v2032
    %v2037 = vand.u32 2147483647, %v2027
    %vm2038 = vcmp.eq.f32.partialorder %v2037, 8.507059e+37
    %v2039 = vand.u32 %v2027, 2147483648
    %v2040 = vor.u32 1.1754944e-38, %v2039
    %v2041 = vsel %vm2038, %v2040, %v2036
    %v2042 = vmul.f32 1.0, %v2041
    %v2043 = vtanh.pop %v1986
    %v2044 = vmul.f32 %v2042, %v1944
    %2046 = vrot.lane.b32.xlu0 %v2043, 64
    %v2047 = vpop.permute.xlu0 %2046
    %v2049 = vmul.f32 %v2042, %v2047
    %2051 = vrot.lane.b32.xlu0 %v2049, 32
    %v2052 = vpop.permute.xlu0 %2051
    %v2054 = vadd.f32 %v2044, %v2052
    %v2055 = vtanh.pop %v2054
    %2057 = vrot.lane.b32.xlu0 %v2055, 64
    %v2058 = vpop.permute.xlu0 %2057
    %v2060 = vmul.f32 %v2042, %v2058
    %v2061 = vsel %vm52, %v2023, %v1941
    %v2062 = vsel %vm52, %v2017, %v1942
    %v2063 = vsel %vm55, %v2060, %v1943
    %v2064 = vsel %vm55, %v2054, %v1944
    %v2065 = vsel %vm63, %v2060, %v1945
    %2067 = vrot.lane.b32.xlu0 %v2061, 32
    %v2068 = vpop.permute.xlu0 %2067
    %2071 = vrot.lane.b32.xlu0 %v2063, 64
    %v2072 = vpop.permute.xlu0 %2071
    %v2074 = vsel %vm303, %v2068, %v2072
    %v2075 = vpack.c.bf16 %v2074, %v2074
    %v2077 = vsel %vm172, %v2075, 0
    %2079 = vmatpush.bf16.msra.mxu0 0
    %2080 = vmatpush.bf16.msra.mxu0 0
    %2081 = vmatpush.bf16.msra.mxu0 0
    %2082 = vmatpush.bf16.msra.mxu0 0
    %2083 = vmatpush.bf16.msra.mxu0 %v1709
    %2084 = vmatpush.bf16.msra.mxu0 %v1707
    %2085 = vmatpush.bf16.msra.mxu0 %v1705
    %2086 = vmatpush.bf16.msra.mxu0 %v1703
    %2087 = vmatmul.bf16.gmra.mxu0 %v2077
    %v2088 = vpop.f32.mrf.mxu0
    %v2089 = vadd.f32 0.0, %v2088
    %v2090 = vpop.f32.mrf.mxu0
    %2091 = vdwg.mxu0
    %2092 = vmatpush.bf16.msra.mxu0 0
    %2093 = vmatpush.bf16.msra.mxu0 0
    %2094 = vmatpush.bf16.msra.mxu0 0
    %2095 = vmatpush.bf16.msra.mxu0 0
    %2096 = vmatpush.bf16.msra.mxu0 %v1710
    %2097 = vmatpush.bf16.msra.mxu0 %v1708
    %2098 = vmatpush.bf16.msra.mxu0 %v1706
    %2099 = vmatpush.bf16.msra.mxu0 %v1704
    %2100 = vmatmul.bf16.gmra.mxu0 %v2077
    %v2101 = vpop.f32.mrf.mxu0
    %v2102 = vadd.f32 0.0, %v2101
    %v2103 = vpop.f32.mrf.mxu0
    %2104 = vdwg.mxu0
    %v2105 = vadd.f32 %v1515, %v2089
    %v2106 = vadd.f32 %v1567, %v2102
    %v2107 = vxor.u32 %v2105, 2147483648
    %v2108 = vmul.f32 %v2107, 1.442695
    %v2109 = vpow.pop %v2108
    %v2110 = vadd.f32 %v2109, 1.0
    %v2111 = vrcp.pop %v2110
    %v2112 = vmul.f32 %v2110, %v2111
    %v2113 = vsub.f32 1.0, %v2112
    %v2114 = vmul.f32 %v2111, %v2113
    %v2115 = vadd.f32 %v2111, %v2114
    %vm2116 = vweird.f32 %v2110
    %vm2117 = vweird.f32 %v2111
    %vm2118 = vmor %vm2116, %vm2117
    %v2119 = vsel %vm2118, %v2111, %v2115
    %v2120 = vand.u32 2147483647, %v2110
    %vm2121 = vcmp.eq.f32.partialorder %v2120, 8.507059e+37
    %v2122 = vand.u32 %v2110, 2147483648
    %v2123 = vor.u32 1.1754944e-38, %v2122
    %v2124 = vsel %vm2121, %v2123, %v2119
    %v2125 = vmul.f32 1.0, %v2124
    %v2126 = vtanh.pop %v2105
    %v2127 = vmul.f32 %v2125, %v2062
    %2129 = vrot.lane.b32.xlu0 %v2126, 64
    %v2130 = vpop.permute.xlu0 %2129
    %v2132 = vmul.f32 %v2125, %v2130
    %2134 = vrot.lane.b32.xlu0 %v2132, 32
    %v2135 = vpop.permute.xlu0 %2134
    %v2137 = vadd.f32 %v2127, %v2135
    %v2138 = vtanh.pop %v2137
    %2140 = vrot.lane.b32.xlu0 %v2138, 64
    %v2141 = vpop.permute.xlu0 %2140
    %v2143 = vmul.f32 %v2125, %v2141
    %v2144 = vxor.u32 %v2106, 2147483648
    %v2145 = vmul.f32 %v2144, 1.442695
    %v2146 = vpow.pop %v2145
    %v2147 = vadd.f32 %v2146, 1.0
    %v2148 = vrcp.pop %v2147
    %v2149 = vmul.f32 %v2147, %v2148
    %v2150 = vsub.f32 1.0, %v2149
    %v2151 = vmul.f32 %v2148, %v2150
    %v2152 = vadd.f32 %v2148, %v2151
    %vm2153 = vweird.f32 %v2147
    %vm2154 = vweird.f32 %v2148
    %vm2155 = vmor %vm2153, %vm2154
    %v2156 = vsel %vm2155, %v2148, %v2152
    %v2157 = vand.u32 2147483647, %v2147
    %vm2158 = vcmp.eq.f32.partialorder %v2157, 8.507059e+37
    %v2159 = vand.u32 %v2147, 2147483648
    %v2160 = vor.u32 1.1754944e-38, %v2159
    %v2161 = vsel %vm2158, %v2160, %v2156
    %v2162 = vmul.f32 1.0, %v2161
    %v2163 = vtanh.pop %v2106
    %v2164 = vmul.f32 %v2162, %v2064
    %2166 = vrot.lane.b32.xlu0 %v2163, 64
    %v2167 = vpop.permute.xlu0 %2166
    %v2169 = vmul.f32 %v2162, %v2167
    %2171 = vrot.lane.b32.xlu0 %v2169, 32
    %v2172 = vpop.permute.xlu0 %2171
    %v2174 = vadd.f32 %v2164, %v2172
    %v2175 = vtanh.pop %v2174
    %2177 = vrot.lane.b32.xlu0 %v2175, 64
    %v2178 = vpop.permute.xlu0 %2177
    %v2180 = vmul.f32 %v2162, %v2178
    %v2181 = vsel %vm53, %v2143, %v2061
    %v2182 = vsel %vm53, %v2137, %v2062
    %v2183 = vsel %vm54, %v2180, %v2063
    %v2184 = vsel %vm54, %v2174, %v2064
    %v2185 = vsel %vm62, %v2180, %v2065
    %2187 = vrot.lane.b32.xlu0 %v2181, 32
    %v2188 = vpop.permute.xlu0 %2187
    %2191 = vrot.lane.b32.xlu0 %v2183, 64
    %v2192 = vpop.permute.xlu0 %2191
    %v2194 = vsel %vm303, %v2188, %v2192
    %v2195 = vpack.c.bf16 %v2194, %v2194
    %v2197 = vsel %vm172, %v2195, 0
    %2199 = vmatpush.bf16.msra.mxu0 0
    %2200 = vmatpush.bf16.msra.mxu0 0
    %2201 = vmatpush.bf16.msra.mxu0 0
    %2202 = vmatpush.bf16.msra.mxu0 0
    %2203 = vmatpush.bf16.msra.mxu0 %v1709
    %2204 = vmatpush.bf16.msra.mxu0 %v1707
    %2205 = vmatpush.bf16.msra.mxu0 %v1705
    %2206 = vmatpush.bf16.msra.mxu0 %v1703
    %2207 = vmatmul.bf16.gmra.mxu0 %v2197
    %v2208 = vpop.f32.mrf.mxu0
    %v2209 = vadd.f32 0.0, %v2208
    %v2210 = vpop.f32.mrf.mxu0
    %2211 = vdwg.mxu0
    %2212 = vmatpush.bf16.msra.mxu0 0
    %2213 = vmatpush.bf16.msra.mxu0 0
    %2214 = vmatpush.bf16.msra.mxu0 0
    %2215 = vmatpush.bf16.msra.mxu0 0
    %2216 = vmatpush.bf16.msra.mxu0 %v1710
    %2217 = vmatpush.bf16.msra.mxu0 %v1708
    %2218 = vmatpush.bf16.msra.mxu0 %v1706
    %2219 = vmatpush.bf16.msra.mxu0 %v1704
    %2220 = vmatmul.bf16.gmra.mxu0 %v2197
    %v2221 = vpop.f32.mrf.mxu0
    %v2222 = vadd.f32 0.0, %v2221
    %v2223 = vpop.f32.mrf.mxu0
    %2224 = vdwg.mxu0
    %v2225 = vadd.f32 %v1554, %v2209
    %v2226 = vadd.f32 %v1528, %v2222
    %v2227 = vxor.u32 %v2225, 2147483648
    %v2228 = vmul.f32 %v2227, 1.442695
    %v2229 = vpow.pop %v2228
    %v2230 = vadd.f32 %v2229, 1.0
    %v2231 = vrcp.pop %v2230
    %v2232 = vmul.f32 %v2230, %v2231
    %v2233 = vsub.f32 1.0, %v2232
    %v2234 = vmul.f32 %v2231, %v2233
    %v2235 = vadd.f32 %v2231, %v2234
    %vm2236 = vweird.f32 %v2230
    %vm2237 = vweird.f32 %v2231
    %vm2238 = vmor %vm2236, %vm2237
    %v2239 = vsel %vm2238, %v2231, %v2235
    %v2240 = vand.u32 2147483647, %v2230
    %vm2241 = vcmp.eq.f32.partialorder %v2240, 8.507059e+37
    %v2242 = vand.u32 %v2230, 2147483648
    %v2243 = vor.u32 1.1754944e-38, %v2242
    %v2244 = vsel %vm2241, %v2243, %v2239
    %v2245 = vmul.f32 1.0, %v2244
    %v2246 = vtanh.pop %v2225
    %v2247 = vmul.f32 %v2245, %v2182
    %2249 = vrot.lane.b32.xlu0 %v2246, 64
    %v2250 = vpop.permute.xlu0 %2249
    %v2252 = vmul.f32 %v2245, %v2250
    %2254 = vrot.lane.b32.xlu0 %v2252, 32
    %v2255 = vpop.permute.xlu0 %2254
    %v2257 = vadd.f32 %v2247, %v2255
    %v2258 = vtanh.pop %v2257
    %2260 = vrot.lane.b32.xlu0 %v2258, 64
    %v2261 = vpop.permute.xlu0 %2260
    %v2263 = vmul.f32 %v2245, %v2261
    %v2264 = vxor.u32 %v2226, 2147483648
    %v2265 = vmul.f32 %v2264, 1.442695
    %v2266 = vpow.pop %v2265
    %v2267 = vadd.f32 %v2266, 1.0
    %v2268 = vrcp.pop %v2267
    %v2269 = vmul.f32 %v2267, %v2268
    %v2270 = vsub.f32 1.0, %v2269
    %v2271 = vmul.f32 %v2268, %v2270
    %v2272 = vadd.f32 %v2268, %v2271
    %vm2273 = vweird.f32 %v2267
    %vm2274 = vweird.f32 %v2268
    %vm2275 = vmor %vm2273, %vm2274
    %v2276 = vsel %vm2275, %v2268, %v2272
    %v2277 = vand.u32 2147483647, %v2267
    %vm2278 = vcmp.eq.f32.partialorder %v2277, 8.507059e+37
    %v2279 = vand.u32 %v2267, 2147483648
    %v2280 = vor.u32 1.1754944e-38, %v2279
    %v2281 = vsel %vm2278, %v2280, %v2276
    %v2282 = vmul.f32 1.0, %v2281
    %v2283 = vtanh.pop %v2226
    %v2284 = vmul.f32 %v2282, %v2184
    %2286 = vrot.lane.b32.xlu0 %v2283, 64
    %v2287 = vpop.permute.xlu0 %2286
    %v2289 = vmul.f32 %v2282, %v2287
    %2291 = vrot.lane.b32.xlu0 %v2289, 32
    %v2292 = vpop.permute.xlu0 %2291
    %v2294 = vadd.f32 %v2284, %v2292
    %v2295 = vtanh.pop %v2294
    %2297 = vrot.lane.b32.xlu0 %v2295, 64
    %v2298 = vpop.permute.xlu0 %2297
    %v2300 = vmul.f32 %v2282, %v2298
    %v2301 = vsel %vm54, %v2263, %v2181
    %v2302 = vsel %vm54, %v2257, %v2182
    %v2303 = vsel %vm53, %v2300, %v2183
    %v2304 = vsel %vm53, %v2294, %v2184
    %v2305 = vsel %vm61, %v2300, %v2185
    %2307 = vrot.lane.b32.xlu0 %v2301, 32
    %v2308 = vpop.permute.xlu0 %2307
    %2311 = vrot.lane.b32.xlu0 %v2303, 64
    %v2312 = vpop.permute.xlu0 %2311
    %v2314 = vsel %vm303, %v2308, %v2312
    %v2315 = vpack.c.bf16 %v2314, %v2314
    %v2317 = vsel %vm172, %v2315, 0
    %2319 = vmatpush.bf16.msra.mxu0 0
    %2320 = vmatpush.bf16.msra.mxu0 0
    %2321 = vmatpush.bf16.msra.mxu0 0
    %2322 = vmatpush.bf16.msra.mxu0 0
    %2323 = vmatpush.bf16.msra.mxu0 %v1709
    %2324 = vmatpush.bf16.msra.mxu0 %v1707
    %2325 = vmatpush.bf16.msra.mxu0 %v1705
    %2326 = vmatpush.bf16.msra.mxu0 %v1703
    %2327 = vmatmul.bf16.gmra.mxu0 %v2317
    %v2328 = vpop.f32.mrf.mxu0
    %v2329 = vadd.f32 0.0, %v2328
    %v2330 = vpop.f32.mrf.mxu0
    %2331 = vdwg.mxu0
    %2332 = vmatpush.bf16.msra.mxu0 0
    %2333 = vmatpush.bf16.msra.mxu0 0
    %2334 = vmatpush.bf16.msra.mxu0 0
    %2335 = vmatpush.bf16.msra.mxu0 0
    %2336 = vmatpush.bf16.msra.mxu0 %v1710
    %2337 = vmatpush.bf16.msra.mxu0 %v1708
    %2338 = vmatpush.bf16.msra.mxu0 %v1706
    %2339 = vmatpush.bf16.msra.mxu0 %v1704
    %2340 = vmatmul.bf16.gmra.mxu0 %v2317
    %v2341 = vpop.f32.mrf.mxu0
    %v2342 = vadd.f32 0.0, %v2341
    %v2343 = vpop.f32.mrf.mxu0
    %2344 = vdwg.mxu0
    %v2345 = vadd.f32 %v1589, %v2329
    %v2346 = vadd.f32 %v1493, %v2342
    %v2347 = vxor.u32 %v2345, 2147483648
    %v2348 = vmul.f32 %v2347, 1.442695
    %v2349 = vpow.pop %v2348
    %v2350 = vadd.f32 %v2349, 1.0
    %v2351 = vrcp.pop %v2350
    %v2352 = vmul.f32 %v2350, %v2351
    %v2353 = vsub.f32 1.0, %v2352
    %v2354 = vmul.f32 %v2351, %v2353
    %v2355 = vadd.f32 %v2351, %v2354
    %vm2356 = vweird.f32 %v2350
    %vm2357 = vweird.f32 %v2351
    %vm2358 = vmor %vm2356, %vm2357
    %v2359 = vsel %vm2358, %v2351, %v2355
    %v2360 = vand.u32 2147483647, %v2350
    %vm2361 = vcmp.eq.f32.partialorder %v2360, 8.507059e+37
    %v2362 = vand.u32 %v2350, 2147483648
    %v2363 = vor.u32 1.1754944e-38, %v2362
    %v2364 = vsel %vm2361, %v2363, %v2359
    %v2365 = vmul.f32 1.0, %v2364
    %v2366 = vtanh.pop %v2345
    %v2367 = vmul.f32 %v2365, %v2302
    %2369 = vrot.lane.b32.xlu0 %v2366, 64
    %v2370 = vpop.permute.xlu0 %2369
    %v2372 = vmul.f32 %v2365, %v2370
    %2374 = vrot.lane.b32.xlu0 %v2372, 32
    %v2375 = vpop.permute.xlu0 %2374
    %v2377 = vadd.f32 %v2367, %v2375
    %v2378 = vtanh.pop %v2377
    %2380 = vrot.lane.b32.xlu0 %v2378, 64
    %v2381 = vpop.permute.xlu0 %2380
    %v2383 = vmul.f32 %v2365, %v2381
    %v2384 = vxor.u32 %v2346, 2147483648
    %v2385 = vmul.f32 %v2384, 1.442695
    %v2386 = vpow.pop %v2385
    %v2387 = vadd.f32 %v2386, 1.0
    %v2388 = vrcp.pop %v2387
    %v2389 = vmul.f32 %v2387, %v2388
    %v2390 = vsub.f32 1.0, %v2389
    %v2391 = vmul.f32 %v2388, %v2390
    %v2392 = vadd.f32 %v2388, %v2391
    %vm2393 = vweird.f32 %v2387
    %vm2394 = vweird.f32 %v2388
    %vm2395 = vmor %vm2393, %vm2394
    %v2396 = vsel %vm2395, %v2388, %v2392
    %v2397 = vand.u32 2147483647, %v2387
    %vm2398 = vcmp.eq.f32.partialorder %v2397, 8.507059e+37
    %v2399 = vand.u32 %v2387, 2147483648
    %v2400 = vor.u32 1.1754944e-38, %v2399
    %v2401 = vsel %vm2398, %v2400, %v2396
    %v2402 = vmul.f32 1.0, %v2401
    %v2403 = vtanh.pop %v2346
    %v2404 = vmul.f32 %v2402, %v2304
    %2406 = vrot.lane.b32.xlu0 %v2403, 64
    %v2407 = vpop.permute.xlu0 %2406
    %v2409 = vmul.f32 %v2402, %v2407
    %2411 = vrot.lane.b32.xlu0 %v2409, 32
    %v2412 = vpop.permute.xlu0 %2411
    %v2414 = vadd.f32 %v2404, %v2412
    %v2415 = vtanh.pop %v2414
    %2417 = vrot.lane.b32.xlu0 %v2415, 64
    %v2418 = vpop.permute.xlu0 %2417
    %v2420 = vmul.f32 %v2402, %v2418
    %v2421 = vsel %vm55, %v2383, %v2301
    %v2422 = vsel %vm55, %v2377, %v2302
    %v2423 = vsel %vm52, %v2420, %v2303
    %v2424 = vsel %vm52, %v2414, %v2304
    %v2425 = vsel %vm60, %v2420, %v2305
    %2427 = vrot.lane.b32.xlu0 %v2421, 32
    %v2428 = vpop.permute.xlu0 %2427
    %2431 = vrot.lane.b32.xlu0 %v2423, 64
    %v2432 = vpop.permute.xlu0 %2431
    %v2434 = vsel %vm303, %v2428, %v2432
    %v2435 = vpack.c.bf16 %v2434, %v2434
    %v2437 = vsel %vm172, %v2435, 0
    %2439 = vmatpush.bf16.msra.mxu0 0
    %2440 = vmatpush.bf16.msra.mxu0 0
    %2441 = vmatpush.bf16.msra.mxu0 0
    %2442 = vmatpush.bf16.msra.mxu0 0
    %2443 = vmatpush.bf16.msra.mxu0 %v1709
    %2444 = vmatpush.bf16.msra.mxu0 %v1707
    %2445 = vmatpush.bf16.msra.mxu0 %v1705
    %2446 = vmatpush.bf16.msra.mxu0 %v1703
    %2447 = vmatmul.bf16.gmra.mxu0 %v2437
    %v2448 = vpop.f32.mrf.mxu0
    %v2449 = vadd.f32 0.0, %v2448
    %v2450 = vpop.f32.mrf.mxu0
    %2451 = vdwg.mxu0
    %2452 = vmatpush.bf16.msra.mxu0 0
    %2453 = vmatpush.bf16.msra.mxu0 0
    %2454 = vmatpush.bf16.msra.mxu0 0
    %2455 = vmatpush.bf16.msra.mxu0 0
    %2456 = vmatpush.bf16.msra.mxu0 %v1710
    %2457 = vmatpush.bf16.msra.mxu0 %v1708
    %2458 = vmatpush.bf16.msra.mxu0 %v1706
    %2459 = vmatpush.bf16.msra.mxu0 %v1704
    %2460 = vmatmul.bf16.gmra.mxu0 %v2437
    %v2461 = vpop.f32.mrf.mxu0
    %v2462 = vadd.f32 0.0, %v2461
    %v2463 = vpop.f32.mrf.mxu0
    %2464 = vdwg.mxu0
    %v2465 = vadd.f32 %v1624, %v2449
    %v2466 = vadd.f32 %v1458, %v2462
    %v2467 = vxor.u32 %v2465, 2147483648
    %v2468 = vmul.f32 %v2467, 1.442695
    %v2469 = vpow.pop %v2468
    %v2470 = vadd.f32 %v2469, 1.0
    %v2471 = vrcp.pop %v2470
    %v2472 = vmul.f32 %v2470, %v2471
    %v2473 = vsub.f32 1.0, %v2472
    %v2474 = vmul.f32 %v2471, %v2473
    %v2475 = vadd.f32 %v2471, %v2474
    %vm2476 = vweird.f32 %v2470
    %vm2477 = vweird.f32 %v2471
    %vm2478 = vmor %vm2476, %vm2477
    %v2479 = vsel %vm2478, %v2471, %v2475
    %v2480 = vand.u32 2147483647, %v2470
    %vm2481 = vcmp.eq.f32.partialorder %v2480, 8.507059e+37
    %v2482 = vand.u32 %v2470, 2147483648
    %v2483 = vor.u32 1.1754944e-38, %v2482
    %v2484 = vsel %vm2481, %v2483, %v2479
    %v2485 = vmul.f32 1.0, %v2484
    %v2486 = vtanh.pop %v2465
    %v2487 = vmul.f32 %v2485, %v2422
    %2489 = vrot.lane.b32.xlu0 %v2486, 64
    %v2490 = vpop.permute.xlu0 %2489
    %v2492 = vmul.f32 %v2485, %v2490
    %2494 = vrot.lane.b32.xlu0 %v2492, 32
    %v2495 = vpop.permute.xlu0 %2494
    %v2497 = vadd.f32 %v2487, %v2495
    %v2498 = vtanh.pop %v2497
    %2500 = vrot.lane.b32.xlu0 %v2498, 64
    %v2501 = vpop.permute.xlu0 %2500
    %v2503 = vmul.f32 %v2485, %v2501
    %v2504 = vxor.u32 %v2466, 2147483648
    %v2505 = vmul.f32 %v2504, 1.442695
    %v2506 = vpow.pop %v2505
    %v2507 = vadd.f32 %v2506, 1.0
    %v2508 = vrcp.pop %v2507
    %v2509 = vmul.f32 %v2507, %v2508
    %v2510 = vsub.f32 1.0, %v2509
    %v2511 = vmul.f32 %v2508, %v2510
    %v2512 = vadd.f32 %v2508, %v2511
    %vm2513 = vweird.f32 %v2507
    %vm2514 = vweird.f32 %v2508
    %vm2515 = vmor %vm2513, %vm2514
    %v2516 = vsel %vm2515, %v2508, %v2512
    %v2517 = vand.u32 2147483647, %v2507
    %vm2518 = vcmp.eq.f32.partialorder %v2517, 8.507059e+37
    %v2519 = vand.u32 %v2507, 2147483648
    %v2520 = vor.u32 1.1754944e-38, %v2519
    %v2521 = vsel %vm2518, %v2520, %v2516
    %v2522 = vmul.f32 1.0, %v2521
    %v2523 = vtanh.pop %v2466
    %v2524 = vmul.f32 %v2522, %v2424
    %2526 = vrot.lane.b32.xlu0 %v2523, 64
    %v2527 = vpop.permute.xlu0 %2526
    %v2529 = vmul.f32 %v2522, %v2527
    %2531 = vrot.lane.b32.xlu0 %v2529, 32
    %v2532 = vpop.permute.xlu0 %2531
    %v2534 = vadd.f32 %v2524, %v2532
    %v2535 = vtanh.pop %v2534
    %2537 = vrot.lane.b32.xlu0 %v2535, 64
    %v2538 = vpop.permute.xlu0 %2537
    %v2540 = vmul.f32 %v2522, %v2538
    %v2541 = vsel %vm56, %v2503, %v2421
    %v2542 = vsel %vm56, %v2497, %v2422
    %v2543 = vsel %vm51, %v2540, %v2423
    %v2544 = vsel %vm51, %v2534, %v2424
    %v2545 = vsel %vm59, %v2540, %v2425
    %2547 = vrot.lane.b32.xlu0 %v2541, 32
    %v2548 = vpop.permute.xlu0 %2547
    %2551 = vrot.lane.b32.xlu0 %v2543, 64
    %v2552 = vpop.permute.xlu0 %2551
    %v2554 = vsel %vm303, %v2548, %v2552
    %v2555 = vpack.c.bf16 %v2554, %v2554
    %v2557 = vsel %vm172, %v2555, 0
    %2559 = vmatpush.bf16.msra.mxu0 0
    %2560 = vmatpush.bf16.msra.mxu0 0
    %2561 = vmatpush.bf16.msra.mxu0 0
    %2562 = vmatpush.bf16.msra.mxu0 0
    %2563 = vmatpush.bf16.msra.mxu0 %v1709
    %2564 = vmatpush.bf16.msra.mxu0 %v1707
    %2565 = vmatpush.bf16.msra.mxu0 %v1705
    %2566 = vmatpush.bf16.msra.mxu0 %v1703
    %2567 = vmatmul.bf16.gmra.mxu0 %v2557
    %v2568 = vpop.f32.mrf.mxu0
    %v2569 = vadd.f32 0.0, %v2568
    %v2570 = vpop.f32.mrf.mxu0
    %2571 = vdwg.mxu0
    %2572 = vmatpush.bf16.msra.mxu0 0
    %2573 = vmatpush.bf16.msra.mxu0 0
    %2574 = vmatpush.bf16.msra.mxu0 0
    %2575 = vmatpush.bf16.msra.mxu0 0
    %2576 = vmatpush.bf16.msra.mxu0 %v1710
    %2577 = vmatpush.bf16.msra.mxu0 %v1708
    %2578 = vmatpush.bf16.msra.mxu0 %v1706
    %2579 = vmatpush.bf16.msra.mxu0 %v1704
    %2580 = vmatmul.bf16.gmra.mxu0 %v2557
    %v2581 = vpop.f32.mrf.mxu0
    %v2582 = vadd.f32 0.0, %v2581
    %v2583 = vpop.f32.mrf.mxu0
    %2584 = vdwg.mxu0
    %v2585 = vadd.f32 %v1655, %v2569
    %v2586 = vadd.f32 %v1423, %v2582
    %v2587 = vxor.u32 %v2585, 2147483648
    %v2588 = vmul.f32 %v2587, 1.442695
    %v2589 = vpow.pop %v2588
    %v2590 = vadd.f32 %v2589, 1.0
    %v2591 = vrcp.pop %v2590
    %v2592 = vmul.f32 %v2590, %v2591
    %v2593 = vsub.f32 1.0, %v2592
    %v2594 = vmul.f32 %v2591, %v2593
    %v2595 = vadd.f32 %v2591, %v2594
    %vm2596 = vweird.f32 %v2590
    %vm2597 = vweird.f32 %v2591
    %vm2598 = vmor %vm2596, %vm2597
    %v2599 = vsel %vm2598, %v2591, %v2595
    %v2600 = vand.u32 2147483647, %v2590
    %vm2601 = vcmp.eq.f32.partialorder %v2600, 8.507059e+37
    %v2602 = vand.u32 %v2590, 2147483648
    %v2603 = vor.u32 1.1754944e-38, %v2602
    %v2604 = vsel %vm2601, %v2603, %v2599
    %v2605 = vmul.f32 1.0, %v2604
    %v2606 = vtanh.pop %v2585
    %v2607 = vmul.f32 %v2605, %v2542
    %2609 = vrot.lane.b32.xlu0 %v2606, 64
    %v2610 = vpop.permute.xlu0 %2609
    %v2612 = vmul.f32 %v2605, %v2610
    %2614 = vrot.lane.b32.xlu0 %v2612, 32
    %v2615 = vpop.permute.xlu0 %2614
    %v2617 = vadd.f32 %v2607, %v2615
    %v2618 = vtanh.pop %v2617
    %2620 = vrot.lane.b32.xlu0 %v2618, 64
    %v2621 = vpop.permute.xlu0 %2620
    %v2623 = vmul.f32 %v2605, %v2621
    %v2624 = vxor.u32 %v2586, 2147483648
    %v2625 = vmul.f32 %v2624, 1.442695
    %v2626 = vpow.pop %v2625
    %v2627 = vadd.f32 %v2626, 1.0
    %v2628 = vrcp.pop %v2627
    %v2629 = vmul.f32 %v2627, %v2628
    %v2630 = vsub.f32 1.0, %v2629
    %v2631 = vmul.f32 %v2628, %v2630
    %v2632 = vadd.f32 %v2628, %v2631
    %vm2633 = vweird.f32 %v2627
    %vm2634 = vweird.f32 %v2628
    %vm2635 = vmor %vm2633, %vm2634
    %v2636 = vsel %vm2635, %v2628, %v2632
    %v2637 = vand.u32 2147483647, %v2627
    %vm2638 = vcmp.eq.f32.partialorder %v2637, 8.507059e+37
    %v2639 = vand.u32 %v2627, 2147483648
    %v2640 = vor.u32 1.1754944e-38, %v2639
    %v2641 = vsel %vm2638, %v2640, %v2636
    %v2642 = vmul.f32 1.0, %v2641
    %v2643 = vtanh.pop %v2586
    %v2644 = vmul.f32 %v2642, %v2544
    %2646 = vrot.lane.b32.xlu0 %v2643, 64
    %v2647 = vpop.permute.xlu0 %2646
    %v2649 = vmul.f32 %v2642, %v2647
    %2651 = vrot.lane.b32.xlu0 %v2649, 32
    %v2652 = vpop.permute.xlu0 %2651
    %v2654 = vadd.f32 %v2644, %v2652
    %v2655 = vtanh.pop %v2654
    %2657 = vrot.lane.b32.xlu0 %v2655, 64
    %v2658 = vpop.permute.xlu0 %2657
    %v2660 = vmul.f32 %v2642, %v2658
    %v2661 = vsel %vm57, %v2623, %v2541
    %v2662 = vsel %vm58, %v2660, %v2545
    %2664 = vrot.lane.b32.xlu0 %v2661, 32
    %v2665 = vpop.permute.xlu0 %2664
    %2668 = vrot.lane.b32.xlu0 %v2662, 64
    %v2669 = vpop.permute.xlu0 %2668
    %v2671 = vsel %vm303, %v2665, %v2669
    %v2672 = vld [vmem:[%s8] sm:$0xff]
    %v2673 = vld [vmem:[%s8 + $0x8] sm:$0xff]
    %v2674 = vld [vmem:[%s8 + $0x10] sm:$0xff]
    %v2675 = vld [vmem:[%s8 + $0x18] sm:$0xff]
    %v2676 = vld [vmem:[%s8 + $0x20] sm:$0xff]
    %v2677 = vld [vmem:[%s8 + $0x28] sm:$0xff]
    %v2678 = vld [vmem:[%s8 + $0x30] sm:$0xff]
    %v2679 = vld [vmem:[%s8 + $0x38] sm:$0xff]
    %v2680 = vld [vmem:[%s9] sm:$0x1]
    %v2682 = vperm.slane %v2680, 0
    %v2685 = vsel %vm172, %v2671, 0
    %2687 = vmatpush.msra.mxu0 0.0
    %2688 = vmatpush.msra.mxu0 0.0
    %2689 = vmatpush.msra.mxu0 0.0
    %2690 = vmatpush.msra.mxu0 0.0
    %2691 = vmatpush.msra.mxu0 0.0
    %2692 = vmatpush.msra.mxu0 0.0
    %2693 = vmatpush.msra.mxu0 0.0
    %2694 = vmatpush.msra.mxu0 0.0
    %2695 = vmatpush.msra.mxu0 %v2679
    %2696 = vmatpush.msra.mxu0 %v2678
    %2697 = vmatpush.msra.mxu0 %v2677
    %2698 = vmatpush.msra.mxu0 %v2676
    %2699 = vmatpush.msra.mxu0 %v2675
    %2700 = vmatpush.msra.mxu0 %v2674
    %2701 = vmatpush.msra.mxu0 %v2673
    %2702 = vmatpush.msra.mxu0 %v2672
    %2703 = vmatmul.f32.gmra.mxu0 %v2685
    %v2704 = vpop.f32.mrf.mxu0
    %v2705 = vadd.f32 %v2682, %v2704
    %2706 = vdwg.mxu0
    %v2707 = vmax.f32 %v2705, 0.0
    %v2708 = vld [vmem:[%s10] sm:$0xff]
    %v2709 = vld [vmem:[%s10 + $0x8] sm:$0xff]
    %v2710 = vld [vmem:[%s10 + $0x10] sm:$0xff]
    %v2711 = vld [vmem:[%s10 + $0x18] sm:$0xff]
    %v2712 = vld [vmem:[%s11] sm:$0x1]
    %v2714 = vperm.slane %v2712, 0
    %v2717 = vsel %vm303, %v2707, 0
    %2719 = vmatpush.msra.mxu0 0.0
    %2720 = vmatpush.msra.mxu0 0.0
    %2721 = vmatpush.msra.mxu0 0.0
    %2722 = vmatpush.msra.mxu0 0.0
    %2723 = vmatpush.msra.mxu0 0.0
    %2724 = vmatpush.msra.mxu0 0.0
    %2725 = vmatpush.msra.mxu0 0.0
    %2726 = vmatpush.msra.mxu0 0.0
    %2727 = vmatpush.msra.mxu0 0.0
    %2728 = vmatpush.msra.mxu0 0.0
    %2729 = vmatpush.msra.mxu0 0.0
    %2730 = vmatpush.msra.mxu0 0.0
    %2731 = vmatpush.msra.mxu0 %v2711
    %2732 = vmatpush.msra.mxu0 %v2710
    %2733 = vmatpush.msra.mxu0 %v2709
    %2734 = vmatpush.msra.mxu0 %v2708
    %2735 = vmatmul.f32.gmra.mxu0 %v2717
    %v2736 = vpop.f32.mrf.mxu0
    %v2737 = vadd.f32 %v2714, %v2736
    %2738 = vdwg.mxu0
    %vm2739 = vcmask 517120
    %2740 = vst.msk [vmem:[#allocation2] sm:$0x3] %vm2739, %v2671
    %vm2741 = vcmask 25600
    %2742 = vst.msk [vmem:[#allocation4] sm:$0x3] %vm2741, %v2737
    // Predicated region
    $region50: #{net_forward.1} parent=1 // pred_check
      _
    $region51: #{net_forward.1} parent=1 // pred_check_branch
      %2744 = sbr.rel (0) target = $region53
    $region52: #{net_forward.1} parent=1 // pred_region
      %2746 = vsyncadd [#allocation3], 0
      %s2748 = sshll.u32 [#allocation2], 4
      %s2749 = int_to_ptr.vmem [resolvable:$true] %s2748
      %s2750 = sshll.u32 %s12, 4
      %s2751 = int_to_ptr.hbm [resolvable:$true] %s2750
      %2753 = dma.vmem_to_hbm [thread:$0]  %s2749, 32, %s2751, [#allocation3]
    $region53: #{net_forward.1} parent=1 // pred_fallthru
      _
    // Predicated region
    $region54: #{net_forward.1} parent=1 // pred_check
      _
    $region55: #{net_forward.1} parent=1 // pred_check_branch
      %2755 = sbr.rel (0) target = $region57
    $region56: #{net_forward.1} parent=1 // pred_region
      %2757 = vsyncadd [#allocation5], 0
      %s2759 = sshll.u32 [#allocation4], 4
      %s2760 = int_to_ptr.vmem [resolvable:$true] %s2759
      %s2761 = sshll.u32 %s13, 4
      %s2762 = int_to_ptr.hbm [resolvable:$true] %s2761
      %2764 = dma.vmem_to_hbm [thread:$0]  %s2760, 32, %s2762, [#allocation5]
    $region57: #{net_forward.1} parent=1 // pred_fallthru
      _
    // Predicated region
    $region58: #{net_forward.1} parent=1 // pred_check
      _
    $region59: #{net_forward.1} parent=1 // pred_check_branch
      %2766 = sbr.rel (0) target = $region61
    $region60: #{net_forward.1} parent=1 // pred_region
      %2768 = dma.done [#allocation3], 32
    $region61: #{net_forward.1} parent=1 // pred_fallthru
      _
    // Predicated region
    $region62: #{net_forward.1} parent=1 // pred_check
      _
    $region63: #{net_forward.1} parent=1 // pred_check_branch
      %2770 = sbr.rel (0) target = $region65
    $region64: #{net_forward.1} parent=1 // pred_region
      %2772 = dma.done [#allocation5], 32
    $region65: #{net_forward.1} parent=1 // pred_fallthru
      _
    %2773 = vsyncpa [#allocation3], 1
    %2774 = vsyncpa [#allocation5], 1

</llo_original>
